<compile_context>
chip_gen: v6e
topology: v6e:2x2x1
jax: 0.10.0
libtpu: 0.0.40
codegen_flags: <defaults>
</compile_context>

<pallas_src>
import functools
import math

import jax
import jax.numpy as jnp
from jax import lax
from jax.experimental import pallas as pl
from jax.experimental.pallas import tpu as pltpu

# ----------------- scaled-down ViT / model config -----------------
IMG, PATCH, CH = 32, 16, 3       # 32x32 image, 16x16 patches -> 4 patches
D = 128                          # hidden_size
NH, DH = 4, 32                   # heads, head dim
LAYERS = 2                       # encoder layers
MLP = 4 * D                      # intermediate size
NPATCH = (IMG // PATCH) ** 2     # 4
SEQ = NPATCH + 1                 # 5 tokens (CLS + patches)
PDIM = CH * PATCH * PATCH        # 768 flattened patch dim
META_F = 8                       # num_metadata_features
META_D = 128                     # metadata_fc output dim
NCLS = 10                        # num_classes
NCLS_PAD = 128                   # lane-dense padded logits width
LN_EPS = 1e-12                   # HF ViT layer_norm_eps
ATT_SCALE = 1.0 / math.sqrt(DH)  # folded into the Q weights at prepare time

# lvec row layout (per layer, all 128-wide f32 vectors stacked):
#   0 ln1_g, 1 ln1_b, 2 ln2_g, 3 ln2_b, 4 bo, 5 b2, 6 bq (pre-scaled), 7 bk, 8 bv
# gvec row layout (global 128-wide f32 vectors):
#   0 lnf_g, 1 lnf_b, 2 meta_b, 3 classifier bias (lane-padded)


# ----------------- in-kernel helpers (traced into the kernel) -----------------
def _ln(x, g, b):
    mu = jnp.mean(x, axis=-1, keepdims=True)
    var = jnp.mean(jnp.square(x - mu), axis=-1, keepdims=True)
    return (x - mu) * lax.rsqrt(var + LN_EPS) * g + b


def _gelu(x):
    # tanh-approx GELU (HF ViT uses exact erf GELU; difference is tiny)
    c = 0.7978845608028654
    return 0.5 * x * (1.0 + jnp.tanh(c * (x + 0.044715 * x * x * x)))


# ----------------- fused forward kernel (BB examples per program) -----------
def _fused_fwd_kernel(bb,
                      patches_ref, meta_ref,
                      scat_ref, cls_pos_ref, mask_ref, gath_ref,
                      patch_w_ref, gvec_ref, lvec_ref, b1_ref,
                      wqkv_ref, wo_ref, w1_ref, w2_ref,
                      meta_w_ref, wc1_ref, wc2_ref,
                      out_ref):
    rows = bb * SEQ
    f32, bf16 = jnp.float32, jnp.bfloat16

    # ---- patch embedding on the tight (bb*NPATCH) rows ----
    pe = jnp.dot(patches_ref[...], patch_w_ref[...],
                 preferred_element_type=f32)                    # (bb*NPATCH, D) f32
    # Scatter patch rows into token order and add [CLS+pos0 ; pos+patch_b] rows.
    # scat is an exact 0/1 selector (f32), so the MXU does the relayout and the
    # patch embeddings keep f32 precision.
    h = (jnp.dot(scat_ref[...], pe, preferred_element_type=f32)
         + cls_pos_ref[...])                                    # (rows, D) f32

    neg_mask = mask_ref[...]                                    # (rows, rows) bf16 additive

    # ---- transformer encoder, statically unrolled (pre-LN blocks) ----
    for l in range(LAYERS):
        lv = lvec_ref[l]                                        # (9, D) f32
        hn = _ln(h, lv[0:1], lv[1:2]).astype(bf16)              # cast once per GEMM operand
        qkv = jnp.dot(hn, wqkv_ref[l], preferred_element_type=f32)   # (rows, 3D) f32
        wo_l = wo_ref[l]                                        # (D, D) bf16, loaded once/layer
        attn = jnp.zeros((rows, D), f32)
        for hd in range(NH):                                    # static unroll over heads
            c0 = hd * DH
            qh = (qkv[:, c0:c0 + DH] + lv[6:7, c0:c0 + DH]).astype(bf16)
            kh = (qkv[:, D + c0:D + c0 + DH] + lv[7:8, c0:c0 + DH]).astype(bf16)
            vh = (qkv[:, 2 * D + c0:2 * D + c0 + DH] + lv[8:9, c0:c0 + DH]).astype(bf16)
            # scores batched across the BB examples of this step: one
            # (rows,rows) matmul, cross-example entries masked off additively.
            s = lax.dot_general(qh, kh, (((1,), (1,)), ((), ())),
                                preferred_element_type=f32) + neg_mask
            s = s - jnp.max(s, axis=-1, keepdims=True)
            p = jnp.exp(s)
            p = p * pl.reciprocal(jnp.sum(p, axis=-1, keepdims=True), approx=True)
            ctx = jnp.dot(p.astype(bf16), vh, preferred_element_type=f32)  # (rows, DH)
            # accumulate straight through this head's slice of Wo (no lane concat)
            attn = attn + jnp.dot(ctx.astype(bf16), wo_l[c0:c0 + DH, :],
                                  preferred_element_type=f32)
        h = h + attn + lv[4:5]                                  # + bo, attention residual
        hn2 = _ln(h, lv[2:3], lv[3:4]).astype(bf16)
        f = _gelu(jnp.dot(hn2, w1_ref[l], preferred_element_type=f32) + b1_ref[l])
        h = h + jnp.dot(f.astype(bf16), w2_ref[l], preferred_element_type=f32) + lv[5:6]

    # ---- CLS pooling (exact 0/1 gather matmul) + final LN ----
    gv = gvec_ref[...]                                          # (4, D) f32
    cls_tok = jnp.dot(gath_ref[...], h, preferred_element_type=f32)    # (bb, D)
    cls_tok = _ln(cls_tok, gv[0:1], gv[1:2])

    # ---- metadata MLP + fused classifier head (concat == split matmul) ----
    m = jnp.maximum(
        jnp.dot(meta_ref[...].astype(jnp.bfloat16), meta_w_ref[...],
                preferred_element_type=f32) + gv[2:3], 0.0)
    out_ref[...] = (jnp.dot(cls_tok.astype(jnp.bfloat16), wc1_ref[...],
                            preferred_element_type=f32)
                    + jnp.dot(m.astype(jnp.bfloat16), wc2_ref[...],
                              preferred_element_type=f32)
                    + gv[3:4])                                  # (bb, NCLS_PAD) f32


# ----------------- parameter init (deterministic, torch-like layout) -------
def init_params(key):
    def nrm(k, shape, scale=0.02):
        return scale * jax.random.normal(k, shape, dtype=jnp.float32)

    keys = iter(jax.random.split(key, 64))
    p = {
        "patch_w": nrm(next(keys), (PDIM, D)),
        "patch_b": jnp.zeros((D,), jnp.float32),
        "cls": nrm(next(keys), (1, D)),
        "pos": nrm(next(keys), (SEQ, D)),
        "ln_f_g": jnp.ones((D,), jnp.float32),
        "ln_f_b": jnp.zeros((D,), jnp.float32),
        "meta_w": nrm(next(keys), (META_F, META_D)),
        "meta_b": jnp.zeros((META_D,), jnp.float32),
        "cls_w": nrm(next(keys), (D + META_D, NCLS)),
        "cls_b": jnp.zeros((NCLS,), jnp.float32),
        "layers": [],
    }
    for _ in range(LAYERS):
        p["layers"].append({
            "ln1_g": jnp.ones((D,), jnp.float32), "ln1_b": jnp.zeros((D,), jnp.float32),
            "wq": nrm(next(keys), (D, D)), "bq": jnp.zeros((D,), jnp.float32),
            "wk": nrm(next(keys), (D, D)), "bk": jnp.zeros((D,), jnp.float32),
            "wv": nrm(next(keys), (D, D)), "bv": jnp.zeros((D,), jnp.float32),
            "wo": nrm(next(keys), (D, D)), "bo": jnp.zeros((D,), jnp.float32),
            "ln2_g": jnp.ones((D,), jnp.float32), "ln2_b": jnp.zeros((D,), jnp.float32),
            "w1": nrm(next(keys), (D, MLP)), "b1": jnp.zeros((MLP,), jnp.float32),
            "w2": nrm(next(keys), (MLP, D)), "b2": jnp.zeros((D,), jnp.float32),
        })
    return p


def prepare_params(p):
    """One-time conversion to kernel-ready layout: fused QKV (Q pre-scaled by
    1/sqrt(dh)), layer-stacked bf16 matmul weights, all 128-wide f32 vectors
    packed into lvec/gvec slabs, lane-padded classifier weights, and the
    (SEQ, D) cls/pos/patch-bias row table."""
    bf = lambda w: w.astype(jnp.bfloat16)
    L = p["layers"]
    stack = lambda n: jnp.stack([layer[n] for layer in L])
    wqkv = jnp.stack([jnp.concatenate([l["wq"] * ATT_SCALE, l["wk"], l["wv"]], axis=1)
                      for l in L])
    lvec = jnp.stack([jnp.stack([l["ln1_g"], l["ln1_b"], l["ln2_g"], l["ln2_b"],
                                 l["bo"], l["b2"], l["bq"] * ATT_SCALE,
                                 l["bk"], l["bv"]]) for l in L])        # (LAYERS, 9, D)
    gvec = jnp.stack([p["ln_f_g"], p["ln_f_b"], p["meta_b"],
                      jnp.pad(p["cls_b"], (0, NCLS_PAD - NCLS))])        # (4, D)
    # row 0: cls + pos[0]; rows 1..: pos[1:] + patch_b (patch bias folded in)
    cls_pos = jnp.concatenate([p["cls"] + p["pos"][:1],
                               p["pos"][1:] + p["patch_b"][None, :]], axis=0)
    pad_n = lambda w: jnp.pad(w, ((0, 0), (0, NCLS_PAD - NCLS)))
    return {
        "patch_w": bf(p["patch_w"]),
        "cls_pos": cls_pos.astype(jnp.float32),                          # (SEQ, D)
        "gvec": gvec.astype(jnp.float32),
        "lvec": lvec.astype(jnp.float32),
        "b1": stack("b1").reshape(LAYERS, 1, MLP).astype(jnp.float32),
        "wqkv": bf(wqkv),
        "wo": bf(stack("wo")),
        "w1": bf(stack("w1")),
        "w2": bf(stack("w2")),
        "meta_w": bf(p["meta_w"]),
        "wc1": bf(pad_n(p["cls_w"][:D])),
        "wc2": bf(pad_n(p["cls_w"][D:])),
    }


# ----------------- wrapper -----------------
_WEIGHT_ORDER = ("patch_w", "gvec", "lvec", "b1", "wqkv", "wo", "w1", "w2",
                 "meta_w", "wc1", "wc2")


def _const_spec(shape):
    """Whole-array block, constant index map, single-buffered (block never
    changes across the grid, so no double-buffer / prefetch machinery)."""
    nd = len(shape)
    idx = lambda g, _nd=nd: (0,) * _nd          # ndim bound, no late binding
    try:
        return pl.BlockSpec(shape, idx, pipeline_mode=pl.Buffered(1))
    except (TypeError, AttributeError):         # older API without pipeline_mode
        return pl.BlockSpec(shape, idx)


def multimodal_classifier(kparams, pixel_values, metadata, *, block_batch=None):
    B = pixel_values.shape[0]
    # BB*SEQ = 240 rows ~ one 256-row MXU pass on v6e/v7x; use ~24 on v5e
    # (128-row MXU).  On v7x pick BB <= B/2 so both TensorCores get grid steps.
    if block_batch is None:
        block_batch = 48
    BB = max(1, min(block_batch, B))
    if BB < B:
        BB = max(8, (BB // 8) * 8)              # keep multi-step blocks tile-aligned
    B_pad = -(-B // BB) * BB
    grid_n = B_pad // BB
    rows = BB * SEQ

    # patchify NCHW -> (B, NPATCH, PDIM), channel-major per patch (conv-weight
    # order), bf16, batch-padded; NO zero CLS row is materialized in HBM.
    x = pixel_values.reshape(B, CH, IMG // PATCH, PATCH, IMG // PATCH, PATCH)
    x = x.transpose(0, 2, 4, 1, 3, 5).reshape(B, NPATCH, PDIM)
    x = jnp.pad(x, ((0, B_pad - B), (0, 0), (0, 0))).astype(jnp.bfloat16)
    patches = x.reshape(B_pad * NPATCH, PDIM)
    meta = jnp.pad(metadata.astype(jnp.float32), ((0, B_pad - B), (0, 0)))

    # structural constants for one BB-block (DMA'd once, single-buffered):
    tok = jnp.arange(rows)
    ex_t, pos_t = tok // SEQ, tok % SEQ
    src = jnp.arange(BB * NPATCH)
    scat = ((ex_t[:, None] == (src // NPATCH)[None, :]) &
            (pos_t[:, None] == (src % NPATCH)[None, :] + 1)).astype(jnp.float32)
    gath = ((pos_t[None, :] == 0) &
            (ex_t[None, :] == jnp.arange(BB)[:, None])).astype(jnp.float32)
    attn_mask = jnp.where(ex_t[:, None] == ex_t[None, :],
                          0.0, -1e30).astype(jnp.bfloat16)
    cls_pos_tiled = jnp.tile(kparams["cls_pos"], (BB, 1))       # (rows, D) f32

    const_args = [scat, cls_pos_tiled, attn_mask, gath] + \
                 [kparams[n] for n in _WEIGHT_ORDER]
    in_specs = ([pl.BlockSpec((BB * NPATCH, PDIM), lambda g: (g, 0)),
                 pl.BlockSpec((BB, META_F), lambda g: (g, 0))]
                + [_const_spec(a.shape) for a in const_args])

    out = pl.pallas_call(
        functools.partial(_fused_fwd_kernel, BB),
        out_shape=jax.ShapeDtypeStruct((B_pad, NCLS_PAD), jnp.float32),
        grid=(grid_n,),
        in_specs=in_specs,
        out_specs=pl.BlockSpec((BB, NCLS_PAD), lambda g: (g, 0)),
        compiler_params=pltpu.CompilerParams(
            dimension_semantics=("parallel",)),   # batch blocks across TCs on v7x
    )(patches, meta, *const_args)

    # TODO(synk): optional CrossEntropyLoss branch (labels is not None) left in plain JAX land.
    return out[:B, :NCLS]                                        # (B, NCLS) f32


# ----------------- main -----------------
if __name__ == "__main__":
    key = jax.random.PRNGKey(0)
    k_par, k_px, k_md = jax.random.split(key, 3)
    params = prepare_params(init_params(k_par))
    pixel_values = jax.random.normal(k_px, (2, CH, IMG, IMG), dtype=jnp.float32)  # NCHW
    metadata = jax.random.normal(k_md, (2, META_F), dtype=jnp.float32)

    logits = jax.jit(multimodal_classifier)(params, pixel_values, metadata)
    jax.block_until_ready(logits)
    assert logits.shape == (2, NCLS) and logits.dtype == jnp.float32
    assert bool(jnp.all(jnp.isfinite(logits)))
    print("KERNEL_OK")
</pallas_src>

<mosaic_0001>
module attributes {stable_mosaic.version = 11 : i64} {
  func.func @_fused_fwd_kernel(%arg0: i32, %arg1: memref<8x768xbf16, #tpu.memory_space<vmem>>, %arg2: memref<2x8xf32, #tpu.memory_space<vmem>>, %arg3: memref<10x8xf32, #tpu.memory_space<vmem>>, %arg4: memref<10x128xf32, #tpu.memory_space<vmem>>, %arg5: memref<10x10xbf16, #tpu.memory_space<vmem>>, %arg6: memref<2x10xf32, #tpu.memory_space<vmem>>, %arg7: memref<768x128xbf16, #tpu.memory_space<vmem>>, %arg8: memref<4x128xf32, #tpu.memory_space<vmem>>, %arg9: memref<2x9x128xf32, #tpu.memory_space<vmem>>, %arg10: memref<2x1x512xf32, #tpu.memory_space<vmem>>, %arg11: memref<2x128x384xbf16, #tpu.memory_space<vmem>>, %arg12: memref<2x128x128xbf16, #tpu.memory_space<vmem>>, %arg13: memref<2x128x512xbf16, #tpu.memory_space<vmem>>, %arg14: memref<2x512x128xbf16, #tpu.memory_space<vmem>>, %arg15: memref<8x128xbf16, #tpu.memory_space<vmem>>, %arg16: memref<128x128xbf16, #tpu.memory_space<vmem>>, %arg17: memref<128x128xbf16, #tpu.memory_space<vmem>>, %arg18: memref<2x128xf32, #tpu.memory_space<vmem>>) attributes {dimension_semantics = [#tpu.dimension_semantics<parallel>], iteration_bounds = array<i64: 1>, scalar_prefetch = 0 : i64, scratch_operands = 0 : i64, tpu.core_type = #tpu.core_type<tc>, window_params = [{transform_indices = @transform_0, window_bounds = array<i64: 8, 768>}, {transform_indices = @transform_1, window_bounds = array<i64: 2, 8>}, {pipeline_mode = #tpu.pipeline_mode<synchronous>, transform_indices = @transform_2, window_bounds = array<i64: 10, 8>}, {pipeline_mode = #tpu.pipeline_mode<synchronous>, transform_indices = @transform_3, window_bounds = array<i64: 10, 128>}, {pipeline_mode = #tpu.pipeline_mode<synchronous>, transform_indices = @transform_4, window_bounds = array<i64: 10, 10>}, {pipeline_mode = #tpu.pipeline_mode<synchronous>, transform_indices = @transform_5, window_bounds = array<i64: 2, 10>}, {pipeline_mode = #tpu.pipeline_mode<synchronous>, transform_indices = @transform_6, window_bounds = array<i64: 768, 128>}, {pipeline_mode = #tpu.pipeline_mode<synchronous>, transform_indices = @transform_7, window_bounds = array<i64: 4, 128>}, {pipeline_mode = #tpu.pipeline_mode<synchronous>, transform_indices = @transform_8, window_bounds = array<i64: 2, 9, 128>}, {pipeline_mode = #tpu.pipeline_mode<synchronous>, transform_indices = @transform_9, window_bounds = array<i64: 2, 1, 512>}, {pipeline_mode = #tpu.pipeline_mode<synchronous>, transform_indices = @transform_10, window_bounds = array<i64: 2, 128, 384>}, {pipeline_mode = #tpu.pipeline_mode<synchronous>, transform_indices = @transform_11, window_bounds = array<i64: 2, 128, 128>}, {pipeline_mode = #tpu.pipeline_mode<synchronous>, transform_indices = @transform_12, window_bounds = array<i64: 2, 128, 512>}, {pipeline_mode = #tpu.pipeline_mode<synchronous>, transform_indices = @transform_13, window_bounds = array<i64: 2, 512, 128>}, {pipeline_mode = #tpu.pipeline_mode<synchronous>, transform_indices = @transform_14, window_bounds = array<i64: 8, 128>}, {pipeline_mode = #tpu.pipeline_mode<synchronous>, transform_indices = @transform_15, window_bounds = array<i64: 128, 128>}, {pipeline_mode = #tpu.pipeline_mode<synchronous>, transform_indices = @transform_16, window_bounds = array<i64: 128, 128>}, {transform_indices = @transform_17, window_bounds = array<i64: 2, 128>}]} {
    %c0 = arith.constant 0 : index
    %c0_0 = arith.constant 0 : index
    %0 = vector.load %arg1[%c0, %c0_0] : memref<8x768xbf16, #tpu.memory_space<vmem>>, vector<8x768xbf16>
    %c0_1 = arith.constant 0 : index
    %c0_2 = arith.constant 0 : index
    %1 = vector.load %arg7[%c0_1, %c0_2] : memref<768x128xbf16, #tpu.memory_space<vmem>>, vector<768x128xbf16>
    %cst = arith.constant dense<0.000000e+00> : vector<8x128xf32>
    %2 = tpu.matmul %0, %1, %cst {dimension_numbers = #tpu.dot_dimension_numbers<[1], [0], [0], [1], [0, 0, 1, 1], [], []>} : vector<8x768xbf16>, vector<768x128xbf16>, vector<8x128xf32> -> vector<8x128xf32>
    %c0_3 = arith.constant 0 : index
    %c0_4 = arith.constant 0 : index
    %3 = vector.load %arg3[%c0_3, %c0_4] : memref<10x8xf32, #tpu.memory_space<vmem>>, vector<10x8xf32>
    %cst_5 = arith.constant dense<0.000000e+00> : vector<10x128xf32>
    %4 = tpu.matmul %3, %2, %cst_5 {dimension_numbers = #tpu.dot_dimension_numbers<[1], [0], [0], [1], [0, 0, 1, 1], [], []>} : vector<10x8xf32>, vector<8x128xf32>, vector<10x128xf32> -> vector<10x128xf32>
    %c0_6 = arith.constant 0 : index
    %c0_7 = arith.constant 0 : index
    %5 = vector.load %arg4[%c0_6, %c0_7] : memref<10x128xf32, #tpu.memory_space<vmem>>, vector<10x128xf32>
    %6 = arith.addf %4, %5 : vector<10x128xf32>
    %c0_8 = arith.constant 0 : index
    %c0_9 = arith.constant 0 : index
    %7 = vector.load %arg5[%c0_8, %c0_9] : memref<10x10xbf16, #tpu.memory_space<vmem>>, vector<10x10xbf16>
    %c0_10 = arith.constant 0 : index
    %c0_11 = arith.constant 0 : index
    %c0_12 = arith.constant 0 : index
    %8 = vector.load %arg9[%c0_10, %c0_11, %c0_12] : memref<2x9x128xf32, #tpu.memory_space<vmem>>, vector<1x9x128xf32>
    %9 = vector.shape_cast %8 : vector<1x9x128xf32> to vector<9x128xf32>
    %10 = vector.extract_strided_slice %9 {offsets = [0, 0], sizes = [1, 128], strides = [1, 1]} : vector<9x128xf32> to vector<1x128xf32>
    %11 = vector.extract_strided_slice %9 {offsets = [1, 0], sizes = [1, 128], strides = [1, 1]} : vector<9x128xf32> to vector<1x128xf32>
    %cst_13 = arith.constant dense<0.000000e+00> : vector<10xf32>
    %12 = vector.multi_reduction <add>, %6, %cst_13 [1] : vector<10x128xf32> to vector<10xf32>
    %13 = vector.shape_cast %12 : vector<10xf32> to vector<10x1xf32>
    %cst_14 = arith.constant 1.280000e+02 : f32
    %14 = vector.broadcast %cst_14 : f32 to vector<10x1xf32>
    %15 = arith.divf %13, %14 : vector<10x1xf32>
    %16 = vector.broadcast %15 : vector<10x1xf32> to vector<10x128xf32>
    %17 = arith.subf %6, %16 : vector<10x128xf32>
    %18 = arith.mulf %17, %17 : vector<10x128xf32>
    %cst_15 = arith.constant dense<0.000000e+00> : vector<10xf32>
    %19 = vector.multi_reduction <add>, %18, %cst_15 [1] : vector<10x128xf32> to vector<10xf32>
    %20 = vector.shape_cast %19 : vector<10xf32> to vector<10x1xf32>
    %cst_16 = arith.constant 1.280000e+02 : f32
    %21 = vector.broadcast %cst_16 : f32 to vector<10x1xf32>
    %22 = arith.divf %20, %21 : vector<10x1xf32>
    %23 = vector.broadcast %15 : vector<10x1xf32> to vector<10x128xf32>
    %24 = arith.subf %6, %23 : vector<10x128xf32>
    %cst_17 = arith.constant 9.99999996E-13 : f32
    %25 = vector.broadcast %cst_17 : f32 to vector<10x1xf32>
    %26 = arith.addf %22, %25 : vector<10x1xf32>
    %27 = math.rsqrt %26 : vector<10x1xf32>
    %28 = vector.broadcast %27 : vector<10x1xf32> to vector<10x128xf32>
    %29 = arith.mulf %24, %28 : vector<10x128xf32>
    %30 = vector.broadcast %10 : vector<1x128xf32> to vector<10x128xf32>
    %31 = arith.mulf %29, %30 : vector<10x128xf32>
    %32 = vector.broadcast %11 : vector<1x128xf32> to vector<10x128xf32>
    %33 = arith.addf %31, %32 : vector<10x128xf32>
    %34 = arith.truncf %33 : vector<10x128xf32> to vector<10x128xbf16>
    %c0_18 = arith.constant 0 : index
    %c0_19 = arith.constant 0 : index
    %c0_20 = arith.constant 0 : index
    %35 = vector.load %arg11[%c0_18, %c0_19, %c0_20] : memref<2x128x384xbf16, #tpu.memory_space<vmem>>, vector<1x128x384xbf16>
    %36 = vector.shape_cast %35 : vector<1x128x384xbf16> to vector<128x384xbf16>
    %cst_21 = arith.constant dense<0.000000e+00> : vector<10x384xf32>
    %37 = tpu.matmul %34, %36, %cst_21 {dimension_numbers = #tpu.dot_dimension_numbers<[1], [0], [0], [1], [0, 0, 1, 1], [], []>} : vector<10x128xbf16>, vector<128x384xbf16>, vector<10x384xf32> -> vector<10x384xf32>
    %c0_22 = arith.constant 0 : index
    %c0_23 = arith.constant 0 : index
    %c0_24 = arith.constant 0 : index
    %38 = vector.load %arg12[%c0_22, %c0_23, %c0_24] : memref<2x128x128xbf16, #tpu.memory_space<vmem>>, vector<1x128x128xbf16>
    %39 = vector.shape_cast %38 : vector<1x128x128xbf16> to vector<128x128xbf16>
    %cst_25 = arith.constant 0.000000e+00 : f32
    %40 = vector.broadcast %cst_25 : f32 to vector<10x128xf32>
    %41 = vector.extract_strided_slice %37 {offsets = [0, 0], sizes = [10, 32], strides = [1, 1]} : vector<10x384xf32> to vector<10x32xf32>
    %42 = vector.extract_strided_slice %9 {offsets = [6, 0], sizes = [1, 32], strides = [1, 1]} : vector<9x128xf32> to vector<1x32xf32>
    %43 = vector.broadcast %42 : vector<1x32xf32> to vector<10x32xf32>
    %44 = arith.addf %41, %43 : vector<10x32xf32>
    %45 = arith.truncf %44 : vector<10x32xf32> to vector<10x32xbf16>
    %46 = vector.extract_strided_slice %37 {offsets = [0, 128], sizes = [10, 32], strides = [1, 1]} : vector<10x384xf32> to vector<10x32xf32>
    %47 = vector.extract_strided_slice %9 {offsets = [7, 0], sizes = [1, 32], strides = [1, 1]} : vector<9x128xf32> to vector<1x32xf32>
    %48 = vector.broadcast %47 : vector<1x32xf32> to vector<10x32xf32>
    %49 = arith.addf %46, %48 : vector<10x32xf32>
    %50 = arith.truncf %49 : vector<10x32xf32> to vector<10x32xbf16>
    %51 = vector.extract_strided_slice %37 {offsets = [0, 256], sizes = [10, 32], strides = [1, 1]} : vector<10x384xf32> to vector<10x32xf32>
    %52 = vector.extract_strided_slice %9 {offsets = [8, 0], sizes = [1, 32], strides = [1, 1]} : vector<9x128xf32> to vector<1x32xf32>
    %53 = vector.broadcast %52 : vector<1x32xf32> to vector<10x32xf32>
    %54 = arith.addf %51, %53 : vector<10x32xf32>
    %55 = arith.truncf %54 : vector<10x32xf32> to vector<10x32xbf16>
    %cst_26 = arith.constant dense<0.000000e+00> : vector<10x10xf32>
    %56 = tpu.matmul %45, %50, %cst_26 {dimension_numbers = #tpu.dot_dimension_numbers<[1], [1], [0], [0], [0, 0, 1, 0], [], []>} : vector<10x32xbf16>, vector<10x32xbf16>, vector<10x10xf32> -> vector<10x10xf32>
    %57 = arith.extf %7 : vector<10x10xbf16> to vector<10x10xf32>
    %58 = arith.addf %56, %57 : vector<10x10xf32>
    %cst_27 = arith.constant dense<0xFF800000> : vector<10xf32>
    %59 = vector.multi_reduction <maximumf>, %58, %cst_27 [1] : vector<10x10xf32> to vector<10xf32>
    %60 = vector.shape_cast %59 : vector<10xf32> to vector<10x1xf32>
    %61 = vector.broadcast %60 : vector<10x1xf32> to vector<10x10xf32>
    %62 = arith.subf %58, %61 : vector<10x10xf32>
    %63 = math.exp %62 : vector<10x10xf32>
    %cst_28 = arith.constant dense<0.000000e+00> : vector<10xf32>
    %64 = vector.multi_reduction <add>, %63, %cst_28 [1] : vector<10x10xf32> to vector<10xf32>
    %65 = vector.shape_cast %64 : vector<10xf32> to vector<10x1xf32>
    %66 = tpu.reciprocal %65 {approx = true} : vector<10x1xf32> -> vector<10x1xf32>
    %67 = vector.broadcast %66 : vector<10x1xf32> to vector<10x10xf32>
    %68 = arith.mulf %63, %67 : vector<10x10xf32>
    %69 = arith.truncf %68 : vector<10x10xf32> to vector<10x10xbf16>
    %cst_29 = arith.constant dense<0.000000e+00> : vector<10x32xf32>
    %70 = tpu.matmul %69, %55, %cst_29 {dimension_numbers = #tpu.dot_dimension_numbers<[1], [0], [0], [1], [0, 0, 1, 1], [], []>} : vector<10x10xbf16>, vector<10x32xbf16>, vector<10x32xf32> -> vector<10x32xf32>
    %71 = arith.truncf %70 : vector<10x32xf32> to vector<10x32xbf16>
    %72 = vector.extract_strided_slice %39 {offsets = [0, 0], sizes = [32, 128], strides = [1, 1]} : vector<128x128xbf16> to vector<32x128xbf16>
    %cst_30 = arith.constant dense<0.000000e+00> : vector<10x128xf32>
    %73 = tpu.matmul %71, %72, %cst_30 {dimension_numbers = #tpu.dot_dimension_numbers<[1], [0], [0], [1], [0, 0, 1, 1], [], []>} : vector<10x32xbf16>, vector<32x128xbf16>, vector<10x128xf32> -> vector<10x128xf32>
    %74 = arith.addf %40, %73 : vector<10x128xf32>
    %75 = vector.extract_strided_slice %37 {offsets = [0, 32], sizes = [10, 32], strides = [1, 1]} : vector<10x384xf32> to vector<10x32xf32>
    %76 = vector.extract_strided_slice %9 {offsets = [6, 32], sizes = [1, 32], strides = [1, 1]} : vector<9x128xf32> to vector<1x32xf32>
    %77 = vector.broadcast %76 : vector<1x32xf32> to vector<10x32xf32>
    %78 = arith.addf %75, %77 : vector<10x32xf32>
    %79 = arith.truncf %78 : vector<10x32xf32> to vector<10x32xbf16>
    %80 = vector.extract_strided_slice %37 {offsets = [0, 160], sizes = [10, 32], strides = [1, 1]} : vector<10x384xf32> to vector<10x32xf32>
    %81 = vector.extract_strided_slice %9 {offsets = [7, 32], sizes = [1, 32], strides = [1, 1]} : vector<9x128xf32> to vector<1x32xf32>
    %82 = vector.broadcast %81 : vector<1x32xf32> to vector<10x32xf32>
    %83 = arith.addf %80, %82 : vector<10x32xf32>
    %84 = arith.truncf %83 : vector<10x32xf32> to vector<10x32xbf16>
    %85 = vector.extract_strided_slice %37 {offsets = [0, 288], sizes = [10, 32], strides = [1, 1]} : vector<10x384xf32> to vector<10x32xf32>
    %86 = vector.extract_strided_slice %9 {offsets = [8, 32], sizes = [1, 32], strides = [1, 1]} : vector<9x128xf32> to vector<1x32xf32>
    %87 = vector.broadcast %86 : vector<1x32xf32> to vector<10x32xf32>
    %88 = arith.addf %85, %87 : vector<10x32xf32>
    %89 = arith.truncf %88 : vector<10x32xf32> to vector<10x32xbf16>
    %cst_31 = arith.constant dense<0.000000e+00> : vector<10x10xf32>
    %90 = tpu.matmul %79, %84, %cst_31 {dimension_numbers = #tpu.dot_dimension_numbers<[1], [1], [0], [0], [0, 0, 1, 0], [], []>} : vector<10x32xbf16>, vector<10x32xbf16>, vector<10x10xf32> -> vector<10x10xf32>
    %91 = arith.extf %7 : vector<10x10xbf16> to vector<10x10xf32>
    %92 = arith.addf %90, %91 : vector<10x10xf32>
    %cst_32 = arith.constant dense<0xFF800000> : vector<10xf32>
    %93 = vector.multi_reduction <maximumf>, %92, %cst_32 [1] : vector<10x10xf32> to vector<10xf32>
    %94 = vector.shape_cast %93 : vector<10xf32> to vector<10x1xf32>
    %95 = vector.broadcast %94 : vector<10x1xf32> to vector<10x10xf32>
    %96 = arith.subf %92, %95 : vector<10x10xf32>
    %97 = math.exp %96 : vector<10x10xf32>
    %cst_33 = arith.constant dense<0.000000e+00> : vector<10xf32>
    %98 = vector.multi_reduction <add>, %97, %cst_33 [1] : vector<10x10xf32> to vector<10xf32>
    %99 = vector.shape_cast %98 : vector<10xf32> to vector<10x1xf32>
    %100 = tpu.reciprocal %99 {approx = true} : vector<10x1xf32> -> vector<10x1xf32>
    %101 = vector.broadcast %100 : vector<10x1xf32> to vector<10x10xf32>
    %102 = arith.mulf %97, %101 : vector<10x10xf32>
    %103 = arith.truncf %102 : vector<10x10xf32> to vector<10x10xbf16>
    %cst_34 = arith.constant dense<0.000000e+00> : vector<10x32xf32>
    %104 = tpu.matmul %103, %89, %cst_34 {dimension_numbers = #tpu.dot_dimension_numbers<[1], [0], [0], [1], [0, 0, 1, 1], [], []>} : vector<10x10xbf16>, vector<10x32xbf16>, vector<10x32xf32> -> vector<10x32xf32>
    %105 = arith.truncf %104 : vector<10x32xf32> to vector<10x32xbf16>
    %106 = vector.extract_strided_slice %39 {offsets = [32, 0], sizes = [32, 128], strides = [1, 1]} : vector<128x128xbf16> to vector<32x128xbf16>
    %cst_35 = arith.constant dense<0.000000e+00> : vector<10x128xf32>
    %107 = tpu.matmul %105, %106, %cst_35 {dimension_numbers = #tpu.dot_dimension_numbers<[1], [0], [0], [1], [0, 0, 1, 1], [], []>} : vector<10x32xbf16>, vector<32x128xbf16>, vector<10x128xf32> -> vector<10x128xf32>
    %108 = arith.addf %74, %107 : vector<10x128xf32>
    %109 = vector.extract_strided_slice %37 {offsets = [0, 64], sizes = [10, 32], strides = [1, 1]} : vector<10x384xf32> to vector<10x32xf32>
    %110 = vector.extract_strided_slice %9 {offsets = [6, 64], sizes = [1, 32], strides = [1, 1]} : vector<9x128xf32> to vector<1x32xf32>
    %111 = vector.broadcast %110 : vector<1x32xf32> to vector<10x32xf32>
    %112 = arith.addf %109, %111 : vector<10x32xf32>
    %113 = arith.truncf %112 : vector<10x32xf32> to vector<10x32xbf16>
    %114 = vector.extract_strided_slice %37 {offsets = [0, 192], sizes = [10, 32], strides = [1, 1]} : vector<10x384xf32> to vector<10x32xf32>
    %115 = vector.extract_strided_slice %9 {offsets = [7, 64], sizes = [1, 32], strides = [1, 1]} : vector<9x128xf32> to vector<1x32xf32>
    %116 = vector.broadcast %115 : vector<1x32xf32> to vector<10x32xf32>
    %117 = arith.addf %114, %116 : vector<10x32xf32>
    %118 = arith.truncf %117 : vector<10x32xf32> to vector<10x32xbf16>
    %119 = vector.extract_strided_slice %37 {offsets = [0, 320], sizes = [10, 32], strides = [1, 1]} : vector<10x384xf32> to vector<10x32xf32>
    %120 = vector.extract_strided_slice %9 {offsets = [8, 64], sizes = [1, 32], strides = [1, 1]} : vector<9x128xf32> to vector<1x32xf32>
    %121 = vector.broadcast %120 : vector<1x32xf32> to vector<10x32xf32>
    %122 = arith.addf %119, %121 : vector<10x32xf32>
    %123 = arith.truncf %122 : vector<10x32xf32> to vector<10x32xbf16>
    %cst_36 = arith.constant dense<0.000000e+00> : vector<10x10xf32>
    %124 = tpu.matmul %113, %118, %cst_36 {dimension_numbers = #tpu.dot_dimension_numbers<[1], [1], [0], [0], [0, 0, 1, 0], [], []>} : vector<10x32xbf16>, vector<10x32xbf16>, vector<10x10xf32> -> vector<10x10xf32>
    %125 = arith.extf %7 : vector<10x10xbf16> to vector<10x10xf32>
    %126 = arith.addf %124, %125 : vector<10x10xf32>
    %cst_37 = arith.constant dense<0xFF800000> : vector<10xf32>
    %127 = vector.multi_reduction <maximumf>, %126, %cst_37 [1] : vector<10x10xf32> to vector<10xf32>
    %128 = vector.shape_cast %127 : vector<10xf32> to vector<10x1xf32>
    %129 = vector.broadcast %128 : vector<10x1xf32> to vector<10x10xf32>
    %130 = arith.subf %126, %129 : vector<10x10xf32>
    %131 = math.exp %130 : vector<10x10xf32>
    %cst_38 = arith.constant dense<0.000000e+00> : vector<10xf32>
    %132 = vector.multi_reduction <add>, %131, %cst_38 [1] : vector<10x10xf32> to vector<10xf32>
    %133 = vector.shape_cast %132 : vector<10xf32> to vector<10x1xf32>
    %134 = tpu.reciprocal %133 {approx = true} : vector<10x1xf32> -> vector<10x1xf32>
    %135 = vector.broadcast %134 : vector<10x1xf32> to vector<10x10xf32>
    %136 = arith.mulf %131, %135 : vector<10x10xf32>
    %137 = arith.truncf %136 : vector<10x10xf32> to vector<10x10xbf16>
    %cst_39 = arith.constant dense<0.000000e+00> : vector<10x32xf32>
    %138 = tpu.matmul %137, %123, %cst_39 {dimension_numbers = #tpu.dot_dimension_numbers<[1], [0], [0], [1], [0, 0, 1, 1], [], []>} : vector<10x10xbf16>, vector<10x32xbf16>, vector<10x32xf32> -> vector<10x32xf32>
    %139 = arith.truncf %138 : vector<10x32xf32> to vector<10x32xbf16>
    %140 = vector.extract_strided_slice %39 {offsets = [64, 0], sizes = [32, 128], strides = [1, 1]} : vector<128x128xbf16> to vector<32x128xbf16>
    %cst_40 = arith.constant dense<0.000000e+00> : vector<10x128xf32>
    %141 = tpu.matmul %139, %140, %cst_40 {dimension_numbers = #tpu.dot_dimension_numbers<[1], [0], [0], [1], [0, 0, 1, 1], [], []>} : vector<10x32xbf16>, vector<32x128xbf16>, vector<10x128xf32> -> vector<10x128xf32>
    %142 = arith.addf %108, %141 : vector<10x128xf32>
    %143 = vector.extract_strided_slice %37 {offsets = [0, 96], sizes = [10, 32], strides = [1, 1]} : vector<10x384xf32> to vector<10x32xf32>
    %144 = vector.extract_strided_slice %9 {offsets = [6, 96], sizes = [1, 32], strides = [1, 1]} : vector<9x128xf32> to vector<1x32xf32>
    %145 = vector.broadcast %144 : vector<1x32xf32> to vector<10x32xf32>
    %146 = arith.addf %143, %145 : vector<10x32xf32>
    %147 = arith.truncf %146 : vector<10x32xf32> to vector<10x32xbf16>
    %148 = vector.extract_strided_slice %37 {offsets = [0, 224], sizes = [10, 32], strides = [1, 1]} : vector<10x384xf32> to vector<10x32xf32>
    %149 = vector.extract_strided_slice %9 {offsets = [7, 96], sizes = [1, 32], strides = [1, 1]} : vector<9x128xf32> to vector<1x32xf32>
    %150 = vector.broadcast %149 : vector<1x32xf32> to vector<10x32xf32>
    %151 = arith.addf %148, %150 : vector<10x32xf32>
    %152 = arith.truncf %151 : vector<10x32xf32> to vector<10x32xbf16>
    %153 = vector.extract_strided_slice %37 {offsets = [0, 352], sizes = [10, 32], strides = [1, 1]} : vector<10x384xf32> to vector<10x32xf32>
    %154 = vector.extract_strided_slice %9 {offsets = [8, 96], sizes = [1, 32], strides = [1, 1]} : vector<9x128xf32> to vector<1x32xf32>
    %155 = vector.broadcast %154 : vector<1x32xf32> to vector<10x32xf32>
    %156 = arith.addf %153, %155 : vector<10x32xf32>
    %157 = arith.truncf %156 : vector<10x32xf32> to vector<10x32xbf16>
    %cst_41 = arith.constant dense<0.000000e+00> : vector<10x10xf32>
    %158 = tpu.matmul %147, %152, %cst_41 {dimension_numbers = #tpu.dot_dimension_numbers<[1], [1], [0], [0], [0, 0, 1, 0], [], []>} : vector<10x32xbf16>, vector<10x32xbf16>, vector<10x10xf32> -> vector<10x10xf32>
    %159 = arith.extf %7 : vector<10x10xbf16> to vector<10x10xf32>
    %160 = arith.addf %158, %159 : vector<10x10xf32>
    %cst_42 = arith.constant dense<0xFF800000> : vector<10xf32>
    %161 = vector.multi_reduction <maximumf>, %160, %cst_42 [1] : vector<10x10xf32> to vector<10xf32>
    %162 = vector.shape_cast %161 : vector<10xf32> to vector<10x1xf32>
    %163 = vector.broadcast %162 : vector<10x1xf32> to vector<10x10xf32>
    %164 = arith.subf %160, %163 : vector<10x10xf32>
    %165 = math.exp %164 : vector<10x10xf32>
    %cst_43 = arith.constant dense<0.000000e+00> : vector<10xf32>
    %166 = vector.multi_reduction <add>, %165, %cst_43 [1] : vector<10x10xf32> to vector<10xf32>
    %167 = vector.shape_cast %166 : vector<10xf32> to vector<10x1xf32>
    %168 = tpu.reciprocal %167 {approx = true} : vector<10x1xf32> -> vector<10x1xf32>
    %169 = vector.broadcast %168 : vector<10x1xf32> to vector<10x10xf32>
    %170 = arith.mulf %165, %169 : vector<10x10xf32>
    %171 = arith.truncf %170 : vector<10x10xf32> to vector<10x10xbf16>
    %cst_44 = arith.constant dense<0.000000e+00> : vector<10x32xf32>
    %172 = tpu.matmul %171, %157, %cst_44 {dimension_numbers = #tpu.dot_dimension_numbers<[1], [0], [0], [1], [0, 0, 1, 1], [], []>} : vector<10x10xbf16>, vector<10x32xbf16>, vector<10x32xf32> -> vector<10x32xf32>
    %173 = arith.truncf %172 : vector<10x32xf32> to vector<10x32xbf16>
    %174 = vector.extract_strided_slice %39 {offsets = [96, 0], sizes = [32, 128], strides = [1, 1]} : vector<128x128xbf16> to vector<32x128xbf16>
    %cst_45 = arith.constant dense<0.000000e+00> : vector<10x128xf32>
    %175 = tpu.matmul %173, %174, %cst_45 {dimension_numbers = #tpu.dot_dimension_numbers<[1], [0], [0], [1], [0, 0, 1, 1], [], []>} : vector<10x32xbf16>, vector<32x128xbf16>, vector<10x128xf32> -> vector<10x128xf32>
    %176 = arith.addf %142, %175 : vector<10x128xf32>
    %177 = arith.addf %6, %176 : vector<10x128xf32>
    %178 = vector.extract_strided_slice %9 {offsets = [4, 0], sizes = [1, 128], strides = [1, 1]} : vector<9x128xf32> to vector<1x128xf32>
    %179 = vector.broadcast %178 : vector<1x128xf32> to vector<10x128xf32>
    %180 = arith.addf %177, %179 : vector<10x128xf32>
    %181 = vector.extract_strided_slice %9 {offsets = [2, 0], sizes = [1, 128], strides = [1, 1]} : vector<9x128xf32> to vector<1x128xf32>
    %182 = vector.extract_strided_slice %9 {offsets = [3, 0], sizes = [1, 128], strides = [1, 1]} : vector<9x128xf32> to vector<1x128xf32>
    %cst_46 = arith.constant dense<0.000000e+00> : vector<10xf32>
    %183 = vector.multi_reduction <add>, %180, %cst_46 [1] : vector<10x128xf32> to vector<10xf32>
    %184 = vector.shape_cast %183 : vector<10xf32> to vector<10x1xf32>
    %cst_47 = arith.constant 1.280000e+02 : f32
    %185 = vector.broadcast %cst_47 : f32 to vector<10x1xf32>
    %186 = arith.divf %184, %185 : vector<10x1xf32>
    %187 = vector.broadcast %186 : vector<10x1xf32> to vector<10x128xf32>
    %188 = arith.subf %180, %187 : vector<10x128xf32>
    %189 = arith.mulf %188, %188 : vector<10x128xf32>
    %cst_48 = arith.constant dense<0.000000e+00> : vector<10xf32>
    %190 = vector.multi_reduction <add>, %189, %cst_48 [1] : vector<10x128xf32> to vector<10xf32>
    %191 = vector.shape_cast %190 : vector<10xf32> to vector<10x1xf32>
    %cst_49 = arith.constant 1.280000e+02 : f32
    %192 = vector.broadcast %cst_49 : f32 to vector<10x1xf32>
    %193 = arith.divf %191, %192 : vector<10x1xf32>
    %194 = vector.broadcast %186 : vector<10x1xf32> to vector<10x128xf32>
    %195 = arith.subf %180, %194 : vector<10x128xf32>
    %cst_50 = arith.constant 9.99999996E-13 : f32
    %196 = vector.broadcast %cst_50 : f32 to vector<10x1xf32>
    %197 = arith.addf %193, %196 : vector<10x1xf32>
    %198 = math.rsqrt %197 : vector<10x1xf32>
    %199 = vector.broadcast %198 : vector<10x1xf32> to vector<10x128xf32>
    %200 = arith.mulf %195, %199 : vector<10x128xf32>
    %201 = vector.broadcast %181 : vector<1x128xf32> to vector<10x128xf32>
    %202 = arith.mulf %200, %201 : vector<10x128xf32>
    %203 = vector.broadcast %182 : vector<1x128xf32> to vector<10x128xf32>
    %204 = arith.addf %202, %203 : vector<10x128xf32>
    %205 = arith.truncf %204 : vector<10x128xf32> to vector<10x128xbf16>
    %c0_51 = arith.constant 0 : index
    %c0_52 = arith.constant 0 : index
    %c0_53 = arith.constant 0 : index
    %206 = vector.load %arg13[%c0_51, %c0_52, %c0_53] : memref<2x128x512xbf16, #tpu.memory_space<vmem>>, vector<1x128x512xbf16>
    %207 = vector.shape_cast %206 : vector<1x128x512xbf16> to vector<128x512xbf16>
    %cst_54 = arith.constant dense<0.000000e+00> : vector<10x512xf32>
    %208 = tpu.matmul %205, %207, %cst_54 {dimension_numbers = #tpu.dot_dimension_numbers<[1], [0], [0], [1], [0, 0, 1, 1], [], []>} : vector<10x128xbf16>, vector<128x512xbf16>, vector<10x512xf32> -> vector<10x512xf32>
    %c0_55 = arith.constant 0 : index
    %c0_56 = arith.constant 0 : index
    %c0_57 = arith.constant 0 : index
    %209 = vector.load %arg10[%c0_55, %c0_56, %c0_57] : memref<2x1x512xf32, #tpu.memory_space<vmem>>, vector<1x1x512xf32>
    %210 = vector.shape_cast %209 : vector<1x1x512xf32> to vector<1x512xf32>
    %211 = vector.broadcast %210 : vector<1x512xf32> to vector<10x512xf32>
    %212 = arith.addf %208, %211 : vector<10x512xf32>
    %cst_58 = arith.constant 5.000000e-01 : f32
    %213 = vector.broadcast %cst_58 : f32 to vector<10x512xf32>
    %214 = arith.mulf %213, %212 : vector<10x512xf32>
    %cst_59 = arith.constant 4.471500e-02 : f32
    %215 = vector.broadcast %cst_59 : f32 to vector<10x512xf32>
    %216 = arith.mulf %215, %212 : vector<10x512xf32>
    %217 = arith.mulf %216, %212 : vector<10x512xf32>
    %218 = arith.mulf %217, %212 : vector<10x512xf32>
    %219 = arith.addf %212, %218 : vector<10x512xf32>
    %cst_60 = arith.constant 0.797884583 : f32
    %220 = vector.broadcast %cst_60 : f32 to vector<10x512xf32>
    %221 = arith.mulf %220, %219 : vector<10x512xf32>
    %222 = math.tanh %221 : vector<10x512xf32>
    %cst_61 = arith.constant 1.000000e+00 : f32
    %223 = vector.broadcast %cst_61 : f32 to vector<10x512xf32>
    %224 = arith.addf %223, %222 : vector<10x512xf32>
    %225 = arith.mulf %214, %224 : vector<10x512xf32>
    %226 = arith.truncf %225 : vector<10x512xf32> to vector<10x512xbf16>
    %c0_62 = arith.constant 0 : index
    %c0_63 = arith.constant 0 : index
    %c0_64 = arith.constant 0 : index
    %227 = vector.load %arg14[%c0_62, %c0_63, %c0_64] : memref<2x512x128xbf16, #tpu.memory_space<vmem>>, vector<1x512x128xbf16>
    %228 = vector.shape_cast %227 : vector<1x512x128xbf16> to vector<512x128xbf16>
    %cst_65 = arith.constant dense<0.000000e+00> : vector<10x128xf32>
    %229 = tpu.matmul %226, %228, %cst_65 {dimension_numbers = #tpu.dot_dimension_numbers<[1], [0], [0], [1], [0, 0, 1, 1], [], []>} : vector<10x512xbf16>, vector<512x128xbf16>, vector<10x128xf32> -> vector<10x128xf32>
    %230 = arith.addf %180, %229 : vector<10x128xf32>
    %231 = vector.extract_strided_slice %9 {offsets = [5, 0], sizes = [1, 128], strides = [1, 1]} : vector<9x128xf32> to vector<1x128xf32>
    %232 = vector.broadcast %231 : vector<1x128xf32> to vector<10x128xf32>
    %233 = arith.addf %230, %232 : vector<10x128xf32>
    %c1 = arith.constant 1 : index
    %c0_66 = arith.constant 0 : index
    %c0_67 = arith.constant 0 : index
    %234 = vector.load %arg9[%c1, %c0_66, %c0_67] : memref<2x9x128xf32, #tpu.memory_space<vmem>>, vector<1x9x128xf32>
    %235 = vector.shape_cast %234 : vector<1x9x128xf32> to vector<9x128xf32>
    %236 = vector.extract_strided_slice %235 {offsets = [0, 0], sizes = [1, 128], strides = [1, 1]} : vector<9x128xf32> to vector<1x128xf32>
    %237 = vector.extract_strided_slice %235 {offsets = [1, 0], sizes = [1, 128], strides = [1, 1]} : vector<9x128xf32> to vector<1x128xf32>
    %cst_68 = arith.constant dense<0.000000e+00> : vector<10xf32>
    %238 = vector.multi_reduction <add>, %233, %cst_68 [1] : vector<10x128xf32> to vector<10xf32>
    %239 = vector.shape_cast %238 : vector<10xf32> to vector<10x1xf32>
    %cst_69 = arith.constant 1.280000e+02 : f32
    %240 = vector.broadcast %cst_69 : f32 to vector<10x1xf32>
    %241 = arith.divf %239, %240 : vector<10x1xf32>
    %242 = vector.broadcast %241 : vector<10x1xf32> to vector<10x128xf32>
    %243 = arith.subf %233, %242 : vector<10x128xf32>
    %244 = arith.mulf %243, %243 : vector<10x128xf32>
    %cst_70 = arith.constant dense<0.000000e+00> : vector<10xf32>
    %245 = vector.multi_reduction <add>, %244, %cst_70 [1] : vector<10x128xf32> to vector<10xf32>
    %246 = vector.shape_cast %245 : vector<10xf32> to vector<10x1xf32>
    %cst_71 = arith.constant 1.280000e+02 : f32
    %247 = vector.broadcast %cst_71 : f32 to vector<10x1xf32>
    %248 = arith.divf %246, %247 : vector<10x1xf32>
    %249 = vector.broadcast %241 : vector<10x1xf32> to vector<10x128xf32>
    %250 = arith.subf %233, %249 : vector<10x128xf32>
    %cst_72 = arith.constant 9.99999996E-13 : f32
    %251 = vector.broadcast %cst_72 : f32 to vector<10x1xf32>
    %252 = arith.addf %248, %251 : vector<10x1xf32>
    %253 = math.rsqrt %252 : vector<10x1xf32>
    %254 = vector.broadcast %253 : vector<10x1xf32> to vector<10x128xf32>
    %255 = arith.mulf %250, %254 : vector<10x128xf32>
    %256 = vector.broadcast %236 : vector<1x128xf32> to vector<10x128xf32>
    %257 = arith.mulf %255, %256 : vector<10x128xf32>
    %258 = vector.broadcast %237 : vector<1x128xf32> to vector<10x128xf32>
    %259 = arith.addf %257, %258 : vector<10x128xf32>
    %260 = arith.truncf %259 : vector<10x128xf32> to vector<10x128xbf16>
    %c1_73 = arith.constant 1 : index
    %c0_74 = arith.constant 0 : index
    %c0_75 = arith.constant 0 : index
    %261 = vector.load %arg11[%c1_73, %c0_74, %c0_75] : memref<2x128x384xbf16, #tpu.memory_space<vmem>>, vector<1x128x384xbf16>
    %262 = vector.shape_cast %261 : vector<1x128x384xbf16> to vector<128x384xbf16>
    %cst_76 = arith.constant dense<0.000000e+00> : vector<10x384xf32>
    %263 = tpu.matmul %260, %262, %cst_76 {dimension_numbers = #tpu.dot_dimension_numbers<[1], [0], [0], [1], [0, 0, 1, 1], [], []>} : vector<10x128xbf16>, vector<128x384xbf16>, vector<10x384xf32> -> vector<10x384xf32>
    %c1_77 = arith.constant 1 : index
    %c0_78 = arith.constant 0 : index
    %c0_79 = arith.constant 0 : index
    %264 = vector.load %arg12[%c1_77, %c0_78, %c0_79] : memref<2x128x128xbf16, #tpu.memory_space<vmem>>, vector<1x128x128xbf16>
    %265 = vector.shape_cast %264 : vector<1x128x128xbf16> to vector<128x128xbf16>
    %cst_80 = arith.constant 0.000000e+00 : f32
    %266 = vector.broadcast %cst_80 : f32 to vector<10x128xf32>
    %267 = vector.extract_strided_slice %263 {offsets = [0, 0], sizes = [10, 32], strides = [1, 1]} : vector<10x384xf32> to vector<10x32xf32>
    %268 = vector.extract_strided_slice %235 {offsets = [6, 0], sizes = [1, 32], strides = [1, 1]} : vector<9x128xf32> to vector<1x32xf32>
    %269 = vector.broadcast %268 : vector<1x32xf32> to vector<10x32xf32>
    %270 = arith.addf %267, %269 : vector<10x32xf32>
    %271 = arith.truncf %270 : vector<10x32xf32> to vector<10x32xbf16>
    %272 = vector.extract_strided_slice %263 {offsets = [0, 128], sizes = [10, 32], strides = [1, 1]} : vector<10x384xf32> to vector<10x32xf32>
    %273 = vector.extract_strided_slice %235 {offsets = [7, 0], sizes = [1, 32], strides = [1, 1]} : vector<9x128xf32> to vector<1x32xf32>
    %274 = vector.broadcast %273 : vector<1x32xf32> to vector<10x32xf32>
    %275 = arith.addf %272, %274 : vector<10x32xf32>
    %276 = arith.truncf %275 : vector<10x32xf32> to vector<10x32xbf16>
    %277 = vector.extract_strided_slice %263 {offsets = [0, 256], sizes = [10, 32], strides = [1, 1]} : vector<10x384xf32> to vector<10x32xf32>
    %278 = vector.extract_strided_slice %235 {offsets = [8, 0], sizes = [1, 32], strides = [1, 1]} : vector<9x128xf32> to vector<1x32xf32>
    %279 = vector.broadcast %278 : vector<1x32xf32> to vector<10x32xf32>
    %280 = arith.addf %277, %279 : vector<10x32xf32>
    %281 = arith.truncf %280 : vector<10x32xf32> to vector<10x32xbf16>
    %cst_81 = arith.constant dense<0.000000e+00> : vector<10x10xf32>
    %282 = tpu.matmul %271, %276, %cst_81 {dimension_numbers = #tpu.dot_dimension_numbers<[1], [1], [0], [0], [0, 0, 1, 0], [], []>} : vector<10x32xbf16>, vector<10x32xbf16>, vector<10x10xf32> -> vector<10x10xf32>
    %283 = arith.extf %7 : vector<10x10xbf16> to vector<10x10xf32>
    %284 = arith.addf %282, %283 : vector<10x10xf32>
    %cst_82 = arith.constant dense<0xFF800000> : vector<10xf32>
    %285 = vector.multi_reduction <maximumf>, %284, %cst_82 [1] : vector<10x10xf32> to vector<10xf32>
    %286 = vector.shape_cast %285 : vector<10xf32> to vector<10x1xf32>
    %287 = vector.broadcast %286 : vector<10x1xf32> to vector<10x10xf32>
    %288 = arith.subf %284, %287 : vector<10x10xf32>
    %289 = math.exp %288 : vector<10x10xf32>
    %cst_83 = arith.constant dense<0.000000e+00> : vector<10xf32>
    %290 = vector.multi_reduction <add>, %289, %cst_83 [1] : vector<10x10xf32> to vector<10xf32>
    %291 = vector.shape_cast %290 : vector<10xf32> to vector<10x1xf32>
    %292 = tpu.reciprocal %291 {approx = true} : vector<10x1xf32> -> vector<10x1xf32>
    %293 = vector.broadcast %292 : vector<10x1xf32> to vector<10x10xf32>
    %294 = arith.mulf %289, %293 : vector<10x10xf32>
    %295 = arith.truncf %294 : vector<10x10xf32> to vector<10x10xbf16>
    %cst_84 = arith.constant dense<0.000000e+00> : vector<10x32xf32>
    %296 = tpu.matmul %295, %281, %cst_84 {dimension_numbers = #tpu.dot_dimension_numbers<[1], [0], [0], [1], [0, 0, 1, 1], [], []>} : vector<10x10xbf16>, vector<10x32xbf16>, vector<10x32xf32> -> vector<10x32xf32>
    %297 = arith.truncf %296 : vector<10x32xf32> to vector<10x32xbf16>
    %298 = vector.extract_strided_slice %265 {offsets = [0, 0], sizes = [32, 128], strides = [1, 1]} : vector<128x128xbf16> to vector<32x128xbf16>
    %cst_85 = arith.constant dense<0.000000e+00> : vector<10x128xf32>
    %299 = tpu.matmul %297, %298, %cst_85 {dimension_numbers = #tpu.dot_dimension_numbers<[1], [0], [0], [1], [0, 0, 1, 1], [], []>} : vector<10x32xbf16>, vector<32x128xbf16>, vector<10x128xf32> -> vector<10x128xf32>
    %300 = arith.addf %266, %299 : vector<10x128xf32>
    %301 = vector.extract_strided_slice %263 {offsets = [0, 32], sizes = [10, 32], strides = [1, 1]} : vector<10x384xf32> to vector<10x32xf32>
    %302 = vector.extract_strided_slice %235 {offsets = [6, 32], sizes = [1, 32], strides = [1, 1]} : vector<9x128xf32> to vector<1x32xf32>
    %303 = vector.broadcast %302 : vector<1x32xf32> to vector<10x32xf32>
    %304 = arith.addf %301, %303 : vector<10x32xf32>
    %305 = arith.truncf %304 : vector<10x32xf32> to vector<10x32xbf16>
    %306 = vector.extract_strided_slice %263 {offsets = [0, 160], sizes = [10, 32], strides = [1, 1]} : vector<10x384xf32> to vector<10x32xf32>
    %307 = vector.extract_strided_slice %235 {offsets = [7, 32], sizes = [1, 32], strides = [1, 1]} : vector<9x128xf32> to vector<1x32xf32>
    %308 = vector.broadcast %307 : vector<1x32xf32> to vector<10x32xf32>
    %309 = arith.addf %306, %308 : vector<10x32xf32>
    %310 = arith.truncf %309 : vector<10x32xf32> to vector<10x32xbf16>
    %311 = vector.extract_strided_slice %263 {offsets = [0, 288], sizes = [10, 32], strides = [1, 1]} : vector<10x384xf32> to vector<10x32xf32>
    %312 = vector.extract_strided_slice %235 {offsets = [8, 32], sizes = [1, 32], strides = [1, 1]} : vector<9x128xf32> to vector<1x32xf32>
    %313 = vector.broadcast %312 : vector<1x32xf32> to vector<10x32xf32>
    %314 = arith.addf %311, %313 : vector<10x32xf32>
    %315 = arith.truncf %314 : vector<10x32xf32> to vector<10x32xbf16>
    %cst_86 = arith.constant dense<0.000000e+00> : vector<10x10xf32>
    %316 = tpu.matmul %305, %310, %cst_86 {dimension_numbers = #tpu.dot_dimension_numbers<[1], [1], [0], [0], [0, 0, 1, 0], [], []>} : vector<10x32xbf16>, vector<10x32xbf16>, vector<10x10xf32> -> vector<10x10xf32>
    %317 = arith.extf %7 : vector<10x10xbf16> to vector<10x10xf32>
    %318 = arith.addf %316, %317 : vector<10x10xf32>
    %cst_87 = arith.constant dense<0xFF800000> : vector<10xf32>
    %319 = vector.multi_reduction <maximumf>, %318, %cst_87 [1] : vector<10x10xf32> to vector<10xf32>
    %320 = vector.shape_cast %319 : vector<10xf32> to vector<10x1xf32>
    %321 = vector.broadcast %320 : vector<10x1xf32> to vector<10x10xf32>
    %322 = arith.subf %318, %321 : vector<10x10xf32>
    %323 = math.exp %322 : vector<10x10xf32>
    %cst_88 = arith.constant dense<0.000000e+00> : vector<10xf32>
    %324 = vector.multi_reduction <add>, %323, %cst_88 [1] : vector<10x10xf32> to vector<10xf32>
    %325 = vector.shape_cast %324 : vector<10xf32> to vector<10x1xf32>
    %326 = tpu.reciprocal %325 {approx = true} : vector<10x1xf32> -> vector<10x1xf32>
    %327 = vector.broadcast %326 : vector<10x1xf32> to vector<10x10xf32>
    %328 = arith.mulf %323, %327 : vector<10x10xf32>
    %329 = arith.truncf %328 : vector<10x10xf32> to vector<10x10xbf16>
    %cst_89 = arith.constant dense<0.000000e+00> : vector<10x32xf32>
    %330 = tpu.matmul %329, %315, %cst_89 {dimension_numbers = #tpu.dot_dimension_numbers<[1], [0], [0], [1], [0, 0, 1, 1], [], []>} : vector<10x10xbf16>, vector<10x32xbf16>, vector<10x32xf32> -> vector<10x32xf32>
    %331 = arith.truncf %330 : vector<10x32xf32> to vector<10x32xbf16>
    %332 = vector.extract_strided_slice %265 {offsets = [32, 0], sizes = [32, 128], strides = [1, 1]} : vector<128x128xbf16> to vector<32x128xbf16>
    %cst_90 = arith.constant dense<0.000000e+00> : vector<10x128xf32>
    %333 = tpu.matmul %331, %332, %cst_90 {dimension_numbers = #tpu.dot_dimension_numbers<[1], [0], [0], [1], [0, 0, 1, 1], [], []>} : vector<10x32xbf16>, vector<32x128xbf16>, vector<10x128xf32> -> vector<10x128xf32>
    %334 = arith.addf %300, %333 : vector<10x128xf32>
    %335 = vector.extract_strided_slice %263 {offsets = [0, 64], sizes = [10, 32], strides = [1, 1]} : vector<10x384xf32> to vector<10x32xf32>
    %336 = vector.extract_strided_slice %235 {offsets = [6, 64], sizes = [1, 32], strides = [1, 1]} : vector<9x128xf32> to vector<1x32xf32>
    %337 = vector.broadcast %336 : vector<1x32xf32> to vector<10x32xf32>
    %338 = arith.addf %335, %337 : vector<10x32xf32>
    %339 = arith.truncf %338 : vector<10x32xf32> to vector<10x32xbf16>
    %340 = vector.extract_strided_slice %263 {offsets = [0, 192], sizes = [10, 32], strides = [1, 1]} : vector<10x384xf32> to vector<10x32xf32>
    %341 = vector.extract_strided_slice %235 {offsets = [7, 64], sizes = [1, 32], strides = [1, 1]} : vector<9x128xf32> to vector<1x32xf32>
    %342 = vector.broadcast %341 : vector<1x32xf32> to vector<10x32xf32>
    %343 = arith.addf %340, %342 : vector<10x32xf32>
    %344 = arith.truncf %343 : vector<10x32xf32> to vector<10x32xbf16>
    %345 = vector.extract_strided_slice %263 {offsets = [0, 320], sizes = [10, 32], strides = [1, 1]} : vector<10x384xf32> to vector<10x32xf32>
    %346 = vector.extract_strided_slice %235 {offsets = [8, 64], sizes = [1, 32], strides = [1, 1]} : vector<9x128xf32> to vector<1x32xf32>
    %347 = vector.broadcast %346 : vector<1x32xf32> to vector<10x32xf32>
    %348 = arith.addf %345, %347 : vector<10x32xf32>
    %349 = arith.truncf %348 : vector<10x32xf32> to vector<10x32xbf16>
    %cst_91 = arith.constant dense<0.000000e+00> : vector<10x10xf32>
    %350 = tpu.matmul %339, %344, %cst_91 {dimension_numbers = #tpu.dot_dimension_numbers<[1], [1], [0], [0], [0, 0, 1, 0], [], []>} : vector<10x32xbf16>, vector<10x32xbf16>, vector<10x10xf32> -> vector<10x10xf32>
    %351 = arith.extf %7 : vector<10x10xbf16> to vector<10x10xf32>
    %352 = arith.addf %350, %351 : vector<10x10xf32>
    %cst_92 = arith.constant dense<0xFF800000> : vector<10xf32>
    %353 = vector.multi_reduction <maximumf>, %352, %cst_92 [1] : vector<10x10xf32> to vector<10xf32>
    %354 = vector.shape_cast %353 : vector<10xf32> to vector<10x1xf32>
    %355 = vector.broadcast %354 : vector<10x1xf32> to vector<10x10xf32>
    %356 = arith.subf %352, %355 : vector<10x10xf32>
    %357 = math.exp %356 : vector<10x10xf32>
    %cst_93 = arith.constant dense<0.000000e+00> : vector<10xf32>
    %358 = vector.multi_reduction <add>, %357, %cst_93 [1] : vector<10x10xf32> to vector<10xf32>
    %359 = vector.shape_cast %358 : vector<10xf32> to vector<10x1xf32>
    %360 = tpu.reciprocal %359 {approx = true} : vector<10x1xf32> -> vector<10x1xf32>
    %361 = vector.broadcast %360 : vector<10x1xf32> to vector<10x10xf32>
    %362 = arith.mulf %357, %361 : vector<10x10xf32>
    %363 = arith.truncf %362 : vector<10x10xf32> to vector<10x10xbf16>
    %cst_94 = arith.constant dense<0.000000e+00> : vector<10x32xf32>
    %364 = tpu.matmul %363, %349, %cst_94 {dimension_numbers = #tpu.dot_dimension_numbers<[1], [0], [0], [1], [0, 0, 1, 1], [], []>} : vector<10x10xbf16>, vector<10x32xbf16>, vector<10x32xf32> -> vector<10x32xf32>
    %365 = arith.truncf %364 : vector<10x32xf32> to vector<10x32xbf16>
    %366 = vector.extract_strided_slice %265 {offsets = [64, 0], sizes = [32, 128], strides = [1, 1]} : vector<128x128xbf16> to vector<32x128xbf16>
    %cst_95 = arith.constant dense<0.000000e+00> : vector<10x128xf32>
    %367 = tpu.matmul %365, %366, %cst_95 {dimension_numbers = #tpu.dot_dimension_numbers<[1], [0], [0], [1], [0, 0, 1, 1], [], []>} : vector<10x32xbf16>, vector<32x128xbf16>, vector<10x128xf32> -> vector<10x128xf32>
    %368 = arith.addf %334, %367 : vector<10x128xf32>
    %369 = vector.extract_strided_slice %263 {offsets = [0, 96], sizes = [10, 32], strides = [1, 1]} : vector<10x384xf32> to vector<10x32xf32>
    %370 = vector.extract_strided_slice %235 {offsets = [6, 96], sizes = [1, 32], strides = [1, 1]} : vector<9x128xf32> to vector<1x32xf32>
    %371 = vector.broadcast %370 : vector<1x32xf32> to vector<10x32xf32>
    %372 = arith.addf %369, %371 : vector<10x32xf32>
    %373 = arith.truncf %372 : vector<10x32xf32> to vector<10x32xbf16>
    %374 = vector.extract_strided_slice %263 {offsets = [0, 224], sizes = [10, 32], strides = [1, 1]} : vector<10x384xf32> to vector<10x32xf32>
    %375 = vector.extract_strided_slice %235 {offsets = [7, 96], sizes = [1, 32], strides = [1, 1]} : vector<9x128xf32> to vector<1x32xf32>
    %376 = vector.broadcast %375 : vector<1x32xf32> to vector<10x32xf32>
    %377 = arith.addf %374, %376 : vector<10x32xf32>
    %378 = arith.truncf %377 : vector<10x32xf32> to vector<10x32xbf16>
    %379 = vector.extract_strided_slice %263 {offsets = [0, 352], sizes = [10, 32], strides = [1, 1]} : vector<10x384xf32> to vector<10x32xf32>
    %380 = vector.extract_strided_slice %235 {offsets = [8, 96], sizes = [1, 32], strides = [1, 1]} : vector<9x128xf32> to vector<1x32xf32>
    %381 = vector.broadcast %380 : vector<1x32xf32> to vector<10x32xf32>
    %382 = arith.addf %379, %381 : vector<10x32xf32>
    %383 = arith.truncf %382 : vector<10x32xf32> to vector<10x32xbf16>
    %cst_96 = arith.constant dense<0.000000e+00> : vector<10x10xf32>
    %384 = tpu.matmul %373, %378, %cst_96 {dimension_numbers = #tpu.dot_dimension_numbers<[1], [1], [0], [0], [0, 0, 1, 0], [], []>} : vector<10x32xbf16>, vector<10x32xbf16>, vector<10x10xf32> -> vector<10x10xf32>
    %385 = arith.extf %7 : vector<10x10xbf16> to vector<10x10xf32>
    %386 = arith.addf %384, %385 : vector<10x10xf32>
    %cst_97 = arith.constant dense<0xFF800000> : vector<10xf32>
    %387 = vector.multi_reduction <maximumf>, %386, %cst_97 [1] : vector<10x10xf32> to vector<10xf32>
    %388 = vector.shape_cast %387 : vector<10xf32> to vector<10x1xf32>
    %389 = vector.broadcast %388 : vector<10x1xf32> to vector<10x10xf32>
    %390 = arith.subf %386, %389 : vector<10x10xf32>
    %391 = math.exp %390 : vector<10x10xf32>
    %cst_98 = arith.constant dense<0.000000e+00> : vector<10xf32>
    %392 = vector.multi_reduction <add>, %391, %cst_98 [1] : vector<10x10xf32> to vector<10xf32>
    %393 = vector.shape_cast %392 : vector<10xf32> to vector<10x1xf32>
    %394 = tpu.reciprocal %393 {approx = true} : vector<10x1xf32> -> vector<10x1xf32>
    %395 = vector.broadcast %394 : vector<10x1xf32> to vector<10x10xf32>
    %396 = arith.mulf %391, %395 : vector<10x10xf32>
    %397 = arith.truncf %396 : vector<10x10xf32> to vector<10x10xbf16>
    %cst_99 = arith.constant dense<0.000000e+00> : vector<10x32xf32>
    %398 = tpu.matmul %397, %383, %cst_99 {dimension_numbers = #tpu.dot_dimension_numbers<[1], [0], [0], [1], [0, 0, 1, 1], [], []>} : vector<10x10xbf16>, vector<10x32xbf16>, vector<10x32xf32> -> vector<10x32xf32>
    %399 = arith.truncf %398 : vector<10x32xf32> to vector<10x32xbf16>
    %400 = vector.extract_strided_slice %265 {offsets = [96, 0], sizes = [32, 128], strides = [1, 1]} : vector<128x128xbf16> to vector<32x128xbf16>
    %cst_100 = arith.constant dense<0.000000e+00> : vector<10x128xf32>
    %401 = tpu.matmul %399, %400, %cst_100 {dimension_numbers = #tpu.dot_dimension_numbers<[1], [0], [0], [1], [0, 0, 1, 1], [], []>} : vector<10x32xbf16>, vector<32x128xbf16>, vector<10x128xf32> -> vector<10x128xf32>
    %402 = arith.addf %368, %401 : vector<10x128xf32>
    %403 = arith.addf %233, %402 : vector<10x128xf32>
    %404 = vector.extract_strided_slice %235 {offsets = [4, 0], sizes = [1, 128], strides = [1, 1]} : vector<9x128xf32> to vector<1x128xf32>
    %405 = vector.broadcast %404 : vector<1x128xf32> to vector<10x128xf32>
    %406 = arith.addf %403, %405 : vector<10x128xf32>
    %407 = vector.extract_strided_slice %235 {offsets = [2, 0], sizes = [1, 128], strides = [1, 1]} : vector<9x128xf32> to vector<1x128xf32>
    %408 = vector.extract_strided_slice %235 {offsets = [3, 0], sizes = [1, 128], strides = [1, 1]} : vector<9x128xf32> to vector<1x128xf32>
    %cst_101 = arith.constant dense<0.000000e+00> : vector<10xf32>
    %409 = vector.multi_reduction <add>, %406, %cst_101 [1] : vector<10x128xf32> to vector<10xf32>
    %410 = vector.shape_cast %409 : vector<10xf32> to vector<10x1xf32>
    %cst_102 = arith.constant 1.280000e+02 : f32
    %411 = vector.broadcast %cst_102 : f32 to vector<10x1xf32>
    %412 = arith.divf %410, %411 : vector<10x1xf32>
    %413 = vector.broadcast %412 : vector<10x1xf32> to vector<10x128xf32>
    %414 = arith.subf %406, %413 : vector<10x128xf32>
    %415 = arith.mulf %414, %414 : vector<10x128xf32>
    %cst_103 = arith.constant dense<0.000000e+00> : vector<10xf32>
    %416 = vector.multi_reduction <add>, %415, %cst_103 [1] : vector<10x128xf32> to vector<10xf32>
    %417 = vector.shape_cast %416 : vector<10xf32> to vector<10x1xf32>
    %cst_104 = arith.constant 1.280000e+02 : f32
    %418 = vector.broadcast %cst_104 : f32 to vector<10x1xf32>
    %419 = arith.divf %417, %418 : vector<10x1xf32>
    %420 = vector.broadcast %412 : vector<10x1xf32> to vector<10x128xf32>
    %421 = arith.subf %406, %420 : vector<10x128xf32>
    %cst_105 = arith.constant 9.99999996E-13 : f32
    %422 = vector.broadcast %cst_105 : f32 to vector<10x1xf32>
    %423 = arith.addf %419, %422 : vector<10x1xf32>
    %424 = math.rsqrt %423 : vector<10x1xf32>
    %425 = vector.broadcast %424 : vector<10x1xf32> to vector<10x128xf32>
    %426 = arith.mulf %421, %425 : vector<10x128xf32>
    %427 = vector.broadcast %407 : vector<1x128xf32> to vector<10x128xf32>
    %428 = arith.mulf %426, %427 : vector<10x128xf32>
    %429 = vector.broadcast %408 : vector<1x128xf32> to vector<10x128xf32>
    %430 = arith.addf %428, %429 : vector<10x128xf32>
    %431 = arith.truncf %430 : vector<10x128xf32> to vector<10x128xbf16>
    %c1_106 = arith.constant 1 : index
    %c0_107 = arith.constant 0 : index
    %c0_108 = arith.constant 0 : index
    %432 = vector.load %arg13[%c1_106, %c0_107, %c0_108] : memref<2x128x512xbf16, #tpu.memory_space<vmem>>, vector<1x128x512xbf16>
    %433 = vector.shape_cast %432 : vector<1x128x512xbf16> to vector<128x512xbf16>
    %cst_109 = arith.constant dense<0.000000e+00> : vector<10x512xf32>
    %434 = tpu.matmul %431, %433, %cst_109 {dimension_numbers = #tpu.dot_dimension_numbers<[1], [0], [0], [1], [0, 0, 1, 1], [], []>} : vector<10x128xbf16>, vector<128x512xbf16>, vector<10x512xf32> -> vector<10x512xf32>
    %c1_110 = arith.constant 1 : index
    %c0_111 = arith.constant 0 : index
    %c0_112 = arith.constant 0 : index
    %435 = vector.load %arg10[%c1_110, %c0_111, %c0_112] : memref<2x1x512xf32, #tpu.memory_space<vmem>>, vector<1x1x512xf32>
    %436 = vector.shape_cast %435 : vector<1x1x512xf32> to vector<1x512xf32>
    %437 = vector.broadcast %436 : vector<1x512xf32> to vector<10x512xf32>
    %438 = arith.addf %434, %437 : vector<10x512xf32>
    %cst_113 = arith.constant 5.000000e-01 : f32
    %439 = vector.broadcast %cst_113 : f32 to vector<10x512xf32>
    %440 = arith.mulf %439, %438 : vector<10x512xf32>
    %cst_114 = arith.constant 4.471500e-02 : f32
    %441 = vector.broadcast %cst_114 : f32 to vector<10x512xf32>
    %442 = arith.mulf %441, %438 : vector<10x512xf32>
    %443 = arith.mulf %442, %438 : vector<10x512xf32>
    %444 = arith.mulf %443, %438 : vector<10x512xf32>
    %445 = arith.addf %438, %444 : vector<10x512xf32>
    %cst_115 = arith.constant 0.797884583 : f32
    %446 = vector.broadcast %cst_115 : f32 to vector<10x512xf32>
    %447 = arith.mulf %446, %445 : vector<10x512xf32>
    %448 = math.tanh %447 : vector<10x512xf32>
    %cst_116 = arith.constant 1.000000e+00 : f32
    %449 = vector.broadcast %cst_116 : f32 to vector<10x512xf32>
    %450 = arith.addf %449, %448 : vector<10x512xf32>
    %451 = arith.mulf %440, %450 : vector<10x512xf32>
    %452 = arith.truncf %451 : vector<10x512xf32> to vector<10x512xbf16>
    %c1_117 = arith.constant 1 : index
    %c0_118 = arith.constant 0 : index
    %c0_119 = arith.constant 0 : index
    %453 = vector.load %arg14[%c1_117, %c0_118, %c0_119] : memref<2x512x128xbf16, #tpu.memory_space<vmem>>, vector<1x512x128xbf16>
    %454 = vector.shape_cast %453 : vector<1x512x128xbf16> to vector<512x128xbf16>
    %cst_120 = arith.constant dense<0.000000e+00> : vector<10x128xf32>
    %455 = tpu.matmul %452, %454, %cst_120 {dimension_numbers = #tpu.dot_dimension_numbers<[1], [0], [0], [1], [0, 0, 1, 1], [], []>} : vector<10x512xbf16>, vector<512x128xbf16>, vector<10x128xf32> -> vector<10x128xf32>
    %456 = arith.addf %406, %455 : vector<10x128xf32>
    %457 = vector.extract_strided_slice %235 {offsets = [5, 0], sizes = [1, 128], strides = [1, 1]} : vector<9x128xf32> to vector<1x128xf32>
    %458 = vector.broadcast %457 : vector<1x128xf32> to vector<10x128xf32>
    %459 = arith.addf %456, %458 : vector<10x128xf32>
    %c0_121 = arith.constant 0 : index
    %c0_122 = arith.constant 0 : index
    %460 = vector.load %arg8[%c0_121, %c0_122] : memref<4x128xf32, #tpu.memory_space<vmem>>, vector<4x128xf32>
    %c0_123 = arith.constant 0 : index
    %c0_124 = arith.constant 0 : index
    %461 = vector.load %arg6[%c0_123, %c0_124] : memref<2x10xf32, #tpu.memory_space<vmem>>, vector<2x10xf32>
    %cst_125 = arith.constant dense<0.000000e+00> : vector<2x128xf32>
    %462 = tpu.matmul %461, %459, %cst_125 {dimension_numbers = #tpu.dot_dimension_numbers<[1], [0], [0], [1], [0, 0, 1, 1], [], []>} : vector<2x10xf32>, vector<10x128xf32>, vector<2x128xf32> -> vector<2x128xf32>
    %463 = vector.extract_strided_slice %460 {offsets = [0, 0], sizes = [1, 128], strides = [1, 1]} : vector<4x128xf32> to vector<1x128xf32>
    %464 = vector.extract_strided_slice %460 {offsets = [1, 0], sizes = [1, 128], strides = [1, 1]} : vector<4x128xf32> to vector<1x128xf32>
    %cst_126 = arith.constant dense<0.000000e+00> : vector<2xf32>
    %465 = vector.multi_reduction <add>, %462, %cst_126 [1] : vector<2x128xf32> to vector<2xf32>
    %466 = vector.shape_cast %465 : vector<2xf32> to vector<2x1xf32>
    %cst_127 = arith.constant 1.280000e+02 : f32
    %467 = vector.broadcast %cst_127 : f32 to vector<2x1xf32>
    %468 = arith.divf %466, %467 : vector<2x1xf32>
    %469 = vector.broadcast %468 : vector<2x1xf32> to vector<2x128xf32>
    %470 = arith.subf %462, %469 : vector<2x128xf32>
    %471 = arith.mulf %470, %470 : vector<2x128xf32>
    %cst_128 = arith.constant dense<0.000000e+00> : vector<2xf32>
    %472 = vector.multi_reduction <add>, %471, %cst_128 [1] : vector<2x128xf32> to vector<2xf32>
    %473 = vector.shape_cast %472 : vector<2xf32> to vector<2x1xf32>
    %cst_129 = arith.constant 1.280000e+02 : f32
    %474 = vector.broadcast %cst_129 : f32 to vector<2x1xf32>
    %475 = arith.divf %473, %474 : vector<2x1xf32>
    %476 = vector.broadcast %468 : vector<2x1xf32> to vector<2x128xf32>
    %477 = arith.subf %462, %476 : vector<2x128xf32>
    %cst_130 = arith.constant 9.99999996E-13 : f32
    %478 = vector.broadcast %cst_130 : f32 to vector<2x1xf32>
    %479 = arith.addf %475, %478 : vector<2x1xf32>
    %480 = math.rsqrt %479 : vector<2x1xf32>
    %481 = vector.broadcast %480 : vector<2x1xf32> to vector<2x128xf32>
    %482 = arith.mulf %477, %481 : vector<2x128xf32>
    %483 = vector.broadcast %463 : vector<1x128xf32> to vector<2x128xf32>
    %484 = arith.mulf %482, %483 : vector<2x128xf32>
    %485 = vector.broadcast %464 : vector<1x128xf32> to vector<2x128xf32>
    %486 = arith.addf %484, %485 : vector<2x128xf32>
    %c0_131 = arith.constant 0 : index
    %c0_132 = arith.constant 0 : index
    %487 = vector.load %arg2[%c0_131, %c0_132] : memref<2x8xf32, #tpu.memory_space<vmem>>, vector<2x8xf32>
    %488 = arith.truncf %487 : vector<2x8xf32> to vector<2x8xbf16>
    %c0_133 = arith.constant 0 : index
    %c0_134 = arith.constant 0 : index
    %489 = vector.load %arg15[%c0_133, %c0_134] : memref<8x128xbf16, #tpu.memory_space<vmem>>, vector<8x128xbf16>
    %cst_135 = arith.constant dense<0.000000e+00> : vector<2x128xf32>
    %490 = tpu.matmul %488, %489, %cst_135 {dimension_numbers = #tpu.dot_dimension_numbers<[1], [0], [0], [1], [0, 0, 1, 1], [], []>} : vector<2x8xbf16>, vector<8x128xbf16>, vector<2x128xf32> -> vector<2x128xf32>
    %491 = vector.extract_strided_slice %460 {offsets = [2, 0], sizes = [1, 128], strides = [1, 1]} : vector<4x128xf32> to vector<1x128xf32>
    %492 = vector.broadcast %491 : vector<1x128xf32> to vector<2x128xf32>
    %493 = arith.addf %490, %492 : vector<2x128xf32>
    %cst_136 = arith.constant 0.000000e+00 : f32
    %494 = vector.broadcast %cst_136 : f32 to vector<2x128xf32>
    %495 = arith.maximumf %493, %494 : vector<2x128xf32>
    %496 = arith.truncf %486 : vector<2x128xf32> to vector<2x128xbf16>
    %c0_137 = arith.constant 0 : index
    %c0_138 = arith.constant 0 : index
    %497 = vector.load %arg16[%c0_137, %c0_138] : memref<128x128xbf16, #tpu.memory_space<vmem>>, vector<128x128xbf16>
    %cst_139 = arith.constant dense<0.000000e+00> : vector<2x128xf32>
    %498 = tpu.matmul %496, %497, %cst_139 {dimension_numbers = #tpu.dot_dimension_numbers<[1], [0], [0], [1], [0, 0, 1, 1], [], []>} : vector<2x128xbf16>, vector<128x128xbf16>, vector<2x128xf32> -> vector<2x128xf32>
    %499 = arith.truncf %495 : vector<2x128xf32> to vector<2x128xbf16>
    %c0_140 = arith.constant 0 : index
    %c0_141 = arith.constant 0 : index
    %500 = vector.load %arg17[%c0_140, %c0_141] : memref<128x128xbf16, #tpu.memory_space<vmem>>, vector<128x128xbf16>
    %cst_142 = arith.constant dense<0.000000e+00> : vector<2x128xf32>
    %501 = tpu.matmul %499, %500, %cst_142 {dimension_numbers = #tpu.dot_dimension_numbers<[1], [0], [0], [1], [0, 0, 1, 1], [], []>} : vector<2x128xbf16>, vector<128x128xbf16>, vector<2x128xf32> -> vector<2x128xf32>
    %502 = arith.addf %498, %501 : vector<2x128xf32>
    %503 = vector.extract_strided_slice %460 {offsets = [3, 0], sizes = [1, 128], strides = [1, 1]} : vector<4x128xf32> to vector<1x128xf32>
    %504 = vector.broadcast %503 : vector<1x128xf32> to vector<2x128xf32>
    %505 = arith.addf %502, %504 : vector<2x128xf32>
    %c0_143 = arith.constant 0 : index
    %c0_144 = arith.constant 0 : index
    %506 = vector.load %arg18[%c0_143, %c0_144] : memref<2x128xf32, #tpu.memory_space<vmem>>, vector<2x128xf32>
    tpu.vector_store %arg18[%c0_143, %c0_144], %505 {strides = array<i32>} : memref<2x128xf32, #tpu.memory_space<vmem>>, vector<2x128xf32>,
    return
  }
  func.func @transform_0(%arg0: i32) -> (i32, i32) {
    %c0_i32 = arith.constant 0 : i32
    %c0_i32_0 = arith.constant 0 : i32
    return %arg0, %c0_i32 : i32, i32
  }
  func.func @transform_1(%arg0: i32) -> (i32, i32) {
    %c0_i32 = arith.constant 0 : i32
    %c0_i32_0 = arith.constant 0 : i32
    return %arg0, %c0_i32 : i32, i32
  }
  func.func @transform_2(%arg0: i32) -> (i32, i32) {
    %c0_i32 = arith.constant 0 : i32
    %c0_i32_0 = arith.constant 0 : i32
    %c0_i32_1 = arith.constant 0 : i32
    return %c0_i32, %c0_i32_0 : i32, i32
  }
  func.func @transform_3(%arg0: i32) -> (i32, i32) {
    %c0_i32 = arith.constant 0 : i32
    %c0_i32_0 = arith.constant 0 : i32
    %c0_i32_1 = arith.constant 0 : i32
    return %c0_i32, %c0_i32_0 : i32, i32
  }
  func.func @transform_4(%arg0: i32) -> (i32, i32) {
    %c0_i32 = arith.constant 0 : i32
    %c0_i32_0 = arith.constant 0 : i32
    %c0_i32_1 = arith.constant 0 : i32
    return %c0_i32, %c0_i32_0 : i32, i32
  }
  func.func @transform_5(%arg0: i32) -> (i32, i32) {
    %c0_i32 = arith.constant 0 : i32
    %c0_i32_0 = arith.constant 0 : i32
    %c0_i32_1 = arith.constant 0 : i32
    return %c0_i32, %c0_i32_0 : i32, i32
  }
  func.func @transform_6(%arg0: i32) -> (i32, i32) {
    %c0_i32 = arith.constant 0 : i32
    %c0_i32_0 = arith.constant 0 : i32
    %c0_i32_1 = arith.constant 0 : i32
    return %c0_i32, %c0_i32_0 : i32, i32
  }
  func.func @transform_7(%arg0: i32) -> (i32, i32) {
    %c0_i32 = arith.constant 0 : i32
    %c0_i32_0 = arith.constant 0 : i32
    %c0_i32_1 = arith.constant 0 : i32
    return %c0_i32, %c0_i32_0 : i32, i32
  }
  func.func @transform_8(%arg0: i32) -> (i32, i32, i32) {
    %c0_i32 = arith.constant 0 : i32
    %c0_i32_0 = arith.constant 0 : i32
    %c0_i32_1 = arith.constant 0 : i32
    %c0_i32_2 = arith.constant 0 : i32
    return %c0_i32, %c0_i32_0, %c0_i32_1 : i32, i32, i32
  }
  func.func @transform_9(%arg0: i32) -> (i32, i32, i32) {
    %c0_i32 = arith.constant 0 : i32
    %c0_i32_0 = arith.constant 0 : i32
    %c0_i32_1 = arith.constant 0 : i32
    %c0_i32_2 = arith.constant 0 : i32
    return %c0_i32, %c0_i32_0, %c0_i32_1 : i32, i32, i32
  }
  func.func @transform_10(%arg0: i32) -> (i32, i32, i32) {
    %c0_i32 = arith.constant 0 : i32
    %c0_i32_0 = arith.constant 0 : i32
    %c0_i32_1 = arith.constant 0 : i32
    %c0_i32_2 = arith.constant 0 : i32
    return %c0_i32, %c0_i32_0, %c0_i32_1 : i32, i32, i32
  }
  func.func @transform_11(%arg0: i32) -> (i32, i32, i32) {
    %c0_i32 = arith.constant 0 : i32
    %c0_i32_0 = arith.constant 0 : i32
    %c0_i32_1 = arith.constant 0 : i32
    %c0_i32_2 = arith.constant 0 : i32
    return %c0_i32, %c0_i32_0, %c0_i32_1 : i32, i32, i32
  }
  func.func @transform_12(%arg0: i32) -> (i32, i32, i32) {
    %c0_i32 = arith.constant 0 : i32
    %c0_i32_0 = arith.constant 0 : i32
    %c0_i32_1 = arith.constant 0 : i32
    %c0_i32_2 = arith.constant 0 : i32
    return %c0_i32, %c0_i32_0, %c0_i32_1 : i32, i32, i32
  }
  func.func @transform_13(%arg0: i32) -> (i32, i32, i32) {
    %c0_i32 = arith.constant 0 : i32
    %c0_i32_0 = arith.constant 0 : i32
    %c0_i32_1 = arith.constant 0 : i32
    %c0_i32_2 = arith.constant 0 : i32
    return %c0_i32, %c0_i32_0, %c0_i32_1 : i32, i32, i32
  }
  func.func @transform_14(%arg0: i32) -> (i32, i32) {
    %c0_i32 = arith.constant 0 : i32
    %c0_i32_0 = arith.constant 0 : i32
    %c0_i32_1 = arith.constant 0 : i32
    return %c0_i32, %c0_i32_0 : i32, i32
  }
  func.func @transform_15(%arg0: i32) -> (i32, i32) {
    %c0_i32 = arith.constant 0 : i32
    %c0_i32_0 = arith.constant 0 : i32
    %c0_i32_1 = arith.constant 0 : i32
    return %c0_i32, %c0_i32_0 : i32, i32
  }
  func.func @transform_16(%arg0: i32) -> (i32, i32) {
    %c0_i32 = arith.constant 0 : i32
    %c0_i32_0 = arith.constant 0 : i32
    %c0_i32_1 = arith.constant 0 : i32
    return %c0_i32, %c0_i32_0 : i32, i32
  }
  func.func @transform_17(%arg0: i32) -> (i32, i32) {
    %c0_i32 = arith.constant 0 : i32
    %c0_i32_0 = arith.constant 0 : i32
    return %arg0, %c0_i32 : i32, i32
  }
}

</mosaic_0001>

<llo_original>
// kernel: tile.9
$region0: #{tile.9}
  %s0 = inlined_call_operand.vmem [shape: f32[2,5,128], index: 0, kind: input, shape index: {}]
  %s1 = inlined_call_operand.vmem [shape: f32[10,128], index: 1, kind: output, shape index: {}]
  %v2 = vld [vmem:[%s0] sm:$0x1f]
  %3 = vst [vmem:[%s1] sm:$0x1f] %v2
  %s4 = scalar_lea.vmem %s0, 8
  %v5 = vld [vmem:[%s4] sm:$0x1f]
  %s6 = scalar_lea.vmem %s1, 5
  %7 = vst [vmem:[%s6] sm:$0x1f] %v5

// kernel: multimodal_classifier.1
$region0: #{multimodal_classifier.1}
  #allocation0 [shape = 'u32[]', space=smem, size = 0x4, offset = 0x4, fixed_abs, tag = 'smem constant byte address 0x4 - core index']
  #allocation1 [shape = 'u32[144,128]{1,0:T(1,128)}', space=vmem, size = 0x12000, scoped, tag = 'internal scratch']
  %s0 = inlined_call_operand.vmem [shape: bf16[8,768], index: 0, kind: input, shape index: {}]
  %s1 = inlined_call_operand.vmem [shape: f32[2,8], index: 1, kind: input, shape index: {}]
  %s2 = inlined_call_operand.vmem [shape: f32[10,8], index: 2, kind: input, shape index: {}]
  %s3 = inlined_call_operand.vmem [shape: f32[10,128], index: 3, kind: input, shape index: {}]
  %s4 = inlined_call_operand.vmem [shape: bf16[10,10], index: 4, kind: input, shape index: {}]
  %s5 = inlined_call_operand.vmem [shape: f32[2,10], index: 5, kind: input, shape index: {}]
  %s6 = inlined_call_operand.hbm [shape: bf16[768,128], index: 6, kind: input, shape index: {}]
  %s7 = inlined_call_operand.vmem [shape: f32[4,128], index: 7, kind: input, shape index: {}]
  %s8 = inlined_call_operand.vmem [shape: f32[2,9,128], index: 8, kind: input, shape index: {}]
  %s9 = inlined_call_operand.vmem [shape: f32[2,1,512], index: 9, kind: input, shape index: {}]
  %s10 = inlined_call_operand.hbm [shape: bf16[2,128,384], index: 10, kind: input, shape index: {}]
  %s11 = inlined_call_operand.vmem [shape: bf16[2,128,128], index: 11, kind: input, shape index: {}]
  %s12 = inlined_call_operand.vmem [shape: bf16[2,128,512], index: 12, kind: input, shape index: {}]
  %s13 = inlined_call_operand.vmem [shape: bf16[2,512,128], index: 13, kind: input, shape index: {}]
  %s14 = inlined_call_operand.vmem [shape: bf16[8,128], index: 14, kind: input, shape index: {}]
  %s15 = inlined_call_operand.vmem [shape: bf16[128,128], index: 15, kind: input, shape index: {}]
  %s16 = inlined_call_operand.vmem [shape: bf16[128,128], index: 16, kind: input, shape index: {}]
  %s17 = inlined_call_operand.hbm [shape: f32[2,128], index: 17, kind: output, shape index: {}]
  %s18 = sld [smem:[#allocation0]]
  $region86: #{multimodal_classifier.1} parent=0
    _
  %s20 = ssub.s32 1, %s18
  %s21 = scalar_select 0, %s20, %s18
  $region1: #{multimodal_classifier.1} parent=0
    #allocation2 [shape = 'u8[196608]{0}', space=vmem, size = 0x30000, scoped, tag = 'input window, operand 6, single buffered']
    #allocation3 [shape = 's32[1]{0}', space=sflag, size = 0x4, scoped, tag = 'scoped memory for multimodal_classifier.1']
    #allocation4 [shape = 's32[1]{0}', space=sflag, size = 0x4, scoped, tag = 'scoped memory for multimodal_classifier.1']
    #allocation5 [shape = 'u8[196608]{0}', space=vmem, size = 0x30000, scoped, tag = 'input window, operand 10, single buffered']
    #allocation6 [shape = 's32[1]{0}', space=sflag, size = 0x4, scoped, tag = 'scoped memory for multimodal_classifier.1']
    #allocation7 [shape = 'u8[1024]{0}', space=vmem, size = 0x400, scoped, tag = 'output window, operand 0, single buffered']
    %22 = vsyncpa [#allocation3], 0
    %23 = vsyncpa [#allocation6], 0
    %24 = vsyncpa [#allocation4], 0
    // Predicated region
    $region2: #{multimodal_classifier.1} parent=1 // pred_check
      _
    $region3: #{multimodal_classifier.1} parent=1 // pred_check_branch
      %26 = sbr.rel (0) target = $region5
    $region4: #{multimodal_classifier.1} parent=1 // pred_region
      _
    $region5: #{multimodal_classifier.1} parent=1 // pred_fallthru
      _
    // Predicated region
    $region6: #{multimodal_classifier.1} parent=1 // pred_check
      _
    $region7: #{multimodal_classifier.1} parent=1 // pred_check_branch
      %28 = sbr.rel (0) target = $region9
    $region8: #{multimodal_classifier.1} parent=1 // pred_region
      _
    $region9: #{multimodal_classifier.1} parent=1 // pred_fallthru
      _
    // Predicated region
    $region10: #{multimodal_classifier.1} parent=1 // pred_check
      _
    $region11: #{multimodal_classifier.1} parent=1 // pred_check_branch
      %30 = sbr.rel (0) target = $region13
    $region12: #{multimodal_classifier.1} parent=1 // pred_region
      _
    $region13: #{multimodal_classifier.1} parent=1 // pred_fallthru
      _
    // Predicated region
    $region14: #{multimodal_classifier.1} parent=1 // pred_check
      _
    $region15: #{multimodal_classifier.1} parent=1 // pred_check_branch
      %32 = sbr.rel (0) target = $region17
    $region16: #{multimodal_classifier.1} parent=1 // pred_region
      _
    $region17: #{multimodal_classifier.1} parent=1 // pred_fallthru
      _
    // Predicated region
    $region18: #{multimodal_classifier.1} parent=1 // pred_check
      _
    $region19: #{multimodal_classifier.1} parent=1 // pred_check_branch
      %34 = sbr.rel (0) target = $region21
    $region20: #{multimodal_classifier.1} parent=1 // pred_region
      _
    $region21: #{multimodal_classifier.1} parent=1 // pred_fallthru
      _
    // Predicated region
    $region22: #{multimodal_classifier.1} parent=1 // pred_check
      _
    $region23: #{multimodal_classifier.1} parent=1 // pred_check_branch
      %36 = sbr.rel (0) target = $region25
    $region24: #{multimodal_classifier.1} parent=1 // pred_region
      _
    $region25: #{multimodal_classifier.1} parent=1 // pred_fallthru
      _
    // Predicated region
    $region26: #{multimodal_classifier.1} parent=1 // pred_check
      _
    $region27: #{multimodal_classifier.1} parent=1 // pred_check_branch
      %38 = sbr.rel (0) target = $region29
    $region28: #{multimodal_classifier.1} parent=1 // pred_region
      %s40 = ssub.s32 6144, 6144
      %41 = vsyncadd [#allocation3], %s40
      %s42 = sshll.u32 [#allocation2], 4
      %s43 = int_to_ptr.vmem [resolvable:$true] %s42
      %48 = dma.hbm_to_vmem [thread:$0]  %s6, 6144, %s43, [#allocation3], 64, 64, 4
    $region29: #{multimodal_classifier.1} parent=1 // pred_fallthru
      _
    // Predicated region
    $region30: #{multimodal_classifier.1} parent=1 // pred_check
      _
    $region31: #{multimodal_classifier.1} parent=1 // pred_check_branch
      %50 = sbr.rel (0) target = $region33
    $region32: #{multimodal_classifier.1} parent=1 // pred_region
      _
    $region33: #{multimodal_classifier.1} parent=1 // pred_fallthru
      _
    // Predicated region
    $region34: #{multimodal_classifier.1} parent=1 // pred_check
      _
    $region35: #{multimodal_classifier.1} parent=1 // pred_check_branch
      %52 = sbr.rel (0) target = $region37
    $region36: #{multimodal_classifier.1} parent=1 // pred_region
      _
    $region37: #{multimodal_classifier.1} parent=1 // pred_fallthru
      _
    // Predicated region
    $region38: #{multimodal_classifier.1} parent=1 // pred_check
      _
    $region39: #{multimodal_classifier.1} parent=1 // pred_check_branch
      %54 = sbr.rel (0) target = $region41
    $region40: #{multimodal_classifier.1} parent=1 // pred_region
      _
    $region41: #{multimodal_classifier.1} parent=1 // pred_fallthru
      _
    // Predicated region
    $region42: #{multimodal_classifier.1} parent=1 // pred_check
      _
    $region43: #{multimodal_classifier.1} parent=1 // pred_check_branch
      %56 = sbr.rel (0) target = $region45
    $region44: #{multimodal_classifier.1} parent=1 // pred_region
      %s58 = ssub.s32 6144, 6144
      %59 = vsyncadd [#allocation6], %s58
      %s60 = sshll.u32 [#allocation5], 4
      %s61 = int_to_ptr.vmem [resolvable:$true] %s60
      %66 = dma.hbm_to_vmem [thread:$0]  %s10, 6144, %s61, [#allocation6], 192, 192, 12
    $region45: #{multimodal_classifier.1} parent=1 // pred_fallthru
      _
    // Predicated region
    $region46: #{multimodal_classifier.1} parent=1 // pred_check
      _
    $region47: #{multimodal_classifier.1} parent=1 // pred_check_branch
      %68 = sbr.rel (0) target = $region49
    $region48: #{multimodal_classifier.1} parent=1 // pred_region
      _
    $region49: #{multimodal_classifier.1} parent=1 // pred_fallthru
      _
    // Predicated region
    $region50: #{multimodal_classifier.1} parent=1 // pred_check
      _
    $region51: #{multimodal_classifier.1} parent=1 // pred_check_branch
      %70 = sbr.rel (0) target = $region53
    $region52: #{multimodal_classifier.1} parent=1 // pred_region
      _
    $region53: #{multimodal_classifier.1} parent=1 // pred_fallthru
      _
    // Predicated region
    $region54: #{multimodal_classifier.1} parent=1 // pred_check
      _
    $region55: #{multimodal_classifier.1} parent=1 // pred_check_branch
      %72 = sbr.rel (0) target = $region57
    $region56: #{multimodal_classifier.1} parent=1 // pred_region
      _
    $region57: #{multimodal_classifier.1} parent=1 // pred_fallthru
      _
    // Predicated region
    $region58: #{multimodal_classifier.1} parent=1 // pred_check
      _
    $region59: #{multimodal_classifier.1} parent=1 // pred_check_branch
      %74 = sbr.rel (0) target = $region61
    $region60: #{multimodal_classifier.1} parent=1 // pred_region
      _
    $region61: #{multimodal_classifier.1} parent=1 // pred_fallthru
      _
    // Predicated region
    $region62: #{multimodal_classifier.1} parent=1 // pred_check
      _
    $region63: #{multimodal_classifier.1} parent=1 // pred_check_branch
      %76 = sbr.rel (0) target = $region65
    $region64: #{multimodal_classifier.1} parent=1 // pred_region
      _
    $region65: #{multimodal_classifier.1} parent=1 // pred_fallthru
      _
    // Predicated region
    $region66: #{multimodal_classifier.1} parent=1 // pred_check
      _
    $region67: #{multimodal_classifier.1} parent=1 // pred_check_branch
      %78 = sbr.rel (0) target = $region69
    $region68: #{multimodal_classifier.1} parent=1 // pred_region
      _
    $region69: #{multimodal_classifier.1} parent=1 // pred_fallthru
      _
    // Predicated region
    $region70: #{multimodal_classifier.1} parent=1 // pred_check
      _
    $region71: #{multimodal_classifier.1} parent=1 // pred_check_branch
      %80 = sbr.rel (0) target = $region73
    $region72: #{multimodal_classifier.1} parent=1 // pred_region
      %81 = dma.done [#allocation3], 6144
    $region73: #{multimodal_classifier.1} parent=1 // pred_fallthru
      _
    // Predicated region
    $region74: #{multimodal_classifier.1} parent=1 // pred_check
      _
    $region75: #{multimodal_classifier.1} parent=1 // pred_check_branch
      %83 = sbr.rel (0) target = $region77
    $region76: #{multimodal_classifier.1} parent=1 // pred_region
      %84 = dma.done [#allocation6], 6144
    $region77: #{multimodal_classifier.1} parent=1 // pred_fallthru
      _
    %v86 = vld [vmem:[%s0] sm:$0xff]
    %v87 = vld [vmem:[%s0 + $0x8] sm:$0xff]
    %v88 = vld [vmem:[%s0 + $0x10] sm:$0xff]
    %v89 = vld [vmem:[#allocation2] sm:$0xf]
    %v90 = vld [vmem:[#allocation2 + $0x4] sm:$0xf]
    %v91 = vld [vmem:[#allocation2 + $0x8] sm:$0xf]
    %v92 = vld [vmem:[#allocation2 + $0xc] sm:$0xf]
    %v93 = vld [vmem:[#allocation2 + $0x10] sm:$0xf]
    %v94 = vld [vmem:[#allocation2 + $0x14] sm:$0xf]
    %v95 = vld [vmem:[#allocation2 + $0x18] sm:$0xf]
    %v96 = vld [vmem:[#allocation2 + $0x1c] sm:$0xf]
    %v97 = vld [vmem:[#allocation2 + $0x20] sm:$0xf]
    %v98 = vld [vmem:[#allocation2 + $0x24] sm:$0xf]
    %v99 = vld [vmem:[#allocation2 + $0x28] sm:$0xf]
    %v100 = vld [vmem:[#allocation2 + $0x2c] sm:$0xf]
    %v101 = vld [vmem:[#allocation2 + $0x30] sm:$0xf]
    %v102 = vld [vmem:[#allocation2 + $0x34] sm:$0xf]
    %v103 = vld [vmem:[#allocation2 + $0x38] sm:$0xf]
    %v104 = vld [vmem:[#allocation2 + $0x3c] sm:$0xf]
    %v105 = vld [vmem:[#allocation2 + $0x40] sm:$0xf]
    %v106 = vld [vmem:[#allocation2 + $0x44] sm:$0xf]
    %v107 = vld [vmem:[#allocation2 + $0x48] sm:$0xf]
    %v108 = vld [vmem:[#allocation2 + $0x4c] sm:$0xf]
    %v109 = vld [vmem:[#allocation2 + $0x50] sm:$0xf]
    %v110 = vld [vmem:[#allocation2 + $0x54] sm:$0xf]
    %v111 = vld [vmem:[#allocation2 + $0x58] sm:$0xf]
    %v112 = vld [vmem:[#allocation2 + $0x5c] sm:$0xf]
    %v113 = vld [vmem:[#allocation2 + $0x60] sm:$0xf]
    %v114 = vld [vmem:[#allocation2 + $0x64] sm:$0xf]
    %v115 = vld [vmem:[#allocation2 + $0x68] sm:$0xf]
    %v116 = vld [vmem:[#allocation2 + $0x6c] sm:$0xf]
    %v117 = vld [vmem:[#allocation2 + $0x70] sm:$0xf]
    %v118 = vld [vmem:[#allocation2 + $0x74] sm:$0xf]
    %v119 = vld [vmem:[#allocation2 + $0x78] sm:$0xf]
    %v120 = vld [vmem:[#allocation2 + $0x7c] sm:$0xf]
    %v121 = vld [vmem:[#allocation2 + $0x80] sm:$0xf]
    %v122 = vld [vmem:[#allocation2 + $0x84] sm:$0xf]
    %v123 = vld [vmem:[#allocation2 + $0x88] sm:$0xf]
    %v124 = vld [vmem:[#allocation2 + $0x8c] sm:$0xf]
    %v125 = vld [vmem:[#allocation2 + $0x90] sm:$0xf]
    %v126 = vld [vmem:[#allocation2 + $0x94] sm:$0xf]
    %v127 = vld [vmem:[#allocation2 + $0x98] sm:$0xf]
    %v128 = vld [vmem:[#allocation2 + $0x9c] sm:$0xf]
    %v129 = vld [vmem:[#allocation2 + $0xa0] sm:$0xf]
    %v130 = vld [vmem:[#allocation2 + $0xa4] sm:$0xf]
    %v131 = vld [vmem:[#allocation2 + $0xa8] sm:$0xf]
    %v132 = vld [vmem:[#allocation2 + $0xac] sm:$0xf]
    %v133 = vld [vmem:[#allocation2 + $0xb0] sm:$0xf]
    %v134 = vld [vmem:[#allocation2 + $0xb4] sm:$0xf]
    %v135 = vld [vmem:[#allocation2 + $0xb8] sm:$0xf]
    %v136 = vld [vmem:[#allocation2 + $0xbc] sm:$0xf]
    %v137 = vld [vmem:[#allocation2 + $0xc0] sm:$0xf]
    %v138 = vld [vmem:[#allocation2 + $0xc4] sm:$0xf]
    %v139 = vld [vmem:[#allocation2 + $0xc8] sm:$0xf]
    %v140 = vld [vmem:[#allocation2 + $0xcc] sm:$0xf]
    %v141 = vld [vmem:[#allocation2 + $0xd0] sm:$0xf]
    %v142 = vld [vmem:[#allocation2 + $0xd4] sm:$0xf]
    %v143 = vld [vmem:[#allocation2 + $0xd8] sm:$0xf]
    %v144 = vld [vmem:[#allocation2 + $0xdc] sm:$0xf]
    %v145 = vld [vmem:[#allocation2 + $0xe0] sm:$0xf]
    %v146 = vld [vmem:[#allocation2 + $0xe4] sm:$0xf]
    %v147 = vld [vmem:[#allocation2 + $0xe8] sm:$0xf]
    %v148 = vld [vmem:[#allocation2 + $0xec] sm:$0xf]
    %v149 = vld [vmem:[#allocation2 + $0xf0] sm:$0xf]
    %v150 = vld [vmem:[#allocation2 + $0xf4] sm:$0xf]
    %v151 = vld [vmem:[#allocation2 + $0xf8] sm:$0xf]
    %v152 = vld [vmem:[#allocation2 + $0xfc] sm:$0xf]
    %v153 = vld [vmem:[#allocation2 + $0x100] sm:$0xf]
    %v154 = vld [vmem:[#allocation2 + $0x104] sm:$0xf]
    %v155 = vld [vmem:[#allocation2 + $0x108] sm:$0xf]
    %v156 = vld [vmem:[#allocation2 + $0x10c] sm:$0xf]
    %v157 = vld [vmem:[#allocation2 + $0x110] sm:$0xf]
    %v158 = vld [vmem:[#allocation2 + $0x114] sm:$0xf]
    %v159 = vld [vmem:[#allocation2 + $0x118] sm:$0xf]
    %v160 = vld [vmem:[#allocation2 + $0x11c] sm:$0xf]
    %v161 = vld [vmem:[#allocation2 + $0x120] sm:$0xf]
    %v162 = vld [vmem:[#allocation2 + $0x124] sm:$0xf]
    %v163 = vld [vmem:[#allocation2 + $0x128] sm:$0xf]
    %v164 = vld [vmem:[#allocation2 + $0x12c] sm:$0xf]
    %v165 = vld [vmem:[#allocation2 + $0x130] sm:$0xf]
    %v166 = vld [vmem:[#allocation2 + $0x134] sm:$0xf]
    %v167 = vld [vmem:[#allocation2 + $0x138] sm:$0xf]
    %v168 = vld [vmem:[#allocation2 + $0x13c] sm:$0xf]
    %v169 = vld [vmem:[#allocation2 + $0x140] sm:$0xf]
    %v170 = vld [vmem:[#allocation2 + $0x144] sm:$0xf]
    %v171 = vld [vmem:[#allocation2 + $0x148] sm:$0xf]
    %v172 = vld [vmem:[#allocation2 + $0x14c] sm:$0xf]
    %v173 = vld [vmem:[#allocation2 + $0x150] sm:$0xf]
    %v174 = vld [vmem:[#allocation2 + $0x154] sm:$0xf]
    %v175 = vld [vmem:[#allocation2 + $0x158] sm:$0xf]
    %v176 = vld [vmem:[#allocation2 + $0x15c] sm:$0xf]
    %v177 = vld [vmem:[#allocation2 + $0x160] sm:$0xf]
    %v178 = vld [vmem:[#allocation2 + $0x164] sm:$0xf]
    %v179 = vld [vmem:[#allocation2 + $0x168] sm:$0xf]
    %v180 = vld [vmem:[#allocation2 + $0x16c] sm:$0xf]
    %v181 = vld [vmem:[#allocation2 + $0x170] sm:$0xf]
    %v182 = vld [vmem:[#allocation2 + $0x174] sm:$0xf]
    %v183 = vld [vmem:[#allocation2 + $0x178] sm:$0xf]
    %v184 = vld [vmem:[#allocation2 + $0x17c] sm:$0xf]
    %v188 = vunpack.c.l.b16 %v86
    %v189 = vunpack.c.h.b16 %v86
    %v190 = vunpack.c.l.b16 %v87
    %v191 = vunpack.c.h.b16 %v87
    %v192 = vunpack.c.l.b16 %v88
    %v193 = vunpack.c.h.b16 %v88
    %v194 = vpack.c.b16 %v188, %v188
    %v195 = vpack.c.b16 %v189, %v189
    %v196 = vpack.c.b16 %v190, %v190
    %v197 = vpack.c.b16 %v191, %v191
    %v198 = vpack.c.b16 %v192, %v192
    %v199 = vpack.c.b16 %v193, %v193
    %v302 = vunpack.c.l.b16 %v89
    %v303 = vunpack.c.l.b16 %v90
    %v304 = vunpack.c.l.b16 %v91
    %v305 = vunpack.c.l.b16 %v92
    %v306 = vunpack.c.l.b16 %v93
    %v307 = vunpack.c.l.b16 %v94
    %v308 = vunpack.c.l.b16 %v95
    %v309 = vunpack.c.l.b16 %v96
    %v310 = vunpack.c.l.b16 %v97
    %v311 = vunpack.c.l.b16 %v98
    %v312 = vunpack.c.l.b16 %v99
    %v313 = vunpack.c.l.b16 %v100
    %v314 = vunpack.c.l.b16 %v101
    %v315 = vunpack.c.l.b16 %v102
    %v316 = vunpack.c.l.b16 %v103
    %v317 = vunpack.c.l.b16 %v104
    %v318 = vunpack.c.l.b16 %v105
    %v319 = vunpack.c.l.b16 %v106
    %v320 = vunpack.c.l.b16 %v107
    %v321 = vunpack.c.l.b16 %v108
    %v322 = vunpack.c.l.b16 %v109
    %v323 = vunpack.c.l.b16 %v110
    %v324 = vunpack.c.l.b16 %v111
    %v325 = vunpack.c.l.b16 %v112
    %v326 = vunpack.c.l.b16 %v113
    %v327 = vunpack.c.l.b16 %v114
    %v328 = vunpack.c.l.b16 %v115
    %v329 = vunpack.c.l.b16 %v116
    %v330 = vunpack.c.l.b16 %v117
    %v331 = vunpack.c.l.b16 %v118
    %v332 = vunpack.c.l.b16 %v119
    %v333 = vunpack.c.l.b16 %v120
    %v334 = vunpack.c.l.b16 %v121
    %v335 = vunpack.c.l.b16 %v122
    %v336 = vunpack.c.l.b16 %v123
    %v337 = vunpack.c.l.b16 %v124
    %v338 = vunpack.c.l.b16 %v125
    %v339 = vunpack.c.l.b16 %v126
    %v340 = vunpack.c.l.b16 %v127
    %v341 = vunpack.c.l.b16 %v128
    %v342 = vunpack.c.l.b16 %v129
    %v343 = vunpack.c.l.b16 %v130
    %v344 = vunpack.c.l.b16 %v131
    %v345 = vunpack.c.l.b16 %v132
    %v346 = vunpack.c.l.b16 %v133
    %v347 = vunpack.c.l.b16 %v134
    %v348 = vunpack.c.l.b16 %v135
    %v349 = vunpack.c.l.b16 %v136
    %v350 = vunpack.c.l.b16 %v137
    %v351 = vunpack.c.l.b16 %v138
    %v352 = vunpack.c.l.b16 %v139
    %v353 = vunpack.c.l.b16 %v140
    %v354 = vunpack.c.l.b16 %v141
    %v355 = vunpack.c.l.b16 %v142
    %v356 = vunpack.c.l.b16 %v143
    %v357 = vunpack.c.l.b16 %v144
    %v358 = vunpack.c.l.b16 %v145
    %v359 = vunpack.c.l.b16 %v146
    %v360 = vunpack.c.l.b16 %v147
    %v361 = vunpack.c.l.b16 %v148
    %v362 = vunpack.c.l.b16 %v149
    %v363 = vunpack.c.l.b16 %v150
    %v364 = vunpack.c.l.b16 %v151
    %v365 = vunpack.c.l.b16 %v152
    %v366 = vunpack.c.l.b16 %v153
    %v367 = vunpack.c.l.b16 %v154
    %v368 = vunpack.c.l.b16 %v155
    %v369 = vunpack.c.l.b16 %v156
    %v370 = vunpack.c.l.b16 %v157
    %v371 = vunpack.c.l.b16 %v158
    %v372 = vunpack.c.l.b16 %v159
    %v373 = vunpack.c.l.b16 %v160
    %v374 = vunpack.c.l.b16 %v161
    %v375 = vunpack.c.l.b16 %v162
    %v376 = vunpack.c.l.b16 %v163
    %v377 = vunpack.c.l.b16 %v164
    %v378 = vunpack.c.l.b16 %v165
    %v379 = vunpack.c.l.b16 %v166
    %v380 = vunpack.c.l.b16 %v167
    %v381 = vunpack.c.l.b16 %v168
    %v382 = vunpack.c.l.b16 %v169
    %v383 = vunpack.c.l.b16 %v170
    %v384 = vunpack.c.l.b16 %v171
    %v385 = vunpack.c.l.b16 %v172
    %v386 = vunpack.c.l.b16 %v173
    %v387 = vunpack.c.l.b16 %v174
    %v388 = vunpack.c.l.b16 %v175
    %v389 = vunpack.c.l.b16 %v176
    %v390 = vunpack.c.l.b16 %v177
    %v391 = vunpack.c.l.b16 %v178
    %v392 = vunpack.c.l.b16 %v179
    %v393 = vunpack.c.l.b16 %v180
    %v394 = vunpack.c.l.b16 %v181
    %v395 = vunpack.c.l.b16 %v182
    %v396 = vunpack.c.l.b16 %v183
    %v397 = vunpack.c.l.b16 %v184
    %v398 = vpack.c.b16 %v303, %v302
    %v399 = vpack.c.b16 %v305, %v304
    %v400 = vpack.c.b16 %v307, %v306
    %v401 = vpack.c.b16 %v309, %v308
    %v402 = vpack.c.b16 %v311, %v310
    %v403 = vpack.c.b16 %v313, %v312
    %v404 = vpack.c.b16 %v315, %v314
    %v405 = vpack.c.b16 %v317, %v316
    %v406 = vpack.c.b16 %v319, %v318
    %v407 = vpack.c.b16 %v321, %v320
    %v408 = vpack.c.b16 %v323, %v322
    %v409 = vpack.c.b16 %v325, %v324
    %v410 = vpack.c.b16 %v327, %v326
    %v411 = vpack.c.b16 %v329, %v328
    %v412 = vpack.c.b16 %v331, %v330
    %v413 = vpack.c.b16 %v333, %v332
    %v414 = vpack.c.b16 %v335, %v334
    %v415 = vpack.c.b16 %v337, %v336
    %v416 = vpack.c.b16 %v339, %v338
    %v417 = vpack.c.b16 %v341, %v340
    %v418 = vpack.c.b16 %v343, %v342
    %v419 = vpack.c.b16 %v345, %v344
    %v420 = vpack.c.b16 %v347, %v346
    %v421 = vpack.c.b16 %v349, %v348
    %v422 = vpack.c.b16 %v351, %v350
    %v423 = vpack.c.b16 %v353, %v352
    %v424 = vpack.c.b16 %v355, %v354
    %v425 = vpack.c.b16 %v357, %v356
    %v426 = vpack.c.b16 %v359, %v358
    %v427 = vpack.c.b16 %v361, %v360
    %v428 = vpack.c.b16 %v363, %v362
    %v429 = vpack.c.b16 %v365, %v364
    %v430 = vpack.c.b16 %v367, %v366
    %v431 = vpack.c.b16 %v369, %v368
    %v432 = vpack.c.b16 %v371, %v370
    %v433 = vpack.c.b16 %v373, %v372
    %v434 = vpack.c.b16 %v375, %v374
    %v435 = vpack.c.b16 %v377, %v376
    %v436 = vpack.c.b16 %v379, %v378
    %v437 = vpack.c.b16 %v381, %v380
    %v438 = vpack.c.b16 %v383, %v382
    %v439 = vpack.c.b16 %v385, %v384
    %v440 = vpack.c.b16 %v387, %v386
    %v441 = vpack.c.b16 %v389, %v388
    %v442 = vpack.c.b16 %v391, %v390
    %v443 = vpack.c.b16 %v393, %v392
    %v444 = vpack.c.b16 %v395, %v394
    %v445 = vpack.c.b16 %v397, %v396
    %494 = vmatprep.subr.bf16.mxu0 0
    %495 = vmatpush1.bf16.msra.mxu0 %v405
    %496 = vmatprep.subr.bf16.mxu0 0
    %497 = vmatpush1.bf16.msra.mxu0 %v404
    %498 = vmatprep.subr.bf16.mxu0 0
    %499 = vmatpush1.bf16.msra.mxu0 %v403
    %500 = vmatprep.subr.bf16.mxu0 0
    %501 = vmatpush1.bf16.msra.mxu0 %v402
    %502 = vmatprep.subr.bf16.mxu0 0
    %503 = vmatpush1.bf16.msra.mxu0 %v401
    %504 = vmatprep.subr.bf16.mxu0 0
    %505 = vmatpush1.bf16.msra.mxu0 %v400
    %506 = vmatprep.subr.bf16.mxu0 0
    %507 = vmatpush1.bf16.msra.mxu0 %v399
    %508 = vmatprep.subr.bf16.mxu0 0
    %509 = vmatpush1.bf16.msra.mxu0 %v398
    %510 = vmatprep.subr.bf16.mxu0 0
    %511 = vmatpush2.bf16.msra.mxu0 %v413
    %512 = vmatprep.subr.bf16.mxu0 0
    %513 = vmatpush2.bf16.msra.mxu0 %v412
    %514 = vmatprep.subr.bf16.mxu0 0
    %515 = vmatpush2.bf16.msra.mxu0 %v411
    %516 = vmatprep.subr.bf16.mxu0 0
    %517 = vmatpush2.bf16.msra.mxu0 %v410
    %518 = vmatprep.subr.bf16.mxu0 0
    %519 = vmatpush2.bf16.msra.mxu0 %v409
    %520 = vmatprep.subr.bf16.mxu0 0
    %521 = vmatpush2.bf16.msra.mxu0 %v408
    %522 = vmatprep.subr.bf16.mxu0 0
    %523 = vmatpush2.bf16.msra.mxu0 %v407
    %524 = vmatprep.subr.bf16.mxu0 0
    %525 = vmatpush2.bf16.msra.mxu0 %v406
    %526 = vmatprep.mubr.bf16.mxu0 %v195
    %527 = vmatmul.mubr.bf16.gmra.mxu0 %v194
    %v528 = vpop.f32.mrf.mxu0
    %v529 = vadd.f32 0.0, %v528
    %v530 = vpop.f32.mrf.mxu0
    %v531 = vpop.f32.mrf.mxu0
    %v532 = vpop.f32.mrf.mxu0
    %533 = vdwg.mxu0
    %534 = vmatprep.subr.bf16.mxu0 0
    %535 = vmatpush1.bf16.msra.mxu0 %v421
    %536 = vmatprep.subr.bf16.mxu0 0
    %537 = vmatpush1.bf16.msra.mxu0 %v420
    %538 = vmatprep.subr.bf16.mxu0 0
    %539 = vmatpush1.bf16.msra.mxu0 %v419
    %540 = vmatprep.subr.bf16.mxu0 0
    %541 = vmatpush1.bf16.msra.mxu0 %v418
    %542 = vmatprep.subr.bf16.mxu0 0
    %543 = vmatpush1.bf16.msra.mxu0 %v417
    %544 = vmatprep.subr.bf16.mxu0 0
    %545 = vmatpush1.bf16.msra.mxu0 %v416
    %546 = vmatprep.subr.bf16.mxu0 0
    %547 = vmatpush1.bf16.msra.mxu0 %v415
    %548 = vmatprep.subr.bf16.mxu0 0
    %549 = vmatpush1.bf16.msra.mxu0 %v414
    %550 = vmatprep.subr.bf16.mxu0 0
    %551 = vmatpush2.bf16.msra.mxu0 %v429
    %552 = vmatprep.subr.bf16.mxu0 0
    %553 = vmatpush2.bf16.msra.mxu0 %v428
    %554 = vmatprep.subr.bf16.mxu0 0
    %555 = vmatpush2.bf16.msra.mxu0 %v427
    %556 = vmatprep.subr.bf16.mxu0 0
    %557 = vmatpush2.bf16.msra.mxu0 %v426
    %558 = vmatprep.subr.bf16.mxu0 0
    %559 = vmatpush2.bf16.msra.mxu0 %v425
    %560 = vmatprep.subr.bf16.mxu0 0
    %561 = vmatpush2.bf16.msra.mxu0 %v424
    %562 = vmatprep.subr.bf16.mxu0 0
    %563 = vmatpush2.bf16.msra.mxu0 %v423
    %564 = vmatprep.subr.bf16.mxu0 0
    %565 = vmatpush2.bf16.msra.mxu0 %v422
    %566 = vmatprep.mubr.bf16.mxu0 %v197
    %567 = vmatmul.mubr.bf16.gmra.mxu0 %v196
    %v568 = vpop.f32.mrf.mxu0
    %v569 = vadd.f32 %v529, %v568
    %v570 = vpop.f32.mrf.mxu0
    %v571 = vpop.f32.mrf.mxu0
    %v572 = vpop.f32.mrf.mxu0
    %573 = vdwg.mxu0
    %574 = vmatprep.subr.bf16.mxu0 0
    %575 = vmatpush1.bf16.msra.mxu0 %v437
    %576 = vmatprep.subr.bf16.mxu0 0
    %577 = vmatpush1.bf16.msra.mxu0 %v436
    %578 = vmatprep.subr.bf16.mxu0 0
    %579 = vmatpush1.bf16.msra.mxu0 %v435
    %580 = vmatprep.subr.bf16.mxu0 0
    %581 = vmatpush1.bf16.msra.mxu0 %v434
    %582 = vmatprep.subr.bf16.mxu0 0
    %583 = vmatpush1.bf16.msra.mxu0 %v433
    %584 = vmatprep.subr.bf16.mxu0 0
    %585 = vmatpush1.bf16.msra.mxu0 %v432
    %586 = vmatprep.subr.bf16.mxu0 0
    %587 = vmatpush1.bf16.msra.mxu0 %v431
    %588 = vmatprep.subr.bf16.mxu0 0
    %589 = vmatpush1.bf16.msra.mxu0 %v430
    %590 = vmatprep.subr.bf16.mxu0 0
    %591 = vmatpush2.bf16.msra.mxu0 %v445
    %592 = vmatprep.subr.bf16.mxu0 0
    %593 = vmatpush2.bf16.msra.mxu0 %v444
    %594 = vmatprep.subr.bf16.mxu0 0
    %595 = vmatpush2.bf16.msra.mxu0 %v443
    %596 = vmatprep.subr.bf16.mxu0 0
    %597 = vmatpush2.bf16.msra.mxu0 %v442
    %598 = vmatprep.subr.bf16.mxu0 0
    %599 = vmatpush2.bf16.msra.mxu0 %v441
    %600 = vmatprep.subr.bf16.mxu0 0
    %601 = vmatpush2.bf16.msra.mxu0 %v440
    %602 = vmatprep.subr.bf16.mxu0 0
    %603 = vmatpush2.bf16.msra.mxu0 %v439
    %604 = vmatprep.subr.bf16.mxu0 0
    %605 = vmatpush2.bf16.msra.mxu0 %v438
    %606 = vmatprep.mubr.bf16.mxu0 %v199
    %607 = vmatmul.mubr.bf16.gmra.mxu0 %v198
    %v608 = vpop.f32.mrf.mxu0
    %v609 = vadd.f32 %v569, %v608
    %v610 = vpop.f32.mrf.mxu0
    %v611 = vpop.f32.mrf.mxu0
    %v612 = vpop.f32.mrf.mxu0
    %613 = vdwg.mxu0
    %v614 = vld [vmem:[%s2] sm:$0xff]
    %v615 = vld [vmem:[%s2 + $0x8] sm:$0x3]
    %v616 = vld [vmem:[%s3] sm:$0xff]
    %v617 = vld [vmem:[%s3 + $0x8] sm:$0x3]
    %vm618 = vcmask 64512
    %v620 = vsel %vm618, %v614, 0
    %v623 = vsel %vm618, %v615, 0
    %625 = vmatprep.subr.mxu0 0.0
    %626 = vmatpush1.msra.mxu0 0.0
    %627 = vmatprep.subr.mxu0 0.0
    %628 = vmatpush1.msra.mxu0 0.0
    %629 = vmatprep.subr.mxu0 0.0
    %630 = vmatpush1.msra.mxu0 0.0
    %631 = vmatprep.subr.mxu0 0.0
    %632 = vmatpush1.msra.mxu0 0.0
    %633 = vmatprep.subr.mxu0 0.0
    %634 = vmatpush1.msra.mxu0 0.0
    %635 = vmatprep.subr.mxu0 0.0
    %636 = vmatpush1.msra.mxu0 0.0
    %637 = vmatprep.subr.mxu0 0.0
    %638 = vmatpush1.msra.mxu0 0.0
    %639 = vmatprep.subr.mxu0 0.0
    %640 = vmatpush1.msra.mxu0 0.0
    %641 = vmatprep.subr.mxu0 0.0
    %642 = vmatpush1.msra.mxu0 0.0
    %643 = vmatprep.subr.mxu0 0.0
    %644 = vmatpush1.msra.mxu0 0.0
    %645 = vmatprep.subr.mxu0 0.0
    %646 = vmatpush1.msra.mxu0 0.0
    %647 = vmatprep.subr.mxu0 0.0
    %648 = vmatpush1.msra.mxu0 0.0
    %649 = vmatprep.subr.mxu0 0.0
    %650 = vmatpush1.msra.mxu0 0.0
    %651 = vmatprep.subr.mxu0 0.0
    %652 = vmatpush1.msra.mxu0 0.0
    %653 = vmatprep.subr.mxu0 0.0
    %654 = vmatpush1.msra.mxu0 0.0
    %655 = vmatprep.subr.mxu0 0.0
    %656 = vmatpush1.msra.mxu0 %v609
    %657 = vmatprep.subr.mxu0 0.0
    %658 = vmatpush2.msra.mxu0 0.0
    %659 = vmatprep.subr.mxu0 0.0
    %660 = vmatpush2.msra.mxu0 0.0
    %661 = vmatprep.subr.mxu0 0.0
    %662 = vmatpush2.msra.mxu0 0.0
    %663 = vmatprep.subr.mxu0 0.0
    %664 = vmatpush2.msra.mxu0 0.0
    %665 = vmatprep.subr.mxu0 0.0
    %666 = vmatpush2.msra.mxu0 0.0
    %667 = vmatprep.subr.mxu0 0.0
    %668 = vmatpush2.msra.mxu0 0.0
    %669 = vmatprep.subr.mxu0 0.0
    %670 = vmatpush2.msra.mxu0 0.0
    %671 = vmatprep.subr.mxu0 0.0
    %672 = vmatpush2.msra.mxu0 0.0
    %673 = vmatprep.subr.mxu0 0.0
    %674 = vmatpush2.msra.mxu0 0.0
    %675 = vmatprep.subr.mxu0 0.0
    %676 = vmatpush2.msra.mxu0 0.0
    %677 = vmatprep.subr.mxu0 0.0
    %678 = vmatpush2.msra.mxu0 0.0
    %679 = vmatprep.subr.mxu0 0.0
    %680 = vmatpush2.msra.mxu0 0.0
    %681 = vmatprep.subr.mxu0 0.0
    %682 = vmatpush2.msra.mxu0 0.0
    %683 = vmatprep.subr.mxu0 0.0
    %684 = vmatpush2.msra.mxu0 0.0
    %685 = vmatprep.subr.mxu0 0.0
    %686 = vmatpush2.msra.mxu0 0.0
    %687 = vmatprep.subr.mxu0 0.0
    %688 = vmatpush2.msra.mxu0 0.0
    %689 = vmatprep.mubr.f32.mxu0 0.0
    %690 = vmatmul.mubr.f32.gmra.mxu0 %v620
    %v691 = vpop.f32.mrf.mxu0
    %v692 = vadd.f32 %v616, %v691
    %v693 = vpop.f32.mrf.mxu0
    %694 = vmatprep.mubr.f32.mxu0 0.0
    %695 = vmatmul.mubr.f32.gmra.mxu0 %v623
    %v696 = vpop.f32.mrf.mxu0
    %v697 = vadd.f32 %v617, %v696
    %v698 = vpop.f32.mrf.mxu0
    %699 = vdwg.mxu0
    %v700 = vld [vmem:[%s4] sm:$0xf]
    %v701 = vld [vmem:[%s4 + $0x4] sm:$0x1]
    %v702 = vld [vmem:[%s8] sm:$0xff]
    %v703 = vld [vmem:[%s8 + $0x8] sm:$0x1]
    %704 = vadd.xlane.f32.xlu0 %v692
    %v705 = vpop.xlane.xlu0 %704
    %vm706 = vcmask 1041408
    %v707 = vsel %vm706, %v697, 0.0
    %708 = vadd.xlane.f32.xlu0 %v707
    %v709 = vpop.xlane.xlu0 %708
    %v710 = vrcp.pop 128.0
    %v711 = vmul.f32 %v705, %v710
    %v712 = vmul.f32 %v709, %v710
    %v713 = vsub.f32 %v692, %v711
    %v714 = vsub.f32 %v697, %v712
    %v715 = vmul.f32 %v713, %v713
    %v716 = vmul.f32 %v714, %v714
    %717 = vadd.xlane.f32.xlu0 %v715
    %v718 = vpop.xlane.xlu0 %717
    %v719 = vsel %vm706, %v716, 0.0
    %720 = vadd.xlane.f32.xlu0 %v719
    %v721 = vpop.xlane.xlu0 %720
    %v722 = vmul.f32 %v718, %v710
    %v723 = vmul.f32 %v721, %v710
    %v724 = vadd.f32 %v722, 1e-12
    %v725 = vadd.f32 %v723, 1e-12
    %v726 = vrsqrt.pop %v724
    %v727 = vrsqrt.pop %v725
    %v728 = vmul.f32 %v713, %v726
    %v729 = vmul.f32 %v714, %v727
    %v730 = vlaneseq
    %v731 = vshrl.u32 %v730, 7
    %v732 = vsub.s32 0, %v731
    %v733 = vrot.slane %v702, %v732
    %v734 = vmul.f32 %v728, %v733
    %v735 = vmul.f32 %v729, %v733
    %v736 = vlaneseq
    %v737 = vshrl.u32 %v736, 7
    %v738 = vsub.s32 1, %v737
    %v739 = vrot.slane %v702, %v738
    %v740 = vadd.f32 %v734, %v739
    %v741 = vadd.f32 %v735, %v739
    %v742 = vpack.c.bf16 %v741, %v740
    %v743 = vld [vmem:[#allocation5] sm:$0xff]
    %v744 = vld [vmem:[#allocation5 + $0x8] sm:$0xf]
    %v745 = vld [vmem:[#allocation5 + $0xc] sm:$0xff]
    %v746 = vld [vmem:[#allocation5 + $0x14] sm:$0xf]
    %v747 = vld [vmem:[#allocation5 + $0x18] sm:$0xff]
    %v748 = vld [vmem:[#allocation5 + $0x20] sm:$0xf]
    %v749 = vld [vmem:[#allocation5 + $0x24] sm:$0xff]
    %v750 = vld [vmem:[#allocation5 + $0x2c] sm:$0xf]
    %v751 = vld [vmem:[#allocation5 + $0x30] sm:$0xff]
    %v752 = vld [vmem:[#allocation5 + $0x38] sm:$0xf]
    %v753 = vld [vmem:[#allocation5 + $0x3c] sm:$0xff]
    %v754 = vld [vmem:[#allocation5 + $0x44] sm:$0xf]
    %v755 = vld [vmem:[#allocation5 + $0x48] sm:$0xff]
    %v756 = vld [vmem:[#allocation5 + $0x50] sm:$0xf]
    %v757 = vld [vmem:[#allocation5 + $0x54] sm:$0xff]
    %v758 = vld [vmem:[#allocation5 + $0x5c] sm:$0xf]
    %v759 = vld [vmem:[#allocation5 + $0x60] sm:$0xff]
    %v760 = vld [vmem:[#allocation5 + $0x68] sm:$0xf]
    %v761 = vld [vmem:[#allocation5 + $0x6c] sm:$0xff]
    %v762 = vld [vmem:[#allocation5 + $0x74] sm:$0xf]
    %v763 = vld [vmem:[#allocation5 + $0x78] sm:$0xff]
    %v764 = vld [vmem:[#allocation5 + $0x80] sm:$0xf]
    %v765 = vld [vmem:[#allocation5 + $0x84] sm:$0xff]
    %v766 = vld [vmem:[#allocation5 + $0x8c] sm:$0xf]
    %v767 = vld [vmem:[#allocation5 + $0x90] sm:$0xff]
    %v768 = vld [vmem:[#allocation5 + $0x98] sm:$0xf]
    %v769 = vld [vmem:[#allocation5 + $0x9c] sm:$0xff]
    %v770 = vld [vmem:[#allocation5 + $0xa4] sm:$0xf]
    %v771 = vld [vmem:[#allocation5 + $0xa8] sm:$0xff]
    %v772 = vld [vmem:[#allocation5 + $0xb0] sm:$0xf]
    %v773 = vld [vmem:[#allocation5 + $0xb4] sm:$0xff]
    %v774 = vld [vmem:[#allocation5 + $0xbc] sm:$0xf]
    %v807 = vunpack.c.l.b16 %v743
    %v808 = vunpack.c.h.b16 %v743
    %v809 = vunpack.c.l.b16 %v744
    %v810 = vunpack.c.l.b16 %v745
    %v811 = vunpack.c.h.b16 %v745
    %v812 = vunpack.c.l.b16 %v746
    %v813 = vunpack.c.l.b16 %v747
    %v814 = vunpack.c.h.b16 %v747
    %v815 = vunpack.c.l.b16 %v748
    %v816 = vunpack.c.l.b16 %v749
    %v817 = vunpack.c.h.b16 %v749
    %v818 = vunpack.c.l.b16 %v750
    %v819 = vunpack.c.l.b16 %v751
    %v820 = vunpack.c.h.b16 %v751
    %v821 = vunpack.c.l.b16 %v752
    %v822 = vunpack.c.l.b16 %v753
    %v823 = vunpack.c.h.b16 %v753
    %v824 = vunpack.c.l.b16 %v754
    %v825 = vunpack.c.l.b16 %v755
    %v826 = vunpack.c.h.b16 %v755
    %v827 = vunpack.c.l.b16 %v756
    %v828 = vunpack.c.l.b16 %v757
    %v829 = vunpack.c.h.b16 %v757
    %v830 = vunpack.c.l.b16 %v758
    %v831 = vunpack.c.l.b16 %v759
    %v832 = vunpack.c.h.b16 %v759
    %v833 = vunpack.c.l.b16 %v760
    %v834 = vunpack.c.l.b16 %v761
    %v835 = vunpack.c.h.b16 %v761
    %v836 = vunpack.c.l.b16 %v762
    %v837 = vunpack.c.l.b16 %v763
    %v838 = vunpack.c.h.b16 %v763
    %v839 = vunpack.c.l.b16 %v764
    %v840 = vunpack.c.l.b16 %v765
    %v841 = vunpack.c.h.b16 %v765
    %v842 = vunpack.c.l.b16 %v766
    %v843 = vunpack.c.l.b16 %v767
    %v844 = vunpack.c.h.b16 %v767
    %v845 = vunpack.c.l.b16 %v768
    %v846 = vunpack.c.l.b16 %v769
    %v847 = vunpack.c.h.b16 %v769
    %v848 = vunpack.c.l.b16 %v770
    %v849 = vunpack.c.l.b16 %v771
    %v850 = vunpack.c.h.b16 %v771
    %v851 = vunpack.c.l.b16 %v772
    %v852 = vunpack.c.l.b16 %v773
    %v853 = vunpack.c.h.b16 %v773
    %v854 = vunpack.c.l.b16 %v774
    %v855 = vpack.c.b16 %v810, %v807
    %v856 = vpack.c.b16 %v811, %v808
    %v857 = vpack.c.b16 %v812, %v809
    %v858 = vpack.c.b16 %v816, %v813
    %v859 = vpack.c.b16 %v817, %v814
    %v860 = vpack.c.b16 %v818, %v815
    %v861 = vpack.c.b16 %v822, %v819
    %v862 = vpack.c.b16 %v823, %v820
    %v863 = vpack.c.b16 %v824, %v821
    %v864 = vpack.c.b16 %v828, %v825
    %v865 = vpack.c.b16 %v829, %v826
    %v866 = vpack.c.b16 %v830, %v827
    %v867 = vpack.c.b16 %v834, %v831
    %v868 = vpack.c.b16 %v835, %v832
    %v869 = vpack.c.b16 %v836, %v833
    %v870 = vpack.c.b16 %v840, %v837
    %v871 = vpack.c.b16 %v841, %v838
    %v872 = vpack.c.b16 %v842, %v839
    %v873 = vpack.c.b16 %v846, %v843
    %v874 = vpack.c.b16 %v847, %v844
    %v875 = vpack.c.b16 %v848, %v845
    %v876 = vpack.c.b16 %v852, %v849
    %v877 = vpack.c.b16 %v853, %v850
    %v878 = vpack.c.b16 %v854, %v851
    %903 = vmatprep.subr.bf16.mxu0 %v877
    %904 = vmatpush1.bf16.msra.mxu0 %v876
    %905 = vmatprep.subr.bf16.mxu0 %v874
    %906 = vmatpush1.bf16.msra.mxu0 %v873
    %907 = vmatprep.subr.bf16.mxu0 %v871
    %908 = vmatpush1.bf16.msra.mxu0 %v870
    %909 = vmatprep.subr.bf16.mxu0 %v868
    %910 = vmatpush1.bf16.msra.mxu0 %v867
    %911 = vmatprep.subr.bf16.mxu0 %v865
    %912 = vmatpush1.bf16.msra.mxu0 %v864
    %913 = vmatprep.subr.bf16.mxu0 %v862
    %914 = vmatpush1.bf16.msra.mxu0 %v861
    %915 = vmatprep.subr.bf16.mxu0 %v859
    %916 = vmatpush1.bf16.msra.mxu0 %v858
    %917 = vmatprep.subr.bf16.mxu0 %v856
    %918 = vmatpush1.bf16.msra.mxu0 %v855
    %919 = vmatprep.subr.bf16.mxu0 0
    %920 = vmatpush2.bf16.msra.mxu0 0
    %921 = vmatprep.subr.bf16.mxu0 0
    %922 = vmatpush2.bf16.msra.mxu0 0
    %923 = vmatprep.subr.bf16.mxu0 0
    %924 = vmatpush2.bf16.msra.mxu0 0
    %925 = vmatprep.subr.bf16.mxu0 0
    %926 = vmatpush2.bf16.msra.mxu0 0
    %927 = vmatprep.subr.bf16.mxu0 0
    %928 = vmatpush2.bf16.msra.mxu0 0
    %929 = vmatprep.subr.bf16.mxu0 0
    %930 = vmatpush2.bf16.msra.mxu0 0
    %931 = vmatprep.subr.bf16.mxu0 0
    %932 = vmatpush2.bf16.msra.mxu0 0
    %933 = vmatprep.subr.bf16.mxu0 0
    %934 = vmatpush2.bf16.msra.mxu0 0
    %935 = vmatprep.mubr.bf16.mxu0 0
    %936 = vmatmul.mubr.bf16.gmra.mxu0 %v742
    %v937 = vpop.f32.mrf.mxu0
    %v938 = vadd.f32 0.0, %v937
    %v939 = vpop.f32.mrf.mxu0
    %v940 = vadd.f32 0.0, %v939
    %v941 = vpop.f32.mrf.mxu0
    %v942 = vadd.f32 0.0, %v941
    %v943 = vpop.f32.mrf.mxu0
    %v944 = vadd.f32 0.0, %v943
    %945 = vdwg.mxu0
    %946 = vmatprep.subr.bf16.mxu0 0
    %947 = vmatpush1.bf16.msra.mxu0 %v878
    %948 = vmatprep.subr.bf16.mxu0 0
    %949 = vmatpush1.bf16.msra.mxu0 %v875
    %950 = vmatprep.subr.bf16.mxu0 0
    %951 = vmatpush1.bf16.msra.mxu0 %v872
    %952 = vmatprep.subr.bf16.mxu0 0
    %953 = vmatpush1.bf16.msra.mxu0 %v869
    %954 = vmatprep.subr.bf16.mxu0 0
    %955 = vmatpush1.bf16.msra.mxu0 %v866
    %956 = vmatprep.subr.bf16.mxu0 0
    %957 = vmatpush1.bf16.msra.mxu0 %v863
    %958 = vmatprep.subr.bf16.mxu0 0
    %959 = vmatpush1.bf16.msra.mxu0 %v860
    %960 = vmatprep.subr.bf16.mxu0 0
    %961 = vmatpush1.bf16.msra.mxu0 %v857
    %962 = vmatprep.subr.bf16.mxu0 0
    %963 = vmatpush2.bf16.msra.mxu0 0
    %964 = vmatprep.subr.bf16.mxu0 0
    %965 = vmatpush2.bf16.msra.mxu0 0
    %966 = vmatprep.subr.bf16.mxu0 0
    %967 = vmatpush2.bf16.msra.mxu0 0
    %968 = vmatprep.subr.bf16.mxu0 0
    %969 = vmatpush2.bf16.msra.mxu0 0
    %970 = vmatprep.subr.bf16.mxu0 0
    %971 = vmatpush2.bf16.msra.mxu0 0
    %972 = vmatprep.subr.bf16.mxu0 0
    %973 = vmatpush2.bf16.msra.mxu0 0
    %974 = vmatprep.subr.bf16.mxu0 0
    %975 = vmatpush2.bf16.msra.mxu0 0
    %976 = vmatprep.subr.bf16.mxu0 0
    %977 = vmatpush2.bf16.msra.mxu0 0
    %978 = vmatprep.mubr.bf16.mxu0 0
    %979 = vmatmul.mubr.bf16.gmra.mxu0 %v742
    %v980 = vpop.f32.mrf.mxu0
    %v981 = vadd.f32 0.0, %v980
    %v982 = vpop.f32.mrf.mxu0
    %v983 = vpop.f32.mrf.mxu0
    %v984 = vadd.f32 0.0, %v983
    %v985 = vpop.f32.mrf.mxu0
    %986 = vdwg.mxu0
    %v987 = vld [vmem:[%s11] sm:$0xf]
    %v988 = vld [vmem:[%s11 + $0x4] sm:$0xf]
    %v989 = vld [vmem:[%s11 + $0x8] sm:$0xf]
    %v990 = vld [vmem:[%s11 + $0xc] sm:$0xf]
    %v991 = vld [vmem:[%s11 + $0x10] sm:$0xf]
    %v992 = vld [vmem:[%s11 + $0x14] sm:$0xf]
    %v993 = vld [vmem:[%s11 + $0x18] sm:$0xf]
    %v994 = vld [vmem:[%s11 + $0x1c] sm:$0xf]
    %v995 = vld [vmem:[%s11 + $0x20] sm:$0xf]
    %v996 = vld [vmem:[%s11 + $0x24] sm:$0xf]
    %v997 = vld [vmem:[%s11 + $0x28] sm:$0xf]
    %v998 = vld [vmem:[%s11 + $0x2c] sm:$0xf]
    %v999 = vld [vmem:[%s11 + $0x30] sm:$0xf]
    %v1000 = vld [vmem:[%s11 + $0x34] sm:$0xf]
    %v1001 = vld [vmem:[%s11 + $0x38] sm:$0xf]
    %v1002 = vld [vmem:[%s11 + $0x3c] sm:$0xf]
    %v1003 = vlaneseq
    %v1004 = vshrl.u32 %v1003, 7
    %v1005 = vsub.s32 6, %v1004
    %v1006 = vrot.slane %v702, %v1005
    %v1007 = vadd.f32 %v938, %v1006
    %v1008 = vadd.f32 %v942, %v1006
    %v1009 = vpack.c.bf16 %v1008, %v1007
    %v1010 = vlaneseq
    %v1011 = vshrl.u32 %v1010, 7
    %v1012 = vsub.s32 7, %v1011
    %v1013 = vrot.slane %v702, %v1012
    %v1014 = vadd.f32 %v940, %v1013
    %v1015 = vadd.f32 %v944, %v1013
    %v1016 = vpack.c.bf16 %v1015, %v1014
    %v1017 = vlaneseq
    %v1018 = vshrl.u32 %v1017, 7
    %v1019 = vsub.s32 0, %v1018
    %v1020 = vrot.slane %v703, %v1019
    %v1021 = vadd.f32 %v981, %v1020
    %v1022 = vadd.f32 %v984, %v1020
    %v1023 = vpack.c.bf16 %v1022, %v1021
    %v1024 = vunpack.c.l.bf16 %v700
    %v1025 = vunpack.c.l.bf16 %v701
    %vm1026 = vcmask 261120
    %v1028 = vsel %vm1026, %v1009, 0
    %v1031 = vsel %vm1026, %v1016, 0
    %1033 = vmatprep.subr.bf16.mxu0 0
    %1034 = vmatpush1.bf16.xpose.msra.mxu0 0
    %1035 = vmatprep.subr.bf16.mxu0 0
    %1036 = vmatpush1.bf16.xpose.msra.mxu0 0
    %1037 = vmatprep.subr.bf16.mxu0 0
    %1038 = vmatpush1.bf16.xpose.msra.mxu0 0
    %1039 = vmatprep.subr.bf16.mxu0 0
    %1040 = vmatpush1.bf16.xpose.msra.mxu0 0
    %1041 = vmatprep.subr.bf16.mxu0 0
    %1042 = vmatpush1.bf16.xpose.msra.mxu0 0
    %1043 = vmatprep.subr.bf16.mxu0 0
    %1044 = vmatpush1.bf16.xpose.msra.mxu0 0
    %1045 = vmatprep.subr.bf16.mxu0 0
    %1046 = vmatpush1.bf16.xpose.msra.mxu0 0
    %1047 = vmatprep.subr.bf16.mxu0 0
    %1048 = vmatpush1.bf16.xpose.msra.mxu0 %v1031
    %1049 = vmatprep.subr.bf16.mxu0 0
    %1050 = vmatpush2.bf16.xpose.msra.mxu0 0
    %1051 = vmatprep.subr.bf16.mxu0 0
    %1052 = vmatpush2.bf16.xpose.msra.mxu0 0
    %1053 = vmatprep.subr.bf16.mxu0 0
    %1054 = vmatpush2.bf16.xpose.msra.mxu0 0
    %1055 = vmatprep.subr.bf16.mxu0 0
    %1056 = vmatpush2.bf16.xpose.msra.mxu0 0
    %1057 = vmatprep.subr.bf16.mxu0 0
    %1058 = vmatpush2.bf16.xpose.msra.mxu0 0
    %1059 = vmatprep.subr.bf16.mxu0 0
    %1060 = vmatpush2.bf16.xpose.msra.mxu0 0
    %1061 = vmatprep.subr.bf16.mxu0 0
    %1062 = vmatpush2.bf16.xpose.msra.mxu0 0
    %1063 = vmatprep.subr.bf16.mxu0 0
    %1064 = vmatpush2.bf16.xpose.msra.mxu0 0
    %1065 = vmatprep.mubr.bf16.mxu0 0
    %1066 = vmatmul.mubr.bf16.gmra.mxu0 %v1028
    %v1067 = vpop.f32.mrf.mxu0
    %v1068 = vadd.f32 %v1024, %v1067
    %v1069 = vpop.f32.mrf.mxu0
    %v1070 = vpop.f32.mrf.mxu0
    %v1071 = vadd.f32 %v1025, %v1070
    %v1072 = vpop.f32.mrf.mxu0
    %1073 = vdwg.mxu0
    %vm1074 = vcmask 80896
    %v1075 = vsel %vm1074, %v1068, -inf
    %1076 = vmax.xlane.f32.xlu0 %v1075
    %v1077 = vpop.xlane.xlu0 %1076
    %vm1078 = vcmask 74752
    %v1079 = vsel %vm1078, %v1071, -inf
    %1080 = vmax.xlane.f32.xlu0 %v1079
    %v1081 = vpop.xlane.xlu0 %1080
    %v1082 = vsub.f32 %v1068, %v1077
    %v1083 = vsub.f32 %v1071, %v1081
    %v1084 = vmul.f32 %v1082, 1.442695
    %v1085 = vpow.pop %v1084
    %v1086 = vmul.f32 %v1083, 1.442695
    %v1087 = vpow.pop %v1086
    %v1088 = vsel %vm1074, %v1085, 0.0
    %1089 = vadd.xlane.f32.xlu0 %v1088
    %v1090 = vpop.xlane.xlu0 %1089
    %v1091 = vsel %vm1078, %v1087, 0.0
    %1092 = vadd.xlane.f32.xlu0 %v1091
    %v1093 = vpop.xlane.xlu0 %1092
    %v1094 = vrcp.pop %v1090
    %v1095 = vrcp.pop %v1093
    %v1096 = vmul.f32 %v1085, %v1094
    %v1097 = vmul.f32 %v1087, %v1095
    %v1098 = vpack.c.bf16 %v1097, %v1096
    %v1100 = vsel %vm1074, %v1098, 0
    %vm1102 = vcmask 1044480
    %v1104 = vsel %vm1102, %v1023, 0
    %1106 = vmatprep.subr.bf16.mxu0 0
    %1107 = vmatpush1.bf16.msra.mxu0 0
    %1108 = vmatprep.subr.bf16.mxu0 0
    %1109 = vmatpush1.bf16.msra.mxu0 0
    %1110 = vmatprep.subr.bf16.mxu0 0
    %1111 = vmatpush1.bf16.msra.mxu0 0
    %1112 = vmatprep.subr.bf16.mxu0 0
    %1113 = vmatpush1.bf16.msra.mxu0 0
    %1114 = vmatprep.subr.bf16.mxu0 0
    %1115 = vmatpush1.bf16.msra.mxu0 0
    %1116 = vmatprep.subr.bf16.mxu0 0
    %1117 = vmatpush1.bf16.msra.mxu0 0
    %1118 = vmatprep.subr.bf16.mxu0 0
    %1119 = vmatpush1.bf16.msra.mxu0 0
    %1120 = vmatprep.subr.bf16.mxu0 0
    %1121 = vmatpush1.bf16.msra.mxu0 %v1104
    %1122 = vmatprep.subr.bf16.mxu0 0
    %1123 = vmatpush2.bf16.msra.mxu0 0
    %1124 = vmatprep.subr.bf16.mxu0 0
    %1125 = vmatpush2.bf16.msra.mxu0 0
    %1126 = vmatprep.subr.bf16.mxu0 0
    %1127 = vmatpush2.bf16.msra.mxu0 0
    %1128 = vmatprep.subr.bf16.mxu0 0
    %1129 = vmatpush2.bf16.msra.mxu0 0
    %1130 = vmatprep.subr.bf16.mxu0 0
    %1131 = vmatpush2.bf16.msra.mxu0 0
    %1132 = vmatprep.subr.bf16.mxu0 0
    %1133 = vmatpush2.bf16.msra.mxu0 0
    %1134 = vmatprep.subr.bf16.mxu0 0
    %1135 = vmatpush2.bf16.msra.mxu0 0
    %1136 = vmatprep.subr.bf16.mxu0 0
    %1137 = vmatpush2.bf16.msra.mxu0 0
    %1138 = vmatprep.mubr.bf16.mxu0 0
    %1139 = vmatmul.mubr.bf16.gmra.mxu0 %v1100
    %v1140 = vpop.f32.mrf.mxu0
    %v1141 = vadd.f32 0.0, %v1140
    %v1142 = vpop.f32.mrf.mxu0
    %v1143 = vpop.f32.mrf.mxu0
    %v1144 = vadd.f32 0.0, %v1143
    %v1145 = vpop.f32.mrf.mxu0
    %1146 = vdwg.mxu0
    %v1147 = vpack.c.bf16 %v1144, %v1141
    %1149 = vrot.lane.b32.xlu0 %v1009, 96
    %v1150 = vpop.permute.xlu0 %1149
    %1152 = vrot.lane.b32.xlu0 %v1016, 96
    %v1153 = vpop.permute.xlu0 %1152
    %v1155 = vsel %vm1026, %v1150, 0
    %v1158 = vsel %vm1026, %v1153, 0
    %1160 = vmatprep.subr.bf16.mxu0 0
    %1161 = vmatpush1.bf16.xpose.msra.mxu0 0
    %1162 = vmatprep.subr.bf16.mxu0 0
    %1163 = vmatpush1.bf16.xpose.msra.mxu0 0
    %1164 = vmatprep.subr.bf16.mxu0 0
    %1165 = vmatpush1.bf16.xpose.msra.mxu0 0
    %1166 = vmatprep.subr.bf16.mxu0 0
    %1167 = vmatpush1.bf16.xpose.msra.mxu0 0
    %1168 = vmatprep.subr.bf16.mxu0 0
    %1169 = vmatpush1.bf16.xpose.msra.mxu0 0
    %1170 = vmatprep.subr.bf16.mxu0 0
    %1171 = vmatpush1.bf16.xpose.msra.mxu0 0
    %1172 = vmatprep.subr.bf16.mxu0 0
    %1173 = vmatpush1.bf16.xpose.msra.mxu0 0
    %1174 = vmatprep.subr.bf16.mxu0 0
    %1175 = vmatpush1.bf16.xpose.msra.mxu0 %v1158
    %1176 = vmatprep.subr.bf16.mxu0 0
    %1177 = vmatpush2.bf16.xpose.msra.mxu0 0
    %1178 = vmatprep.subr.bf16.mxu0 0
    %1179 = vmatpush2.bf16.xpose.msra.mxu0 0
    %1180 = vmatprep.subr.bf16.mxu0 0
    %1181 = vmatpush2.bf16.xpose.msra.mxu0 0
    %1182 = vmatprep.subr.bf16.mxu0 0
    %1183 = vmatpush2.bf16.xpose.msra.mxu0 0
    %1184 = vmatprep.subr.bf16.mxu0 0
    %1185 = vmatpush2.bf16.xpose.msra.mxu0 0
    %1186 = vmatprep.subr.bf16.mxu0 0
    %1187 = vmatpush2.bf16.xpose.msra.mxu0 0
    %1188 = vmatprep.subr.bf16.mxu0 0
    %1189 = vmatpush2.bf16.xpose.msra.mxu0 0
    %1190 = vmatprep.subr.bf16.mxu0 0
    %1191 = vmatpush2.bf16.xpose.msra.mxu0 0
    %1192 = vmatprep.mubr.bf16.mxu0 0
    %1193 = vmatmul.mubr.bf16.gmra.mxu0 %v1155
    %v1194 = vpop.f32.mrf.mxu0
    %v1195 = vadd.f32 %v1024, %v1194
    %v1196 = vpop.f32.mrf.mxu0
    %v1197 = vpop.f32.mrf.mxu0
    %v1198 = vadd.f32 %v1025, %v1197
    %v1199 = vpop.f32.mrf.mxu0
    %1200 = vdwg.mxu0
    %v1201 = vsel %vm1074, %v1195, -inf
    %1202 = vmax.xlane.f32.xlu0 %v1201
    %v1203 = vpop.xlane.xlu0 %1202
    %v1204 = vsel %vm1078, %v1198, -inf
    %1205 = vmax.xlane.f32.xlu0 %v1204
    %v1206 = vpop.xlane.xlu0 %1205
    %v1207 = vsub.f32 %v1195, %v1203
    %v1208 = vsub.f32 %v1198, %v1206
    %v1209 = vmul.f32 %v1207, 1.442695
    %v1210 = vpow.pop %v1209
    %v1211 = vmul.f32 %v1208, 1.442695
    %v1212 = vpow.pop %v1211
    %v1213 = vsel %vm1074, %v1210, 0.0
    %1214 = vadd.xlane.f32.xlu0 %v1213
    %v1215 = vpop.xlane.xlu0 %1214
    %v1216 = vsel %vm1078, %v1212, 0.0
    %1217 = vadd.xlane.f32.xlu0 %v1216
    %v1218 = vpop.xlane.xlu0 %1217
    %v1219 = vrcp.pop %v1215
    %v1220 = vrcp.pop %v1218
    %v1221 = vmul.f32 %v1210, %v1219
    %v1222 = vmul.f32 %v1212, %v1220
    %v1223 = vpack.c.bf16 %v1222, %v1221
    %1225 = vrot.lane.b32.xlu0 %v1023, 96
    %v1226 = vpop.permute.xlu0 %1225
    %v1228 = vsel %vm1074, %v1223, 0
    %v1231 = vsel %vm1102, %v1226, 0
    %1233 = vmatprep.subr.bf16.mxu0 0
    %1234 = vmatpush1.bf16.msra.mxu0 0
    %1235 = vmatprep.subr.bf16.mxu0 0
    %1236 = vmatpush1.bf16.msra.mxu0 0
    %1237 = vmatprep.subr.bf16.mxu0 0
    %1238 = vmatpush1.bf16.msra.mxu0 0
    %1239 = vmatprep.subr.bf16.mxu0 0
    %1240 = vmatpush1.bf16.msra.mxu0 0
    %1241 = vmatprep.subr.bf16.mxu0 0
    %1242 = vmatpush1.bf16.msra.mxu0 0
    %1243 = vmatprep.subr.bf16.mxu0 0
    %1244 = vmatpush1.bf16.msra.mxu0 0
    %1245 = vmatprep.subr.bf16.mxu0 0
    %1246 = vmatpush1.bf16.msra.mxu0 0
    %1247 = vmatprep.subr.bf16.mxu0 0
    %1248 = vmatpush1.bf16.msra.mxu0 %v1231
    %1249 = vmatprep.subr.bf16.mxu0 0
    %1250 = vmatpush2.bf16.msra.mxu0 0
    %1251 = vmatprep.subr.bf16.mxu0 0
    %1252 = vmatpush2.bf16.msra.mxu0 0
    %1253 = vmatprep.subr.bf16.mxu0 0
    %1254 = vmatpush2.bf16.msra.mxu0 0
    %1255 = vmatprep.subr.bf16.mxu0 0
    %1256 = vmatpush2.bf16.msra.mxu0 0
    %1257 = vmatprep.subr.bf16.mxu0 0
    %1258 = vmatpush2.bf16.msra.mxu0 0
    %1259 = vmatprep.subr.bf16.mxu0 0
    %1260 = vmatpush2.bf16.msra.mxu0 0
    %1261 = vmatprep.subr.bf16.mxu0 0
    %1262 = vmatpush2.bf16.msra.mxu0 0
    %1263 = vmatprep.subr.bf16.mxu0 0
    %1264 = vmatpush2.bf16.msra.mxu0 0
    %1265 = vmatprep.mubr.bf16.mxu0 0
    %1266 = vmatmul.mubr.bf16.gmra.mxu0 %v1228
    %v1267 = vpop.f32.mrf.mxu0
    %v1268 = vadd.f32 0.0, %v1267
    %v1269 = vpop.f32.mrf.mxu0
    %v1270 = vpop.f32.mrf.mxu0
    %v1271 = vadd.f32 0.0, %v1270
    %v1272 = vpop.f32.mrf.mxu0
    %1273 = vdwg.mxu0
    %v1274 = vpack.c.bf16 %v1271, %v1268
    %v1279 = vunpack.c.l.b16 %v991
    %v1280 = vunpack.c.l.b16 %v992
    %v1281 = vunpack.c.l.b16 %v993
    %v1282 = vunpack.c.l.b16 %v994
    %v1283 = vpack.c.b16 %v1280, %v1279
    %v1284 = vpack.c.b16 %v1282, %v1281
    %v1288 = vsel %vm1026, %v1274, 0
    %1290 = vmatprep.subr.bf16.mxu0 0
    %1291 = vmatpush1.bf16.msra.mxu0 0
    %1292 = vmatprep.subr.bf16.mxu0 0
    %1293 = vmatpush1.bf16.msra.mxu0 0
    %1294 = vmatprep.subr.bf16.mxu0 0
    %1295 = vmatpush1.bf16.msra.mxu0 0
    %1296 = vmatprep.subr.bf16.mxu0 0
    %1297 = vmatpush1.bf16.msra.mxu0 0
    %1298 = vmatprep.subr.bf16.mxu0 0
    %1299 = vmatpush1.bf16.msra.mxu0 0
    %1300 = vmatprep.subr.bf16.mxu0 0
    %1301 = vmatpush1.bf16.msra.mxu0 0
    %1302 = vmatprep.subr.bf16.mxu0 0
    %1303 = vmatpush1.bf16.msra.mxu0 %v1284
    %1304 = vmatprep.subr.bf16.mxu0 0
    %1305 = vmatpush1.bf16.msra.mxu0 %v1283
    %1306 = vmatprep.subr.bf16.mxu0 0
    %1307 = vmatpush2.bf16.msra.mxu0 0
    %1308 = vmatprep.subr.bf16.mxu0 0
    %1309 = vmatpush2.bf16.msra.mxu0 0
    %1310 = vmatprep.subr.bf16.mxu0 0
    %1311 = vmatpush2.bf16.msra.mxu0 0
    %1312 = vmatprep.subr.bf16.mxu0 0
    %1313 = vmatpush2.bf16.msra.mxu0 0
    %1314 = vmatprep.subr.bf16.mxu0 0
    %1315 = vmatpush2.bf16.msra.mxu0 0
    %1316 = vmatprep.subr.bf16.mxu0 0
    %1317 = vmatpush2.bf16.msra.mxu0 0
    %1318 = vmatprep.subr.bf16.mxu0 0
    %1319 = vmatpush2.bf16.msra.mxu0 0
    %1320 = vmatprep.subr.bf16.mxu0 0
    %1321 = vmatpush2.bf16.msra.mxu0 0
    %1322 = vmatprep.mubr.bf16.mxu0 0
    %1323 = vmatmul.mubr.bf16.gmra.mxu0 %v1288
    %v1324 = vpop.f32.mrf.mxu0
    %v1325 = vadd.f32 0.0, %v1324
    %v1326 = vpop.f32.mrf.mxu0
    %v1327 = vpop.f32.mrf.mxu0
    %v1328 = vadd.f32 0.0, %v1327
    %v1329 = vpop.f32.mrf.mxu0
    %1330 = vdwg.mxu0
    %v1335 = vunpack.c.l.b16 %v987
    %v1336 = vunpack.c.l.b16 %v988
    %v1337 = vunpack.c.l.b16 %v989
    %v1338 = vunpack.c.l.b16 %v990
    %v1339 = vpack.c.b16 %v1336, %v1335
    %v1340 = vpack.c.b16 %v1338, %v1337
    %v1344 = vsel %vm1026, %v1147, 0
    %1346 = vmatprep.subr.bf16.mxu0 0
    %1347 = vmatpush1.bf16.msra.mxu0 0
    %1348 = vmatprep.subr.bf16.mxu0 0
    %1349 = vmatpush1.bf16.msra.mxu0 0
    %1350 = vmatprep.subr.bf16.mxu0 0
    %1351 = vmatpush1.bf16.msra.mxu0 0
    %1352 = vmatprep.subr.bf16.mxu0 0
    %1353 = vmatpush1.bf16.msra.mxu0 0
    %1354 = vmatprep.subr.bf16.mxu0 0
    %1355 = vmatpush1.bf16.msra.mxu0 0
    %1356 = vmatprep.subr.bf16.mxu0 0
    %1357 = vmatpush1.bf16.msra.mxu0 0
    %1358 = vmatprep.subr.bf16.mxu0 0
    %1359 = vmatpush1.bf16.msra.mxu0 %v1340
    %1360 = vmatprep.subr.bf16.mxu0 0
    %1361 = vmatpush1.bf16.msra.mxu0 %v1339
    %1362 = vmatprep.subr.bf16.mxu0 0
    %1363 = vmatpush2.bf16.msra.mxu0 0
    %1364 = vmatprep.subr.bf16.mxu0 0
    %1365 = vmatpush2.bf16.msra.mxu0 0
    %1366 = vmatprep.subr.bf16.mxu0 0
    %1367 = vmatpush2.bf16.msra.mxu0 0
    %1368 = vmatprep.subr.bf16.mxu0 0
    %1369 = vmatpush2.bf16.msra.mxu0 0
    %1370 = vmatprep.subr.bf16.mxu0 0
    %1371 = vmatpush2.bf16.msra.mxu0 0
    %1372 = vmatprep.subr.bf16.mxu0 0
    %1373 = vmatpush2.bf16.msra.mxu0 0
    %1374 = vmatprep.subr.bf16.mxu0 0
    %1375 = vmatpush2.bf16.msra.mxu0 0
    %1376 = vmatprep.subr.bf16.mxu0 0
    %1377 = vmatpush2.bf16.msra.mxu0 0
    %1378 = vmatprep.mubr.bf16.mxu0 0
    %1379 = vmatmul.mubr.bf16.gmra.mxu0 %v1344
    %v1380 = vpop.f32.mrf.mxu0
    %v1381 = vadd.f32 %v1325, %v1380
    %v1382 = vpop.f32.mrf.mxu0
    %v1383 = vpop.f32.mrf.mxu0
    %v1384 = vadd.f32 %v1328, %v1383
    %v1385 = vpop.f32.mrf.mxu0
    %1386 = vdwg.mxu0
    %1387 = vrot.lane.b32.xlu0 %v1009, 64
    %v1388 = vpop.permute.xlu0 %1387
    %1389 = vrot.lane.b32.xlu0 %v1016, 64
    %v1390 = vpop.permute.xlu0 %1389
    %v1392 = vsel %vm1026, %v1388, 0
    %v1395 = vsel %vm1026, %v1390, 0
    %1397 = vmatprep.subr.bf16.mxu0 0
    %1398 = vmatpush1.bf16.xpose.msra.mxu0 0
    %1399 = vmatprep.subr.bf16.mxu0 0
    %1400 = vmatpush1.bf16.xpose.msra.mxu0 0
    %1401 = vmatprep.subr.bf16.mxu0 0
    %1402 = vmatpush1.bf16.xpose.msra.mxu0 0
    %1403 = vmatprep.subr.bf16.mxu0 0
    %1404 = vmatpush1.bf16.xpose.msra.mxu0 0
    %1405 = vmatprep.subr.bf16.mxu0 0
    %1406 = vmatpush1.bf16.xpose.msra.mxu0 0
    %1407 = vmatprep.subr.bf16.mxu0 0
    %1408 = vmatpush1.bf16.xpose.msra.mxu0 0
    %1409 = vmatprep.subr.bf16.mxu0 0
    %1410 = vmatpush1.bf16.xpose.msra.mxu0 0
    %1411 = vmatprep.subr.bf16.mxu0 0
    %1412 = vmatpush1.bf16.xpose.msra.mxu0 %v1395
    %1413 = vmatprep.subr.bf16.mxu0 0
    %1414 = vmatpush2.bf16.xpose.msra.mxu0 0
    %1415 = vmatprep.subr.bf16.mxu0 0
    %1416 = vmatpush2.bf16.xpose.msra.mxu0 0
    %1417 = vmatprep.subr.bf16.mxu0 0
    %1418 = vmatpush2.bf16.xpose.msra.mxu0 0
    %1419 = vmatprep.subr.bf16.mxu0 0
    %1420 = vmatpush2.bf16.xpose.msra.mxu0 0
    %1421 = vmatprep.subr.bf16.mxu0 0
    %1422 = vmatpush2.bf16.xpose.msra.mxu0 0
    %1423 = vmatprep.subr.bf16.mxu0 0
    %1424 = vmatpush2.bf16.xpose.msra.mxu0 0
    %1425 = vmatprep.subr.bf16.mxu0 0
    %1426 = vmatpush2.bf16.xpose.msra.mxu0 0
    %1427 = vmatprep.subr.bf16.mxu0 0
    %1428 = vmatpush2.bf16.xpose.msra.mxu0 0
    %1429 = vmatprep.mubr.bf16.mxu0 0
    %1430 = vmatmul.mubr.bf16.gmra.mxu0 %v1392
    %v1431 = vpop.f32.mrf.mxu0
    %v1432 = vadd.f32 %v1024, %v1431
    %v1433 = vpop.f32.mrf.mxu0
    %v1434 = vpop.f32.mrf.mxu0
    %v1435 = vadd.f32 %v1025, %v1434
    %v1436 = vpop.f32.mrf.mxu0
    %1437 = vdwg.mxu0
    %v1438 = vsel %vm1074, %v1432, -inf
    %1439 = vmax.xlane.f32.xlu0 %v1438
    %v1440 = vpop.xlane.xlu0 %1439
    %v1441 = vsel %vm1078, %v1435, -inf
    %1442 = vmax.xlane.f32.xlu0 %v1441
    %v1443 = vpop.xlane.xlu0 %1442
    %v1444 = vsub.f32 %v1432, %v1440
    %v1445 = vsub.f32 %v1435, %v1443
    %v1446 = vmul.f32 %v1444, 1.442695
    %v1447 = vpow.pop %v1446
    %v1448 = vmul.f32 %v1445, 1.442695
    %v1449 = vpow.pop %v1448
    %v1450 = vsel %vm1074, %v1447, 0.0
    %1451 = vadd.xlane.f32.xlu0 %v1450
    %v1452 = vpop.xlane.xlu0 %1451
    %v1453 = vsel %vm1078, %v1449, 0.0
    %1454 = vadd.xlane.f32.xlu0 %v1453
    %v1455 = vpop.xlane.xlu0 %1454
    %v1456 = vrcp.pop %v1452
    %v1457 = vrcp.pop %v1455
    %v1458 = vmul.f32 %v1447, %v1456
    %v1459 = vmul.f32 %v1449, %v1457
    %v1460 = vpack.c.bf16 %v1459, %v1458
    %1461 = vrot.lane.b32.xlu0 %v1023, 64
    %v1462 = vpop.permute.xlu0 %1461
    %v1464 = vsel %vm1074, %v1460, 0
    %v1467 = vsel %vm1102, %v1462, 0
    %1469 = vmatprep.subr.bf16.mxu0 0
    %1470 = vmatpush1.bf16.msra.mxu0 0
    %1471 = vmatprep.subr.bf16.mxu0 0
    %1472 = vmatpush1.bf16.msra.mxu0 0
    %1473 = vmatprep.subr.bf16.mxu0 0
    %1474 = vmatpush1.bf16.msra.mxu0 0
    %1475 = vmatprep.subr.bf16.mxu0 0
    %1476 = vmatpush1.bf16.msra.mxu0 0
    %1477 = vmatprep.subr.bf16.mxu0 0
    %1478 = vmatpush1.bf16.msra.mxu0 0
    %1479 = vmatprep.subr.bf16.mxu0 0
    %1480 = vmatpush1.bf16.msra.mxu0 0
    %1481 = vmatprep.subr.bf16.mxu0 0
    %1482 = vmatpush1.bf16.msra.mxu0 0
    %1483 = vmatprep.subr.bf16.mxu0 0
    %1484 = vmatpush1.bf16.msra.mxu0 %v1467
    %1485 = vmatprep.subr.bf16.mxu0 0
    %1486 = vmatpush2.bf16.msra.mxu0 0
    %1487 = vmatprep.subr.bf16.mxu0 0
    %1488 = vmatpush2.bf16.msra.mxu0 0
    %1489 = vmatprep.subr.bf16.mxu0 0
    %1490 = vmatpush2.bf16.msra.mxu0 0
    %1491 = vmatprep.subr.bf16.mxu0 0
    %1492 = vmatpush2.bf16.msra.mxu0 0
    %1493 = vmatprep.subr.bf16.mxu0 0
    %1494 = vmatpush2.bf16.msra.mxu0 0
    %1495 = vmatprep.subr.bf16.mxu0 0
    %1496 = vmatpush2.bf16.msra.mxu0 0
    %1497 = vmatprep.subr.bf16.mxu0 0
    %1498 = vmatpush2.bf16.msra.mxu0 0
    %1499 = vmatprep.subr.bf16.mxu0 0
    %1500 = vmatpush2.bf16.msra.mxu0 0
    %1501 = vmatprep.mubr.bf16.mxu0 0
    %1502 = vmatmul.mubr.bf16.gmra.mxu0 %v1464
    %v1503 = vpop.f32.mrf.mxu0
    %v1504 = vadd.f32 0.0, %v1503
    %v1505 = vpop.f32.mrf.mxu0
    %v1506 = vpop.f32.mrf.mxu0
    %v1507 = vadd.f32 0.0, %v1506
    %v1508 = vpop.f32.mrf.mxu0
    %1509 = vdwg.mxu0
    %v1510 = vpack.c.bf16 %v1507, %v1504
    %v1515 = vunpack.c.l.b16 %v995
    %v1516 = vunpack.c.l.b16 %v996
    %v1517 = vunpack.c.l.b16 %v997
    %v1518 = vunpack.c.l.b16 %v998
    %v1519 = vpack.c.b16 %v1516, %v1515
    %v1520 = vpack.c.b16 %v1518, %v1517
    %v1524 = vsel %vm1026, %v1510, 0
    %1526 = vmatprep.subr.bf16.mxu0 0
    %1527 = vmatpush1.bf16.msra.mxu0 0
    %1528 = vmatprep.subr.bf16.mxu0 0
    %1529 = vmatpush1.bf16.msra.mxu0 0
    %1530 = vmatprep.subr.bf16.mxu0 0
    %1531 = vmatpush1.bf16.msra.mxu0 0
    %1532 = vmatprep.subr.bf16.mxu0 0
    %1533 = vmatpush1.bf16.msra.mxu0 0
    %1534 = vmatprep.subr.bf16.mxu0 0
    %1535 = vmatpush1.bf16.msra.mxu0 0
    %1536 = vmatprep.subr.bf16.mxu0 0
    %1537 = vmatpush1.bf16.msra.mxu0 0
    %1538 = vmatprep.subr.bf16.mxu0 0
    %1539 = vmatpush1.bf16.msra.mxu0 %v1520
    %1540 = vmatprep.subr.bf16.mxu0 0
    %1541 = vmatpush1.bf16.msra.mxu0 %v1519
    %1542 = vmatprep.subr.bf16.mxu0 0
    %1543 = vmatpush2.bf16.msra.mxu0 0
    %1544 = vmatprep.subr.bf16.mxu0 0
    %1545 = vmatpush2.bf16.msra.mxu0 0
    %1546 = vmatprep.subr.bf16.mxu0 0
    %1547 = vmatpush2.bf16.msra.mxu0 0
    %1548 = vmatprep.subr.bf16.mxu0 0
    %1549 = vmatpush2.bf16.msra.mxu0 0
    %1550 = vmatprep.subr.bf16.mxu0 0
    %1551 = vmatpush2.bf16.msra.mxu0 0
    %1552 = vmatprep.subr.bf16.mxu0 0
    %1553 = vmatpush2.bf16.msra.mxu0 0
    %1554 = vmatprep.subr.bf16.mxu0 0
    %1555 = vmatpush2.bf16.msra.mxu0 0
    %1556 = vmatprep.subr.bf16.mxu0 0
    %1557 = vmatpush2.bf16.msra.mxu0 0
    %1558 = vmatprep.mubr.bf16.mxu0 0
    %1559 = vmatmul.mubr.bf16.gmra.mxu0 %v1524
    %v1560 = vpop.f32.mrf.mxu0
    %v1561 = vadd.f32 0.0, %v1560
    %v1562 = vpop.f32.mrf.mxu0
    %v1563 = vpop.f32.mrf.mxu0
    %v1564 = vadd.f32 0.0, %v1563
    %v1565 = vpop.f32.mrf.mxu0
    %1566 = vdwg.mxu0
    %v1567 = vadd.f32 %v1381, %v1561
    %v1568 = vadd.f32 %v1384, %v1564
    %1569 = vrot.lane.b32.xlu0 %v1009, 32
    %v1570 = vpop.permute.xlu0 %1569
    %1571 = vrot.lane.b32.xlu0 %v1016, 32
    %v1572 = vpop.permute.xlu0 %1571
    %v1574 = vsel %vm1026, %v1570, 0
    %v1577 = vsel %vm1026, %v1572, 0
    %1579 = vmatprep.subr.bf16.mxu0 0
    %1580 = vmatpush1.bf16.xpose.msra.mxu0 0
    %1581 = vmatprep.subr.bf16.mxu0 0
    %1582 = vmatpush1.bf16.xpose.msra.mxu0 0
    %1583 = vmatprep.subr.bf16.mxu0 0
    %1584 = vmatpush1.bf16.xpose.msra.mxu0 0
    %1585 = vmatprep.subr.bf16.mxu0 0
    %1586 = vmatpush1.bf16.xpose.msra.mxu0 0
    %1587 = vmatprep.subr.bf16.mxu0 0
    %1588 = vmatpush1.bf16.xpose.msra.mxu0 0
    %1589 = vmatprep.subr.bf16.mxu0 0
    %1590 = vmatpush1.bf16.xpose.msra.mxu0 0
    %1591 = vmatprep.subr.bf16.mxu0 0
    %1592 = vmatpush1.bf16.xpose.msra.mxu0 0
    %1593 = vmatprep.subr.bf16.mxu0 0
    %1594 = vmatpush1.bf16.xpose.msra.mxu0 %v1577
    %1595 = vmatprep.subr.bf16.mxu0 0
    %1596 = vmatpush2.bf16.xpose.msra.mxu0 0
    %1597 = vmatprep.subr.bf16.mxu0 0
    %1598 = vmatpush2.bf16.xpose.msra.mxu0 0
    %1599 = vmatprep.subr.bf16.mxu0 0
    %1600 = vmatpush2.bf16.xpose.msra.mxu0 0
    %1601 = vmatprep.subr.bf16.mxu0 0
    %1602 = vmatpush2.bf16.xpose.msra.mxu0 0
    %1603 = vmatprep.subr.bf16.mxu0 0
    %1604 = vmatpush2.bf16.xpose.msra.mxu0 0
    %1605 = vmatprep.subr.bf16.mxu0 0
    %1606 = vmatpush2.bf16.xpose.msra.mxu0 0
    %1607 = vmatprep.subr.bf16.mxu0 0
    %1608 = vmatpush2.bf16.xpose.msra.mxu0 0
    %1609 = vmatprep.subr.bf16.mxu0 0
    %1610 = vmatpush2.bf16.xpose.msra.mxu0 0
    %1611 = vmatprep.mubr.bf16.mxu0 0
    %1612 = vmatmul.mubr.bf16.gmra.mxu0 %v1574
    %v1613 = vpop.f32.mrf.mxu0
    %v1614 = vadd.f32 %v1024, %v1613
    %v1615 = vpop.f32.mrf.mxu0
    %v1616 = vpop.f32.mrf.mxu0
    %v1617 = vadd.f32 %v1025, %v1616
    %v1618 = vpop.f32.mrf.mxu0
    %1619 = vdwg.mxu0
    %v1620 = vsel %vm1074, %v1614, -inf
    %1621 = vmax.xlane.f32.xlu0 %v1620
    %v1622 = vpop.xlane.xlu0 %1621
    %v1623 = vsel %vm1078, %v1617, -inf
    %1624 = vmax.xlane.f32.xlu0 %v1623
    %v1625 = vpop.xlane.xlu0 %1624
    %v1626 = vsub.f32 %v1614, %v1622
    %v1627 = vsub.f32 %v1617, %v1625
    %v1628 = vmul.f32 %v1626, 1.442695
    %v1629 = vpow.pop %v1628
    %v1630 = vmul.f32 %v1627, 1.442695
    %v1631 = vpow.pop %v1630
    %v1632 = vsel %vm1074, %v1629, 0.0
    %1633 = vadd.xlane.f32.xlu0 %v1632
    %v1634 = vpop.xlane.xlu0 %1633
    %v1635 = vsel %vm1078, %v1631, 0.0
    %1636 = vadd.xlane.f32.xlu0 %v1635
    %v1637 = vpop.xlane.xlu0 %1636
    %v1638 = vrcp.pop %v1634
    %v1639 = vrcp.pop %v1637
    %v1640 = vmul.f32 %v1629, %v1638
    %v1641 = vmul.f32 %v1631, %v1639
    %v1642 = vpack.c.bf16 %v1641, %v1640
    %1643 = vrot.lane.b32.xlu0 %v1023, 32
    %v1644 = vpop.permute.xlu0 %1643
    %v1646 = vsel %vm1074, %v1642, 0
    %v1649 = vsel %vm1102, %v1644, 0
    %1651 = vmatprep.subr.bf16.mxu0 0
    %1652 = vmatpush1.bf16.msra.mxu0 0
    %1653 = vmatprep.subr.bf16.mxu0 0
    %1654 = vmatpush1.bf16.msra.mxu0 0
    %1655 = vmatprep.subr.bf16.mxu0 0
    %1656 = vmatpush1.bf16.msra.mxu0 0
    %1657 = vmatprep.subr.bf16.mxu0 0
    %1658 = vmatpush1.bf16.msra.mxu0 0
    %1659 = vmatprep.subr.bf16.mxu0 0
    %1660 = vmatpush1.bf16.msra.mxu0 0
    %1661 = vmatprep.subr.bf16.mxu0 0
    %1662 = vmatpush1.bf16.msra.mxu0 0
    %1663 = vmatprep.subr.bf16.mxu0 0
    %1664 = vmatpush1.bf16.msra.mxu0 0
    %1665 = vmatprep.subr.bf16.mxu0 0
    %1666 = vmatpush1.bf16.msra.mxu0 %v1649
    %1667 = vmatprep.subr.bf16.mxu0 0
    %1668 = vmatpush2.bf16.msra.mxu0 0
    %1669 = vmatprep.subr.bf16.mxu0 0
    %1670 = vmatpush2.bf16.msra.mxu0 0
    %1671 = vmatprep.subr.bf16.mxu0 0
    %1672 = vmatpush2.bf16.msra.mxu0 0
    %1673 = vmatprep.subr.bf16.mxu0 0
    %1674 = vmatpush2.bf16.msra.mxu0 0
    %1675 = vmatprep.subr.bf16.mxu0 0
    %1676 = vmatpush2.bf16.msra.mxu0 0
    %1677 = vmatprep.subr.bf16.mxu0 0
    %1678 = vmatpush2.bf16.msra.mxu0 0
    %1679 = vmatprep.subr.bf16.mxu0 0
    %1680 = vmatpush2.bf16.msra.mxu0 0
    %1681 = vmatprep.subr.bf16.mxu0 0
    %1682 = vmatpush2.bf16.msra.mxu0 0
    %1683 = vmatprep.mubr.bf16.mxu0 0
    %1684 = vmatmul.mubr.bf16.gmra.mxu0 %v1646
    %v1685 = vpop.f32.mrf.mxu0
    %v1686 = vadd.f32 0.0, %v1685
    %v1687 = vpop.f32.mrf.mxu0
    %v1688 = vpop.f32.mrf.mxu0
    %v1689 = vadd.f32 0.0, %v1688
    %v1690 = vpop.f32.mrf.mxu0
    %1691 = vdwg.mxu0
    %v1692 = vpack.c.bf16 %v1689, %v1686
    %v1697 = vunpack.c.l.b16 %v999
    %v1698 = vunpack.c.l.b16 %v1000
    %v1699 = vunpack.c.l.b16 %v1001
    %v1700 = vunpack.c.l.b16 %v1002
    %v1701 = vpack.c.b16 %v1698, %v1697
    %v1702 = vpack.c.b16 %v1700, %v1699
    %v1706 = vsel %vm1026, %v1692, 0
    %1708 = vmatprep.subr.bf16.mxu0 0
    %1709 = vmatpush1.bf16.msra.mxu0 0
    %1710 = vmatprep.subr.bf16.mxu0 0
    %1711 = vmatpush1.bf16.msra.mxu0 0
    %1712 = vmatprep.subr.bf16.mxu0 0
    %1713 = vmatpush1.bf16.msra.mxu0 0
    %1714 = vmatprep.subr.bf16.mxu0 0
    %1715 = vmatpush1.bf16.msra.mxu0 0
    %1716 = vmatprep.subr.bf16.mxu0 0
    %1717 = vmatpush1.bf16.msra.mxu0 0
    %1718 = vmatprep.subr.bf16.mxu0 0
    %1719 = vmatpush1.bf16.msra.mxu0 0
    %1720 = vmatprep.subr.bf16.mxu0 0
    %1721 = vmatpush1.bf16.msra.mxu0 %v1702
    %1722 = vmatprep.subr.bf16.mxu0 0
    %1723 = vmatpush1.bf16.msra.mxu0 %v1701
    %1724 = vmatprep.subr.bf16.mxu0 0
    %1725 = vmatpush2.bf16.msra.mxu0 0
    %1726 = vmatprep.subr.bf16.mxu0 0
    %1727 = vmatpush2.bf16.msra.mxu0 0
    %1728 = vmatprep.subr.bf16.mxu0 0
    %1729 = vmatpush2.bf16.msra.mxu0 0
    %1730 = vmatprep.subr.bf16.mxu0 0
    %1731 = vmatpush2.bf16.msra.mxu0 0
    %1732 = vmatprep.subr.bf16.mxu0 0
    %1733 = vmatpush2.bf16.msra.mxu0 0
    %1734 = vmatprep.subr.bf16.mxu0 0
    %1735 = vmatpush2.bf16.msra.mxu0 0
    %1736 = vmatprep.subr.bf16.mxu0 0
    %1737 = vmatpush2.bf16.msra.mxu0 0
    %1738 = vmatprep.subr.bf16.mxu0 0
    %1739 = vmatpush2.bf16.msra.mxu0 0
    %1740 = vmatprep.mubr.bf16.mxu0 0
    %1741 = vmatmul.mubr.bf16.gmra.mxu0 %v1706
    %v1742 = vpop.f32.mrf.mxu0
    %v1743 = vadd.f32 0.0, %v1742
    %v1744 = vpop.f32.mrf.mxu0
    %v1745 = vpop.f32.mrf.mxu0
    %v1746 = vadd.f32 0.0, %v1745
    %v1747 = vpop.f32.mrf.mxu0
    %1748 = vdwg.mxu0
    %v1749 = vadd.f32 %v1567, %v1743
    %v1750 = vadd.f32 %v1568, %v1746
    %v1751 = vadd.f32 %v692, %v1749
    %v1752 = vadd.f32 %v697, %v1750
    %v1753 = vlaneseq
    %v1754 = vshrl.u32 %v1753, 7
    %v1755 = vsub.s32 4, %v1754
    %v1756 = vrot.slane %v702, %v1755
    %v1757 = vadd.f32 %v1751, %v1756
    %v1758 = vadd.f32 %v1752, %v1756
    %1759 = vadd.xlane.f32.xlu0 %v1757
    %v1760 = vpop.xlane.xlu0 %1759
    %v1761 = vsel %vm706, %v1758, 0.0
    %1762 = vadd.xlane.f32.xlu0 %v1761
    %v1763 = vpop.xlane.xlu0 %1762
    %v1764 = vmul.f32 %v1760, %v710
    %v1765 = vmul.f32 %v1763, %v710
    %v1766 = vsub.f32 %v1757, %v1764
    %v1767 = vsub.f32 %v1758, %v1765
    %v1768 = vmul.f32 %v1766, %v1766
    %v1769 = vmul.f32 %v1767, %v1767
    %1770 = vadd.xlane.f32.xlu0 %v1768
    %v1771 = vpop.xlane.xlu0 %1770
    %v1772 = vsel %vm706, %v1769, 0.0
    %1773 = vadd.xlane.f32.xlu0 %v1772
    %v1774 = vpop.xlane.xlu0 %1773
    %v1775 = vmul.f32 %v1771, %v710
    %v1776 = vmul.f32 %v1774, %v710
    %v1777 = vadd.f32 %v1775, 1e-12
    %v1778 = vadd.f32 %v1776, 1e-12
    %v1779 = vrsqrt.pop %v1777
    %v1780 = vrsqrt.pop %v1778
    %v1781 = vmul.f32 %v1766, %v1779
    %v1782 = vmul.f32 %v1767, %v1780
    %v1783 = vlaneseq
    %v1784 = vshrl.u32 %v1783, 7
    %v1785 = vsub.s32 2, %v1784
    %v1786 = vrot.slane %v702, %v1785
    %v1787 = vmul.f32 %v1781, %v1786
    %v1788 = vmul.f32 %v1782, %v1786
    %v1789 = vlaneseq
    %v1790 = vshrl.u32 %v1789, 7
    %v1791 = vsub.s32 3, %v1790
    %v1792 = vrot.slane %v702, %v1791
    %v1793 = vadd.f32 %v1787, %v1792
    %v1794 = vadd.f32 %v1788, %v1792
    %v1795 = vpack.c.bf16 %v1794, %v1793
    %v1796 = vld [vmem:[%s12] sm:$0xff]
    %v1797 = vld [vmem:[%s12 + $0x8] sm:$0xff]
    %v1798 = vld [vmem:[%s12 + $0x10] sm:$0xff]
    %v1799 = vld [vmem:[%s12 + $0x18] sm:$0xff]
    %v1800 = vld [vmem:[%s12 + $0x20] sm:$0xff]
    %v1801 = vld [vmem:[%s12 + $0x28] sm:$0xff]
    %v1802 = vld [vmem:[%s12 + $0x30] sm:$0xff]
    %v1803 = vld [vmem:[%s12 + $0x38] sm:$0xff]
    %v1804 = vld [vmem:[%s12 + $0x40] sm:$0xff]
    %v1805 = vld [vmem:[%s12 + $0x48] sm:$0xff]
    %v1806 = vld [vmem:[%s12 + $0x50] sm:$0xff]
    %v1807 = vld [vmem:[%s12 + $0x58] sm:$0xff]
    %v1808 = vld [vmem:[%s12 + $0x60] sm:$0xff]
    %v1809 = vld [vmem:[%s12 + $0x68] sm:$0xff]
    %v1810 = vld [vmem:[%s12 + $0x70] sm:$0xff]
    %v1811 = vld [vmem:[%s12 + $0x78] sm:$0xff]
    %v1812 = vld [vmem:[%s12 + $0x80] sm:$0xff]
    %v1813 = vld [vmem:[%s12 + $0x88] sm:$0xff]
    %v1814 = vld [vmem:[%s12 + $0x90] sm:$0xff]
    %v1815 = vld [vmem:[%s12 + $0x98] sm:$0xff]
    %v1816 = vld [vmem:[%s12 + $0xa0] sm:$0xff]
    %v1817 = vld [vmem:[%s12 + $0xa8] sm:$0xff]
    %v1818 = vld [vmem:[%s12 + $0xb0] sm:$0xff]
    %v1819 = vld [vmem:[%s12 + $0xb8] sm:$0xff]
    %v1820 = vld [vmem:[%s12 + $0xc0] sm:$0xff]
    %v1821 = vld [vmem:[%s12 + $0xc8] sm:$0xff]
    %v1822 = vld [vmem:[%s12 + $0xd0] sm:$0xff]
    %v1823 = vld [vmem:[%s12 + $0xd8] sm:$0xff]
    %v1824 = vld [vmem:[%s12 + $0xe0] sm:$0xff]
    %v1825 = vld [vmem:[%s12 + $0xe8] sm:$0xff]
    %v1826 = vld [vmem:[%s12 + $0xf0] sm:$0xff]
    %v1827 = vld [vmem:[%s12 + $0xf8] sm:$0xff]
    %v1828 = vld [vmem:[%s9] sm:$0xf]
    %v1830 = vlaneseq
    %v1831 = vshrl.u32 %v1830, 7
    %v1832 = vsub.s32 0, %v1831
    %v1833 = vrot.slane %v1828, %v1832
    %v1834 = vlaneseq
    %v1835 = vshrl.u32 %v1834, 7
    %v1836 = vsub.s32 1, %v1835
    %v1837 = vrot.slane %v1828, %v1836
    %v1838 = vlaneseq
    %v1839 = vshrl.u32 %v1838, 7
    %v1840 = vsub.s32 2, %v1839
    %v1841 = vrot.slane %v1828, %v1840
    %v1842 = vlaneseq
    %v1843 = vshrl.u32 %v1842, 7
    %v1844 = vsub.s32 3, %v1843
    %v1845 = vrot.slane %v1828, %v1844
    %v1882 = vunpack.c.l.b16 %v1796
    %v1883 = vunpack.c.h.b16 %v1796
    %v1884 = vunpack.c.l.b16 %v1797
    %v1885 = vunpack.c.h.b16 %v1797
    %v1886 = vunpack.c.l.b16 %v1798
    %v1887 = vunpack.c.h.b16 %v1798
    %v1888 = vunpack.c.l.b16 %v1799
    %v1889 = vunpack.c.h.b16 %v1799
    %v1890 = vunpack.c.l.b16 %v1800
    %v1891 = vunpack.c.h.b16 %v1800
    %v1892 = vunpack.c.l.b16 %v1801
    %v1893 = vunpack.c.h.b16 %v1801
    %v1894 = vunpack.c.l.b16 %v1802
    %v1895 = vunpack.c.h.b16 %v1802
    %v1896 = vunpack.c.l.b16 %v1803
    %v1897 = vunpack.c.h.b16 %v1803
    %v1898 = vunpack.c.l.b16 %v1804
    %v1899 = vunpack.c.h.b16 %v1804
    %v1900 = vunpack.c.l.b16 %v1805
    %v1901 = vunpack.c.h.b16 %v1805
    %v1902 = vunpack.c.l.b16 %v1806
    %v1903 = vunpack.c.h.b16 %v1806
    %v1904 = vunpack.c.l.b16 %v1807
    %v1905 = vunpack.c.h.b16 %v1807
    %v1906 = vunpack.c.l.b16 %v1808
    %v1907 = vunpack.c.h.b16 %v1808
    %v1908 = vunpack.c.l.b16 %v1809
    %v1909 = vunpack.c.h.b16 %v1809
    %v1910 = vunpack.c.l.b16 %v1810
    %v1911 = vunpack.c.h.b16 %v1810
    %v1912 = vunpack.c.l.b16 %v1811
    %v1913 = vunpack.c.h.b16 %v1811
    %v1914 = vunpack.c.l.b16 %v1812
    %v1915 = vunpack.c.h.b16 %v1812
    %v1916 = vunpack.c.l.b16 %v1813
    %v1917 = vunpack.c.h.b16 %v1813
    %v1918 = vunpack.c.l.b16 %v1814
    %v1919 = vunpack.c.h.b16 %v1814
    %v1920 = vunpack.c.l.b16 %v1815
    %v1921 = vunpack.c.h.b16 %v1815
    %v1922 = vunpack.c.l.b16 %v1816
    %v1923 = vunpack.c.h.b16 %v1816
    %v1924 = vunpack.c.l.b16 %v1817
    %v1925 = vunpack.c.h.b16 %v1817
    %v1926 = vunpack.c.l.b16 %v1818
    %v1927 = vunpack.c.h.b16 %v1818
    %v1928 = vunpack.c.l.b16 %v1819
    %v1929 = vunpack.c.h.b16 %v1819
    %v1930 = vunpack.c.l.b16 %v1820
    %v1931 = vunpack.c.h.b16 %v1820
    %v1932 = vunpack.c.l.b16 %v1821
    %v1933 = vunpack.c.h.b16 %v1821
    %v1934 = vunpack.c.l.b16 %v1822
    %v1935 = vunpack.c.h.b16 %v1822
    %v1936 = vunpack.c.l.b16 %v1823
    %v1937 = vunpack.c.h.b16 %v1823
    %v1938 = vunpack.c.l.b16 %v1824
    %v1939 = vunpack.c.h.b16 %v1824
    %v1940 = vunpack.c.l.b16 %v1825
    %v1941 = vunpack.c.h.b16 %v1825
    %v1942 = vunpack.c.l.b16 %v1826
    %v1943 = vunpack.c.h.b16 %v1826
    %v1944 = vunpack.c.l.b16 %v1827
    %v1945 = vunpack.c.h.b16 %v1827
    %v1946 = vpack.c.b16 %v1886, %v1882
    %v1947 = vpack.c.b16 %v1887, %v1883
    %v1948 = vpack.c.b16 %v1888, %v1884
    %v1949 = vpack.c.b16 %v1889, %v1885
    %v1950 = vpack.c.b16 %v1894, %v1890
    %v1951 = vpack.c.b16 %v1895, %v1891
    %v1952 = vpack.c.b16 %v1896, %v1892
    %v1953 = vpack.c.b16 %v1897, %v1893
    %v1954 = vpack.c.b16 %v1902, %v1898
    %v1955 = vpack.c.b16 %v1903, %v1899
    %v1956 = vpack.c.b16 %v1904, %v1900
    %v1957 = vpack.c.b16 %v1905, %v1901
    %v1958 = vpack.c.b16 %v1910, %v1906
    %v1959 = vpack.c.b16 %v1911, %v1907
    %v1960 = vpack.c.b16 %v1912, %v1908
    %v1961 = vpack.c.b16 %v1913, %v1909
    %v1962 = vpack.c.b16 %v1918, %v1914
    %v1963 = vpack.c.b16 %v1919, %v1915
    %v1964 = vpack.c.b16 %v1920, %v1916
    %v1965 = vpack.c.b16 %v1921, %v1917
    %v1966 = vpack.c.b16 %v1926, %v1922
    %v1967 = vpack.c.b16 %v1927, %v1923
    %v1968 = vpack.c.b16 %v1928, %v1924
    %v1969 = vpack.c.b16 %v1929, %v1925
    %v1970 = vpack.c.b16 %v1934, %v1930
    %v1971 = vpack.c.b16 %v1935, %v1931
    %v1972 = vpack.c.b16 %v1936, %v1932
    %v1973 = vpack.c.b16 %v1937, %v1933
    %v1974 = vpack.c.b16 %v1942, %v1938
    %v1975 = vpack.c.b16 %v1943, %v1939
    %v1976 = vpack.c.b16 %v1944, %v1940
    %v1977 = vpack.c.b16 %v1945, %v1941
    %2010 = vmatprep.subr.bf16.mxu0 %v1975
    %2011 = vmatpush1.bf16.msra.mxu0 %v1974
    %2012 = vmatprep.subr.bf16.mxu0 %v1971
    %2013 = vmatpush1.bf16.msra.mxu0 %v1970
    %2014 = vmatprep.subr.bf16.mxu0 %v1967
    %2015 = vmatpush1.bf16.msra.mxu0 %v1966
    %2016 = vmatprep.subr.bf16.mxu0 %v1963
    %2017 = vmatpush1.bf16.msra.mxu0 %v1962
    %2018 = vmatprep.subr.bf16.mxu0 %v1959
    %2019 = vmatpush1.bf16.msra.mxu0 %v1958
    %2020 = vmatprep.subr.bf16.mxu0 %v1955
    %2021 = vmatpush1.bf16.msra.mxu0 %v1954
    %2022 = vmatprep.subr.bf16.mxu0 %v1951
    %2023 = vmatpush1.bf16.msra.mxu0 %v1950
    %2024 = vmatprep.subr.bf16.mxu0 %v1947
    %2025 = vmatpush1.bf16.msra.mxu0 %v1946
    %2026 = vmatprep.subr.bf16.mxu0 0
    %2027 = vmatpush2.bf16.msra.mxu0 0
    %2028 = vmatprep.subr.bf16.mxu0 0
    %2029 = vmatpush2.bf16.msra.mxu0 0
    %2030 = vmatprep.subr.bf16.mxu0 0
    %2031 = vmatpush2.bf16.msra.mxu0 0
    %2032 = vmatprep.subr.bf16.mxu0 0
    %2033 = vmatpush2.bf16.msra.mxu0 0
    %2034 = vmatprep.subr.bf16.mxu0 0
    %2035 = vmatpush2.bf16.msra.mxu0 0
    %2036 = vmatprep.subr.bf16.mxu0 0
    %2037 = vmatpush2.bf16.msra.mxu0 0
    %2038 = vmatprep.subr.bf16.mxu0 0
    %2039 = vmatpush2.bf16.msra.mxu0 0
    %2040 = vmatprep.subr.bf16.mxu0 0
    %2041 = vmatpush2.bf16.msra.mxu0 0
    %2042 = vmatprep.mubr.bf16.mxu0 0
    %2043 = vmatmul.mubr.bf16.gmra.mxu0 %v1795
    %v2044 = vpop.f32.mrf.mxu0
    %v2045 = vadd.f32 %v1833, %v2044
    %v2046 = vpop.f32.mrf.mxu0
    %v2047 = vadd.f32 %v1837, %v2046
    %v2048 = vpop.f32.mrf.mxu0
    %v2049 = vadd.f32 %v1833, %v2048
    %v2050 = vpop.f32.mrf.mxu0
    %v2051 = vadd.f32 %v1837, %v2050
    %2052 = vdwg.mxu0
    %2053 = vmatprep.subr.bf16.mxu0 %v1977
    %2054 = vmatpush1.bf16.msra.mxu0 %v1976
    %2055 = vmatprep.subr.bf16.mxu0 %v1973
    %2056 = vmatpush1.bf16.msra.mxu0 %v1972
    %2057 = vmatprep.subr.bf16.mxu0 %v1969
    %2058 = vmatpush1.bf16.msra.mxu0 %v1968
    %2059 = vmatprep.subr.bf16.mxu0 %v1965
    %2060 = vmatpush1.bf16.msra.mxu0 %v1964
    %2061 = vmatprep.subr.bf16.mxu0 %v1961
    %2062 = vmatpush1.bf16.msra.mxu0 %v1960
    %2063 = vmatprep.subr.bf16.mxu0 %v1957
    %2064 = vmatpush1.bf16.msra.mxu0 %v1956
    %2065 = vmatprep.subr.bf16.mxu0 %v1953
    %2066 = vmatpush1.bf16.msra.mxu0 %v1952
    %2067 = vmatprep.subr.bf16.mxu0 %v1949
    %2068 = vmatpush1.bf16.msra.mxu0 %v1948
    %2069 = vmatprep.subr.bf16.mxu0 0
    %2070 = vmatpush2.bf16.msra.mxu0 0
    %2071 = vmatprep.subr.bf16.mxu0 0
    %2072 = vmatpush2.bf16.msra.mxu0 0
    %2073 = vmatprep.subr.bf16.mxu0 0
    %2074 = vmatpush2.bf16.msra.mxu0 0
    %2075 = vmatprep.subr.bf16.mxu0 0
    %2076 = vmatpush2.bf16.msra.mxu0 0
    %2077 = vmatprep.subr.bf16.mxu0 0
    %2078 = vmatpush2.bf16.msra.mxu0 0
    %2079 = vmatprep.subr.bf16.mxu0 0
    %2080 = vmatpush2.bf16.msra.mxu0 0
    %2081 = vmatprep.subr.bf16.mxu0 0
    %2082 = vmatpush2.bf16.msra.mxu0 0
    %2083 = vmatprep.subr.bf16.mxu0 0
    %2084 = vmatpush2.bf16.msra.mxu0 0
    %2085 = vmatprep.mubr.bf16.mxu0 0
    %2086 = vmatmul.mubr.bf16.gmra.mxu0 %v1795
    %v2087 = vpop.f32.mrf.mxu0
    %v2088 = vadd.f32 %v1841, %v2087
    %v2089 = vpop.f32.mrf.mxu0
    %v2090 = vadd.f32 %v1845, %v2089
    %v2091 = vpop.f32.mrf.mxu0
    %v2092 = vadd.f32 %v1841, %v2091
    %v2093 = vpop.f32.mrf.mxu0
    %v2094 = vadd.f32 %v1845, %v2093
    %2095 = vdwg.mxu0
    %v2096 = vmul.f32 %v2045, 0.5
    %v2097 = vmul.f32 %v2047, 0.5
    %v2098 = vmul.f32 %v2088, 0.5
    %v2099 = vmul.f32 %v2090, 0.5
    %v2100 = vmul.f32 %v2049, 0.5
    %v2101 = vmul.f32 %v2051, 0.5
    %v2102 = vmul.f32 %v2092, 0.5
    %v2103 = vmul.f32 %v2094, 0.5
    %v2104 = vmul.f32 %v2045, 0.044715
    %v2105 = vmul.f32 %v2047, 0.044715
    %v2106 = vmul.f32 %v2088, 0.044715
    %v2107 = vmul.f32 %v2090, 0.044715
    %v2108 = vmul.f32 %v2049, 0.044715
    %v2109 = vmul.f32 %v2051, 0.044715
    %v2110 = vmul.f32 %v2092, 0.044715
    %v2111 = vmul.f32 %v2094, 0.044715
    %v2112 = vmul.f32 %v2104, %v2045
    %v2113 = vmul.f32 %v2105, %v2047
    %v2114 = vmul.f32 %v2106, %v2088
    %v2115 = vmul.f32 %v2107, %v2090
    %v2116 = vmul.f32 %v2108, %v2049
    %v2117 = vmul.f32 %v2109, %v2051
    %v2118 = vmul.f32 %v2110, %v2092
    %v2119 = vmul.f32 %v2111, %v2094
    %v2120 = vmul.f32 %v2112, %v2045
    %v2121 = vmul.f32 %v2113, %v2047
    %v2122 = vmul.f32 %v2114, %v2088
    %v2123 = vmul.f32 %v2115, %v2090
    %v2124 = vmul.f32 %v2116, %v2049
    %v2125 = vmul.f32 %v2117, %v2051
    %v2126 = vmul.f32 %v2118, %v2092
    %v2127 = vmul.f32 %v2119, %v2094
    %v2128 = vadd.f32 %v2045, %v2120
    %v2129 = vadd.f32 %v2047, %v2121
    %v2130 = vadd.f32 %v2088, %v2122
    %v2131 = vadd.f32 %v2090, %v2123
    %v2132 = vadd.f32 %v2049, %v2124
    %v2133 = vadd.f32 %v2051, %v2125
    %v2134 = vadd.f32 %v2092, %v2126
    %v2135 = vadd.f32 %v2094, %v2127
    %v2136 = vmul.f32 %v2128, 0.7978846
    %v2137 = vmul.f32 %v2129, 0.7978846
    %v2138 = vmul.f32 %v2130, 0.7978846
    %v2139 = vmul.f32 %v2131, 0.7978846
    %v2140 = vmul.f32 %v2132, 0.7978846
    %v2141 = vmul.f32 %v2133, 0.7978846
    %v2142 = vmul.f32 %v2134, 0.7978846
    %v2143 = vmul.f32 %v2135, 0.7978846
    %v2144 = vtanh.pop %v2136
    %v2145 = vtanh.pop %v2137
    %v2146 = vtanh.pop %v2138
    %v2147 = vtanh.pop %v2139
    %v2148 = vtanh.pop %v2140
    %v2149 = vtanh.pop %v2141
    %v2150 = vtanh.pop %v2142
    %v2151 = vtanh.pop %v2143
    %v2152 = vadd.f32 %v2144, 1.0
    %v2153 = vadd.f32 %v2145, 1.0
    %v2154 = vadd.f32 %v2146, 1.0
    %v2155 = vadd.f32 %v2147, 1.0
    %v2156 = vadd.f32 %v2148, 1.0
    %v2157 = vadd.f32 %v2149, 1.0
    %v2158 = vadd.f32 %v2150, 1.0
    %v2159 = vadd.f32 %v2151, 1.0
    %v2160 = vmul.f32 %v2096, %v2152
    %v2161 = vmul.f32 %v2097, %v2153
    %v2162 = vmul.f32 %v2098, %v2154
    %v2163 = vmul.f32 %v2099, %v2155
    %v2164 = vmul.f32 %v2100, %v2156
    %v2165 = vmul.f32 %v2101, %v2157
    %v2166 = vmul.f32 %v2102, %v2158
    %v2167 = vmul.f32 %v2103, %v2159
    %v2168 = vpack.c.bf16 %v2164, %v2160
    %v2169 = vpack.c.bf16 %v2165, %v2161
    %v2170 = vpack.c.bf16 %v2166, %v2162
    %v2171 = vpack.c.bf16 %v2167, %v2163
    %v2172 = vld [vmem:[%s13] sm:$0xf]
    %v2173 = vld [vmem:[%s13 + $0x4] sm:$0xf]
    %v2174 = vld [vmem:[%s13 + $0x8] sm:$0xf]
    %v2175 = vld [vmem:[%s13 + $0xc] sm:$0xf]
    %v2176 = vld [vmem:[%s13 + $0x10] sm:$0xf]
    %v2177 = vld [vmem:[%s13 + $0x14] sm:$0xf]
    %v2178 = vld [vmem:[%s13 + $0x18] sm:$0xf]
    %v2179 = vld [vmem:[%s13 + $0x1c] sm:$0xf]
    %v2180 = vld [vmem:[%s13 + $0x20] sm:$0xf]
    %v2181 = vld [vmem:[%s13 + $0x24] sm:$0xf]
    %v2182 = vld [vmem:[%s13 + $0x28] sm:$0xf]
    %v2183 = vld [vmem:[%s13 + $0x2c] sm:$0xf]
    %v2184 = vld [vmem:[%s13 + $0x30] sm:$0xf]
    %v2185 = vld [vmem:[%s13 + $0x34] sm:$0xf]
    %v2186 = vld [vmem:[%s13 + $0x38] sm:$0xf]
    %v2187 = vld [vmem:[%s13 + $0x3c] sm:$0xf]
    %v2188 = vld [vmem:[%s13 + $0x40] sm:$0xf]
    %v2189 = vld [vmem:[%s13 + $0x44] sm:$0xf]
    %v2190 = vld [vmem:[%s13 + $0x48] sm:$0xf]
    %v2191 = vld [vmem:[%s13 + $0x4c] sm:$0xf]
    %v2192 = vld [vmem:[%s13 + $0x50] sm:$0xf]
    %v2193 = vld [vmem:[%s13 + $0x54] sm:$0xf]
    %v2194 = vld [vmem:[%s13 + $0x58] sm:$0xf]
    %v2195 = vld [vmem:[%s13 + $0x5c] sm:$0xf]
    %v2196 = vld [vmem:[%s13 + $0x60] sm:$0xf]
    %v2197 = vld [vmem:[%s13 + $0x64] sm:$0xf]
    %v2198 = vld [vmem:[%s13 + $0x68] sm:$0xf]
    %v2199 = vld [vmem:[%s13 + $0x6c] sm:$0xf]
    %v2200 = vld [vmem:[%s13 + $0x70] sm:$0xf]
    %v2201 = vld [vmem:[%s13 + $0x74] sm:$0xf]
    %v2202 = vld [vmem:[%s13 + $0x78] sm:$0xf]
    %v2203 = vld [vmem:[%s13 + $0x7c] sm:$0xf]
    %v2204 = vld [vmem:[%s13 + $0x80] sm:$0xf]
    %v2205 = vld [vmem:[%s13 + $0x84] sm:$0xf]
    %v2206 = vld [vmem:[%s13 + $0x88] sm:$0xf]
    %v2207 = vld [vmem:[%s13 + $0x8c] sm:$0xf]
    %v2208 = vld [vmem:[%s13 + $0x90] sm:$0xf]
    %v2209 = vld [vmem:[%s13 + $0x94] sm:$0xf]
    %v2210 = vld [vmem:[%s13 + $0x98] sm:$0xf]
    %v2211 = vld [vmem:[%s13 + $0x9c] sm:$0xf]
    %v2212 = vld [vmem:[%s13 + $0xa0] sm:$0xf]
    %v2213 = vld [vmem:[%s13 + $0xa4] sm:$0xf]
    %v2214 = vld [vmem:[%s13 + $0xa8] sm:$0xf]
    %v2215 = vld [vmem:[%s13 + $0xac] sm:$0xf]
    %v2216 = vld [vmem:[%s13 + $0xb0] sm:$0xf]
    %v2217 = vld [vmem:[%s13 + $0xb4] sm:$0xf]
    %v2218 = vld [vmem:[%s13 + $0xb8] sm:$0xf]
    %v2219 = vld [vmem:[%s13 + $0xbc] sm:$0xf]
    %v2220 = vld [vmem:[%s13 + $0xc0] sm:$0xf]
    %v2221 = vld [vmem:[%s13 + $0xc4] sm:$0xf]
    %v2222 = vld [vmem:[%s13 + $0xc8] sm:$0xf]
    %v2223 = vld [vmem:[%s13 + $0xcc] sm:$0xf]
    %v2224 = vld [vmem:[%s13 + $0xd0] sm:$0xf]
    %v2225 = vld [vmem:[%s13 + $0xd4] sm:$0xf]
    %v2226 = vld [vmem:[%s13 + $0xd8] sm:$0xf]
    %v2227 = vld [vmem:[%s13 + $0xdc] sm:$0xf]
    %v2228 = vld [vmem:[%s13 + $0xe0] sm:$0xf]
    %v2229 = vld [vmem:[%s13 + $0xe4] sm:$0xf]
    %v2230 = vld [vmem:[%s13 + $0xe8] sm:$0xf]
    %v2231 = vld [vmem:[%s13 + $0xec] sm:$0xf]
    %v2232 = vld [vmem:[%s13 + $0xf0] sm:$0xf]
    %v2233 = vld [vmem:[%s13 + $0xf4] sm:$0xf]
    %v2234 = vld [vmem:[%s13 + $0xf8] sm:$0xf]
    %v2235 = vld [vmem:[%s13 + $0xfc] sm:$0xf]
    %v2300 = vunpack.c.l.b16 %v2172
    %v2301 = vunpack.c.l.b16 %v2173
    %v2302 = vunpack.c.l.b16 %v2174
    %v2303 = vunpack.c.l.b16 %v2175
    %v2304 = vunpack.c.l.b16 %v2176
    %v2305 = vunpack.c.l.b16 %v2177
    %v2306 = vunpack.c.l.b16 %v2178
    %v2307 = vunpack.c.l.b16 %v2179
    %v2308 = vunpack.c.l.b16 %v2180
    %v2309 = vunpack.c.l.b16 %v2181
    %v2310 = vunpack.c.l.b16 %v2182
    %v2311 = vunpack.c.l.b16 %v2183
    %v2312 = vunpack.c.l.b16 %v2184
    %v2313 = vunpack.c.l.b16 %v2185
    %v2314 = vunpack.c.l.b16 %v2186
    %v2315 = vunpack.c.l.b16 %v2187
    %v2316 = vunpack.c.l.b16 %v2188
    %v2317 = vunpack.c.l.b16 %v2189
    %v2318 = vunpack.c.l.b16 %v2190
    %v2319 = vunpack.c.l.b16 %v2191
    %v2320 = vunpack.c.l.b16 %v2192
    %v2321 = vunpack.c.l.b16 %v2193
    %v2322 = vunpack.c.l.b16 %v2194
    %v2323 = vunpack.c.l.b16 %v2195
    %v2324 = vunpack.c.l.b16 %v2196
    %v2325 = vunpack.c.l.b16 %v2197
    %v2326 = vunpack.c.l.b16 %v2198
    %v2327 = vunpack.c.l.b16 %v2199
    %v2328 = vunpack.c.l.b16 %v2200
    %v2329 = vunpack.c.l.b16 %v2201
    %v2330 = vunpack.c.l.b16 %v2202
    %v2331 = vunpack.c.l.b16 %v2203
    %v2332 = vunpack.c.l.b16 %v2204
    %v2333 = vunpack.c.l.b16 %v2205
    %v2334 = vunpack.c.l.b16 %v2206
    %v2335 = vunpack.c.l.b16 %v2207
    %v2336 = vunpack.c.l.b16 %v2208
    %v2337 = vunpack.c.l.b16 %v2209
    %v2338 = vunpack.c.l.b16 %v2210
    %v2339 = vunpack.c.l.b16 %v2211
    %v2340 = vunpack.c.l.b16 %v2212
    %v2341 = vunpack.c.l.b16 %v2213
    %v2342 = vunpack.c.l.b16 %v2214
    %v2343 = vunpack.c.l.b16 %v2215
    %v2344 = vunpack.c.l.b16 %v2216
    %v2345 = vunpack.c.l.b16 %v2217
    %v2346 = vunpack.c.l.b16 %v2218
    %v2347 = vunpack.c.l.b16 %v2219
    %v2348 = vunpack.c.l.b16 %v2220
    %v2349 = vunpack.c.l.b16 %v2221
    %v2350 = vunpack.c.l.b16 %v2222
    %v2351 = vunpack.c.l.b16 %v2223
    %v2352 = vunpack.c.l.b16 %v2224
    %v2353 = vunpack.c.l.b16 %v2225
    %v2354 = vunpack.c.l.b16 %v2226
    %v2355 = vunpack.c.l.b16 %v2227
    %v2356 = vunpack.c.l.b16 %v2228
    %v2357 = vunpack.c.l.b16 %v2229
    %v2358 = vunpack.c.l.b16 %v2230
    %v2359 = vunpack.c.l.b16 %v2231
    %v2360 = vunpack.c.l.b16 %v2232
    %v2361 = vunpack.c.l.b16 %v2233
    %v2362 = vunpack.c.l.b16 %v2234
    %v2363 = vunpack.c.l.b16 %v2235
    %v2364 = vpack.c.b16 %v2301, %v2300
    %v2365 = vpack.c.b16 %v2303, %v2302
    %v2366 = vpack.c.b16 %v2305, %v2304
    %v2367 = vpack.c.b16 %v2307, %v2306
    %v2368 = vpack.c.b16 %v2309, %v2308
    %v2369 = vpack.c.b16 %v2311, %v2310
    %v2370 = vpack.c.b16 %v2313, %v2312
    %v2371 = vpack.c.b16 %v2315, %v2314
    %v2372 = vpack.c.b16 %v2317, %v2316
    %v2373 = vpack.c.b16 %v2319, %v2318
    %v2374 = vpack.c.b16 %v2321, %v2320
    %v2375 = vpack.c.b16 %v2323, %v2322
    %v2376 = vpack.c.b16 %v2325, %v2324
    %v2377 = vpack.c.b16 %v2327, %v2326
    %v2378 = vpack.c.b16 %v2329, %v2328
    %v2379 = vpack.c.b16 %v2331, %v2330
    %v2380 = vpack.c.b16 %v2333, %v2332
    %v2381 = vpack.c.b16 %v2335, %v2334
    %v2382 = vpack.c.b16 %v2337, %v2336
    %v2383 = vpack.c.b16 %v2339, %v2338
    %v2384 = vpack.c.b16 %v2341, %v2340
    %v2385 = vpack.c.b16 %v2343, %v2342
    %v2386 = vpack.c.b16 %v2345, %v2344
    %v2387 = vpack.c.b16 %v2347, %v2346
    %v2388 = vpack.c.b16 %v2349, %v2348
    %v2389 = vpack.c.b16 %v2351, %v2350
    %v2390 = vpack.c.b16 %v2353, %v2352
    %v2391 = vpack.c.b16 %v2355, %v2354
    %v2392 = vpack.c.b16 %v2357, %v2356
    %v2393 = vpack.c.b16 %v2359, %v2358
    %v2394 = vpack.c.b16 %v2361, %v2360
    %v2395 = vpack.c.b16 %v2363, %v2362
    %2428 = vmatprep.subr.bf16.mxu0 0
    %2429 = vmatpush1.bf16.msra.mxu0 %v2371
    %2430 = vmatprep.subr.bf16.mxu0 0
    %2431 = vmatpush1.bf16.msra.mxu0 %v2370
    %2432 = vmatprep.subr.bf16.mxu0 0
    %2433 = vmatpush1.bf16.msra.mxu0 %v2369
    %2434 = vmatprep.subr.bf16.mxu0 0
    %2435 = vmatpush1.bf16.msra.mxu0 %v2368
    %2436 = vmatprep.subr.bf16.mxu0 0
    %2437 = vmatpush1.bf16.msra.mxu0 %v2367
    %2438 = vmatprep.subr.bf16.mxu0 0
    %2439 = vmatpush1.bf16.msra.mxu0 %v2366
    %2440 = vmatprep.subr.bf16.mxu0 0
    %2441 = vmatpush1.bf16.msra.mxu0 %v2365
    %2442 = vmatprep.subr.bf16.mxu0 0
    %2443 = vmatpush1.bf16.msra.mxu0 %v2364
    %2444 = vmatprep.subr.bf16.mxu0 0
    %2445 = vmatpush2.bf16.msra.mxu0 %v2379
    %2446 = vmatprep.subr.bf16.mxu0 0
    %2447 = vmatpush2.bf16.msra.mxu0 %v2378
    %2448 = vmatprep.subr.bf16.mxu0 0
    %2449 = vmatpush2.bf16.msra.mxu0 %v2377
    %2450 = vmatprep.subr.bf16.mxu0 0
    %2451 = vmatpush2.bf16.msra.mxu0 %v2376
    %2452 = vmatprep.subr.bf16.mxu0 0
    %2453 = vmatpush2.bf16.msra.mxu0 %v2375
    %2454 = vmatprep.subr.bf16.mxu0 0
    %2455 = vmatpush2.bf16.msra.mxu0 %v2374
    %2456 = vmatprep.subr.bf16.mxu0 0
    %2457 = vmatpush2.bf16.msra.mxu0 %v2373
    %2458 = vmatprep.subr.bf16.mxu0 0
    %2459 = vmatpush2.bf16.msra.mxu0 %v2372
    %2460 = vmatprep.mubr.bf16.mxu0 %v2169
    %2461 = vmatmul.mubr.bf16.gmra.mxu0 %v2168
    %v2462 = vpop.f32.mrf.mxu0
    %v2463 = vadd.f32 0.0, %v2462
    %v2464 = vpop.f32.mrf.mxu0
    %v2465 = vpop.f32.mrf.mxu0
    %v2466 = vadd.f32 0.0, %v2465
    %v2467 = vpop.f32.mrf.mxu0
    %2468 = vdwg.mxu0
    %2469 = vmatprep.subr.bf16.mxu0 0
    %2470 = vmatpush1.bf16.msra.mxu0 %v2387
    %2471 = vmatprep.subr.bf16.mxu0 0
    %2472 = vmatpush1.bf16.msra.mxu0 %v2386
    %2473 = vmatprep.subr.bf16.mxu0 0
    %2474 = vmatpush1.bf16.msra.mxu0 %v2385
    %2475 = vmatprep.subr.bf16.mxu0 0
    %2476 = vmatpush1.bf16.msra.mxu0 %v2384
    %2477 = vmatprep.subr.bf16.mxu0 0
    %2478 = vmatpush1.bf16.msra.mxu0 %v2383
    %2479 = vmatprep.subr.bf16.mxu0 0
    %2480 = vmatpush1.bf16.msra.mxu0 %v2382
    %2481 = vmatprep.subr.bf16.mxu0 0
    %2482 = vmatpush1.bf16.msra.mxu0 %v2381
    %2483 = vmatprep.subr.bf16.mxu0 0
    %2484 = vmatpush1.bf16.msra.mxu0 %v2380
    %2485 = vmatprep.subr.bf16.mxu0 0
    %2486 = vmatpush2.bf16.msra.mxu0 %v2395
    %2487 = vmatprep.subr.bf16.mxu0 0
    %2488 = vmatpush2.bf16.msra.mxu0 %v2394
    %2489 = vmatprep.subr.bf16.mxu0 0
    %2490 = vmatpush2.bf16.msra.mxu0 %v2393
    %2491 = vmatprep.subr.bf16.mxu0 0
    %2492 = vmatpush2.bf16.msra.mxu0 %v2392
    %2493 = vmatprep.subr.bf16.mxu0 0
    %2494 = vmatpush2.bf16.msra.mxu0 %v2391
    %2495 = vmatprep.subr.bf16.mxu0 0
    %2496 = vmatpush2.bf16.msra.mxu0 %v2390
    %2497 = vmatprep.subr.bf16.mxu0 0
    %2498 = vmatpush2.bf16.msra.mxu0 %v2389
    %2499 = vmatprep.subr.bf16.mxu0 0
    %2500 = vmatpush2.bf16.msra.mxu0 %v2388
    %2501 = vmatprep.mubr.bf16.mxu0 %v2171
    %2502 = vmatmul.mubr.bf16.gmra.mxu0 %v2170
    %v2503 = vpop.f32.mrf.mxu0
    %v2504 = vadd.f32 %v2463, %v2503
    %v2505 = vpop.f32.mrf.mxu0
    %v2506 = vpop.f32.mrf.mxu0
    %v2507 = vadd.f32 %v2466, %v2506
    %v2508 = vpop.f32.mrf.mxu0
    %2509 = vdwg.mxu0
    %v2510 = vadd.f32 %v1757, %v2504
    %v2511 = vadd.f32 %v1758, %v2507
    %v2512 = vlaneseq
    %v2513 = vshrl.u32 %v2512, 7
    %v2514 = vsub.s32 5, %v2513
    %v2515 = vrot.slane %v702, %v2514
    %v2516 = vadd.f32 %v2510, %v2515
    %v2517 = vadd.f32 %v2511, %v2515
    %s2518 = scalar_lea.vmem %s8, 16
    %v2519 = vld [vmem:[%s2518] sm:$0xff]
    %v2520 = vld [vmem:[%s2518 + $0x8] sm:$0x1]
    %2521 = vadd.xlane.f32.xlu0 %v2516
    %v2522 = vpop.xlane.xlu0 %2521
    %v2523 = vsel %vm706, %v2517, 0.0
    %2524 = vadd.xlane.f32.xlu0 %v2523
    %v2525 = vpop.xlane.xlu0 %2524
    %v2526 = vmul.f32 %v2522, %v710
    %v2527 = vmul.f32 %v2525, %v710
    %v2528 = vsub.f32 %v2516, %v2526
    %v2529 = vsub.f32 %v2517, %v2527
    %v2530 = vmul.f32 %v2528, %v2528
    %v2531 = vmul.f32 %v2529, %v2529
    %2532 = vadd.xlane.f32.xlu0 %v2530
    %v2533 = vpop.xlane.xlu0 %2532
    %v2534 = vsel %vm706, %v2531, 0.0
    %2535 = vadd.xlane.f32.xlu0 %v2534
    %v2536 = vpop.xlane.xlu0 %2535
    %v2537 = vmul.f32 %v2533, %v710
    %v2538 = vmul.f32 %v2536, %v710
    %v2539 = vadd.f32 %v2537, 1e-12
    %v2540 = vadd.f32 %v2538, 1e-12
    %v2541 = vrsqrt.pop %v2539
    %v2542 = vrsqrt.pop %v2540
    %v2543 = vmul.f32 %v2528, %v2541
    %v2544 = vmul.f32 %v2529, %v2542
    %v2545 = vlaneseq
    %v2546 = vshrl.u32 %v2545, 7
    %v2547 = vsub.s32 0, %v2546
    %v2548 = vrot.slane %v2519, %v2547
    %v2549 = vmul.f32 %v2543, %v2548
    %v2550 = vmul.f32 %v2544, %v2548
    %v2551 = vlaneseq
    %v2552 = vshrl.u32 %v2551, 7
    %v2553 = vsub.s32 1, %v2552
    %v2554 = vrot.slane %v2519, %v2553
    %v2555 = vadd.f32 %v2549, %v2554
    %v2556 = vadd.f32 %v2550, %v2554
    %v2557 = vpack.c.bf16 %v2556, %v2555
    %s2558 = scalar_lea.vmem [#allocation5], 192
    %v2559 = vld [vmem:[%s2558] sm:$0xff]
    %v2560 = vld [vmem:[%s2558 + $0x8] sm:$0xf]
    %v2561 = vld [vmem:[%s2558 + $0xc] sm:$0xff]
    %v2562 = vld [vmem:[%s2558 + $0x14] sm:$0xf]
    %v2563 = vld [vmem:[%s2558 + $0x18] sm:$0xff]
    %v2564 = vld [vmem:[%s2558 + $0x20] sm:$0xf]
    %v2565 = vld [vmem:[%s2558 + $0x24] sm:$0xff]
    %v2566 = vld [vmem:[%s2558 + $0x2c] sm:$0xf]
    %v2567 = vld [vmem:[%s2558 + $0x30] sm:$0xff]
    %v2568 = vld [vmem:[%s2558 + $0x38] sm:$0xf]
    %v2569 = vld [vmem:[%s2558 + $0x3c] sm:$0xff]
    %v2570 = vld [vmem:[%s2558 + $0x44] sm:$0xf]
    %v2571 = vld [vmem:[%s2558 + $0x48] sm:$0xff]
    %v2572 = vld [vmem:[%s2558 + $0x50] sm:$0xf]
    %v2573 = vld [vmem:[%s2558 + $0x54] sm:$0xff]
    %v2574 = vld [vmem:[%s2558 + $0x5c] sm:$0xf]
    %v2575 = vld [vmem:[%s2558 + $0x60] sm:$0xff]
    %v2576 = vld [vmem:[%s2558 + $0x68] sm:$0xf]
    %v2577 = vld [vmem:[%s2558 + $0x6c] sm:$0xff]
    %v2578 = vld [vmem:[%s2558 + $0x74] sm:$0xf]
    %v2579 = vld [vmem:[%s2558 + $0x78] sm:$0xff]
    %v2580 = vld [vmem:[%s2558 + $0x80] sm:$0xf]
    %v2581 = vld [vmem:[%s2558 + $0x84] sm:$0xff]
    %v2582 = vld [vmem:[%s2558 + $0x8c] sm:$0xf]
    %v2583 = vld [vmem:[%s2558 + $0x90] sm:$0xff]
    %v2584 = vld [vmem:[%s2558 + $0x98] sm:$0xf]
    %v2585 = vld [vmem:[%s2558 + $0x9c] sm:$0xff]
    %v2586 = vld [vmem:[%s2558 + $0xa4] sm:$0xf]
    %v2587 = vld [vmem:[%s2558 + $0xa8] sm:$0xff]
    %v2588 = vld [vmem:[%s2558 + $0xb0] sm:$0xf]
    %v2589 = vld [vmem:[%s2558 + $0xb4] sm:$0xff]
    %v2590 = vld [vmem:[%s2558 + $0xbc] sm:$0xf]
    %v2623 = vunpack.c.l.b16 %v2559
    %v2624 = vunpack.c.h.b16 %v2559
    %v2625 = vunpack.c.l.b16 %v2560
    %v2626 = vunpack.c.l.b16 %v2561
    %v2627 = vunpack.c.h.b16 %v2561
    %v2628 = vunpack.c.l.b16 %v2562
    %v2629 = vunpack.c.l.b16 %v2563
    %v2630 = vunpack.c.h.b16 %v2563
    %v2631 = vunpack.c.l.b16 %v2564
    %v2632 = vunpack.c.l.b16 %v2565
    %v2633 = vunpack.c.h.b16 %v2565
    %v2634 = vunpack.c.l.b16 %v2566
    %v2635 = vunpack.c.l.b16 %v2567
    %v2636 = vunpack.c.h.b16 %v2567
    %v2637 = vunpack.c.l.b16 %v2568
    %v2638 = vunpack.c.l.b16 %v2569
    %v2639 = vunpack.c.h.b16 %v2569
    %v2640 = vunpack.c.l.b16 %v2570
    %v2641 = vunpack.c.l.b16 %v2571
    %v2642 = vunpack.c.h.b16 %v2571
    %v2643 = vunpack.c.l.b16 %v2572
    %v2644 = vunpack.c.l.b16 %v2573
    %v2645 = vunpack.c.h.b16 %v2573
    %v2646 = vunpack.c.l.b16 %v2574
    %v2647 = vunpack.c.l.b16 %v2575
    %v2648 = vunpack.c.h.b16 %v2575
    %v2649 = vunpack.c.l.b16 %v2576
    %v2650 = vunpack.c.l.b16 %v2577
    %v2651 = vunpack.c.h.b16 %v2577
    %v2652 = vunpack.c.l.b16 %v2578
    %v2653 = vunpack.c.l.b16 %v2579
    %v2654 = vunpack.c.h.b16 %v2579
    %v2655 = vunpack.c.l.b16 %v2580
    %v2656 = vunpack.c.l.b16 %v2581
    %v2657 = vunpack.c.h.b16 %v2581
    %v2658 = vunpack.c.l.b16 %v2582
    %v2659 = vunpack.c.l.b16 %v2583
    %v2660 = vunpack.c.h.b16 %v2583
    %v2661 = vunpack.c.l.b16 %v2584
    %v2662 = vunpack.c.l.b16 %v2585
    %v2663 = vunpack.c.h.b16 %v2585
    %v2664 = vunpack.c.l.b16 %v2586
    %v2665 = vunpack.c.l.b16 %v2587
    %v2666 = vunpack.c.h.b16 %v2587
    %v2667 = vunpack.c.l.b16 %v2588
    %v2668 = vunpack.c.l.b16 %v2589
    %v2669 = vunpack.c.h.b16 %v2589
    %v2670 = vunpack.c.l.b16 %v2590
    %v2671 = vpack.c.b16 %v2626, %v2623
    %v2672 = vpack.c.b16 %v2627, %v2624
    %v2673 = vpack.c.b16 %v2628, %v2625
    %v2674 = vpack.c.b16 %v2632, %v2629
    %v2675 = vpack.c.b16 %v2633, %v2630
    %v2676 = vpack.c.b16 %v2634, %v2631
    %v2677 = vpack.c.b16 %v2638, %v2635
    %v2678 = vpack.c.b16 %v2639, %v2636
    %v2679 = vpack.c.b16 %v2640, %v2637
    %v2680 = vpack.c.b16 %v2644, %v2641
    %v2681 = vpack.c.b16 %v2645, %v2642
    %v2682 = vpack.c.b16 %v2646, %v2643
    %v2683 = vpack.c.b16 %v2650, %v2647
    %v2684 = vpack.c.b16 %v2651, %v2648
    %v2685 = vpack.c.b16 %v2652, %v2649
    %v2686 = vpack.c.b16 %v2656, %v2653
    %v2687 = vpack.c.b16 %v2657, %v2654
    %v2688 = vpack.c.b16 %v2658, %v2655
    %v2689 = vpack.c.b16 %v2662, %v2659
    %v2690 = vpack.c.b16 %v2663, %v2660
    %v2691 = vpack.c.b16 %v2664, %v2661
    %v2692 = vpack.c.b16 %v2668, %v2665
    %v2693 = vpack.c.b16 %v2669, %v2666
    %v2694 = vpack.c.b16 %v2670, %v2667
    %2719 = vmatprep.subr.bf16.mxu0 %v2693
    %2720 = vmatpush1.bf16.msra.mxu0 %v2692
    %2721 = vmatprep.subr.bf16.mxu0 %v2690
    %2722 = vmatpush1.bf16.msra.mxu0 %v2689
    %2723 = vmatprep.subr.bf16.mxu0 %v2687
    %2724 = vmatpush1.bf16.msra.mxu0 %v2686
    %2725 = vmatprep.subr.bf16.mxu0 %v2684
    %2726 = vmatpush1.bf16.msra.mxu0 %v2683
    %2727 = vmatprep.subr.bf16.mxu0 %v2681
    %2728 = vmatpush1.bf16.msra.mxu0 %v2680
    %2729 = vmatprep.subr.bf16.mxu0 %v2678
    %2730 = vmatpush1.bf16.msra.mxu0 %v2677
    %2731 = vmatprep.subr.bf16.mxu0 %v2675
    %2732 = vmatpush1.bf16.msra.mxu0 %v2674
    %2733 = vmatprep.subr.bf16.mxu0 %v2672
    %2734 = vmatpush1.bf16.msra.mxu0 %v2671
    %2735 = vmatprep.subr.bf16.mxu0 0
    %2736 = vmatpush2.bf16.msra.mxu0 0
    %2737 = vmatprep.subr.bf16.mxu0 0
    %2738 = vmatpush2.bf16.msra.mxu0 0
    %2739 = vmatprep.subr.bf16.mxu0 0
    %2740 = vmatpush2.bf16.msra.mxu0 0
    %2741 = vmatprep.subr.bf16.mxu0 0
    %2742 = vmatpush2.bf16.msra.mxu0 0
    %2743 = vmatprep.subr.bf16.mxu0 0
    %2744 = vmatpush2.bf16.msra.mxu0 0
    %2745 = vmatprep.subr.bf16.mxu0 0
    %2746 = vmatpush2.bf16.msra.mxu0 0
    %2747 = vmatprep.subr.bf16.mxu0 0
    %2748 = vmatpush2.bf16.msra.mxu0 0
    %2749 = vmatprep.subr.bf16.mxu0 0
    %2750 = vmatpush2.bf16.msra.mxu0 0
    %2751 = vmatprep.mubr.bf16.mxu0 0
    %2752 = vmatmul.mubr.bf16.gmra.mxu0 %v2557
    %v2753 = vpop.f32.mrf.mxu0
    %v2754 = vadd.f32 0.0, %v2753
    %v2755 = vpop.f32.mrf.mxu0
    %v2756 = vadd.f32 0.0, %v2755
    %v2757 = vpop.f32.mrf.mxu0
    %v2758 = vadd.f32 0.0, %v2757
    %v2759 = vpop.f32.mrf.mxu0
    %v2760 = vadd.f32 0.0, %v2759
    %2761 = vdwg.mxu0
    %2762 = vmatprep.subr.bf16.mxu0 0
    %2763 = vmatpush1.bf16.msra.mxu0 %v2694
    %2764 = vmatprep.subr.bf16.mxu0 0
    %2765 = vmatpush1.bf16.msra.mxu0 %v2691
    %2766 = vmatprep.subr.bf16.mxu0 0
    %2767 = vmatpush1.bf16.msra.mxu0 %v2688
    %2768 = vmatprep.subr.bf16.mxu0 0
    %2769 = vmatpush1.bf16.msra.mxu0 %v2685
    %2770 = vmatprep.subr.bf16.mxu0 0
    %2771 = vmatpush1.bf16.msra.mxu0 %v2682
    %2772 = vmatprep.subr.bf16.mxu0 0
    %2773 = vmatpush1.bf16.msra.mxu0 %v2679
    %2774 = vmatprep.subr.bf16.mxu0 0
    %2775 = vmatpush1.bf16.msra.mxu0 %v2676
    %2776 = vmatprep.subr.bf16.mxu0 0
    %2777 = vmatpush1.bf16.msra.mxu0 %v2673
    %2778 = vmatprep.subr.bf16.mxu0 0
    %2779 = vmatpush2.bf16.msra.mxu0 0
    %2780 = vmatprep.subr.bf16.mxu0 0
    %2781 = vmatpush2.bf16.msra.mxu0 0
    %2782 = vmatprep.subr.bf16.mxu0 0
    %2783 = vmatpush2.bf16.msra.mxu0 0
    %2784 = vmatprep.subr.bf16.mxu0 0
    %2785 = vmatpush2.bf16.msra.mxu0 0
    %2786 = vmatprep.subr.bf16.mxu0 0
    %2787 = vmatpush2.bf16.msra.mxu0 0
    %2788 = vmatprep.subr.bf16.mxu0 0
    %2789 = vmatpush2.bf16.msra.mxu0 0
    %2790 = vmatprep.subr.bf16.mxu0 0
    %2791 = vmatpush2.bf16.msra.mxu0 0
    %2792 = vmatprep.subr.bf16.mxu0 0
    %2793 = vmatpush2.bf16.msra.mxu0 0
    %2794 = vmatprep.mubr.bf16.mxu0 0
    %2795 = vmatmul.mubr.bf16.gmra.mxu0 %v2557
    %v2796 = vpop.f32.mrf.mxu0
    %v2797 = vadd.f32 0.0, %v2796
    %v2798 = vpop.f32.mrf.mxu0
    %v2799 = vpop.f32.mrf.mxu0
    %v2800 = vadd.f32 0.0, %v2799
    %v2801 = vpop.f32.mrf.mxu0
    %2802 = vdwg.mxu0
    %s2803 = scalar_lea.vmem %s11, 64
    %v2804 = vld [vmem:[%s2803] sm:$0xf]
    %v2805 = vld [vmem:[%s2803 + $0x4] sm:$0xf]
    %v2806 = vld [vmem:[%s2803 + $0x8] sm:$0xf]
    %v2807 = vld [vmem:[%s2803 + $0xc] sm:$0xf]
    %v2808 = vld [vmem:[%s2803 + $0x10] sm:$0xf]
    %v2809 = vld [vmem:[%s2803 + $0x14] sm:$0xf]
    %v2810 = vld [vmem:[%s2803 + $0x18] sm:$0xf]
    %v2811 = vld [vmem:[%s2803 + $0x1c] sm:$0xf]
    %v2812 = vld [vmem:[%s2803 + $0x20] sm:$0xf]
    %v2813 = vld [vmem:[%s2803 + $0x24] sm:$0xf]
    %v2814 = vld [vmem:[%s2803 + $0x28] sm:$0xf]
    %v2815 = vld [vmem:[%s2803 + $0x2c] sm:$0xf]
    %v2816 = vld [vmem:[%s2803 + $0x30] sm:$0xf]
    %v2817 = vld [vmem:[%s2803 + $0x34] sm:$0xf]
    %v2818 = vld [vmem:[%s2803 + $0x38] sm:$0xf]
    %v2819 = vld [vmem:[%s2803 + $0x3c] sm:$0xf]
    %v2820 = vlaneseq
    %v2821 = vshrl.u32 %v2820, 7
    %v2822 = vsub.s32 6, %v2821
    %v2823 = vrot.slane %v2519, %v2822
    %v2824 = vadd.f32 %v2754, %v2823
    %v2825 = vadd.f32 %v2758, %v2823
    %v2826 = vpack.c.bf16 %v2825, %v2824
    %v2827 = vlaneseq
    %v2828 = vshrl.u32 %v2827, 7
    %v2829 = vsub.s32 7, %v2828
    %v2830 = vrot.slane %v2519, %v2829
    %v2831 = vadd.f32 %v2756, %v2830
    %v2832 = vadd.f32 %v2760, %v2830
    %v2833 = vpack.c.bf16 %v2832, %v2831
    %v2834 = vlaneseq
    %v2835 = vshrl.u32 %v2834, 7
    %v2836 = vsub.s32 0, %v2835
    %v2837 = vrot.slane %v2520, %v2836
    %v2838 = vadd.f32 %v2797, %v2837
    %v2839 = vadd.f32 %v2800, %v2837
    %v2840 = vpack.c.bf16 %v2839, %v2838
    %v2842 = vsel %vm1026, %v2826, 0
    %v2845 = vsel %vm1026, %v2833, 0
    %2847 = vmatprep.subr.bf16.mxu0 0
    %2848 = vmatpush1.bf16.xpose.msra.mxu0 0
    %2849 = vmatprep.subr.bf16.mxu0 0
    %2850 = vmatpush1.bf16.xpose.msra.mxu0 0
    %2851 = vmatprep.subr.bf16.mxu0 0
    %2852 = vmatpush1.bf16.xpose.msra.mxu0 0
    %2853 = vmatprep.subr.bf16.mxu0 0
    %2854 = vmatpush1.bf16.xpose.msra.mxu0 0
    %2855 = vmatprep.subr.bf16.mxu0 0
    %2856 = vmatpush1.bf16.xpose.msra.mxu0 0
    %2857 = vmatprep.subr.bf16.mxu0 0
    %2858 = vmatpush1.bf16.xpose.msra.mxu0 0
    %2859 = vmatprep.subr.bf16.mxu0 0
    %2860 = vmatpush1.bf16.xpose.msra.mxu0 0
    %2861 = vmatprep.subr.bf16.mxu0 0
    %2862 = vmatpush1.bf16.xpose.msra.mxu0 %v2845
    %2863 = vmatprep.subr.bf16.mxu0 0
    %2864 = vmatpush2.bf16.xpose.msra.mxu0 0
    %2865 = vmatprep.subr.bf16.mxu0 0
    %2866 = vmatpush2.bf16.xpose.msra.mxu0 0
    %2867 = vmatprep.subr.bf16.mxu0 0
    %2868 = vmatpush2.bf16.xpose.msra.mxu0 0
    %2869 = vmatprep.subr.bf16.mxu0 0
    %2870 = vmatpush2.bf16.xpose.msra.mxu0 0
    %2871 = vmatprep.subr.bf16.mxu0 0
    %2872 = vmatpush2.bf16.xpose.msra.mxu0 0
    %2873 = vmatprep.subr.bf16.mxu0 0
    %2874 = vmatpush2.bf16.xpose.msra.mxu0 0
    %2875 = vmatprep.subr.bf16.mxu0 0
    %2876 = vmatpush2.bf16.xpose.msra.mxu0 0
    %2877 = vmatprep.subr.bf16.mxu0 0
    %2878 = vmatpush2.bf16.xpose.msra.mxu0 0
    %2879 = vmatprep.mubr.bf16.mxu0 0
    %2880 = vmatmul.mubr.bf16.gmra.mxu0 %v2842
    %v2881 = vpop.f32.mrf.mxu0
    %v2882 = vadd.f32 %v1024, %v2881
    %v2883 = vpop.f32.mrf.mxu0
    %v2884 = vpop.f32.mrf.mxu0
    %v2885 = vadd.f32 %v1025, %v2884
    %v2886 = vpop.f32.mrf.mxu0
    %2887 = vdwg.mxu0
    %v2888 = vsel %vm1074, %v2882, -inf
    %2889 = vmax.xlane.f32.xlu0 %v2888
    %v2890 = vpop.xlane.xlu0 %2889
    %v2891 = vsel %vm1078, %v2885, -inf
    %2892 = vmax.xlane.f32.xlu0 %v2891
    %v2893 = vpop.xlane.xlu0 %2892
    %v2894 = vsub.f32 %v2882, %v2890
    %v2895 = vsub.f32 %v2885, %v2893
    %v2896 = vmul.f32 %v2894, 1.442695
    %v2897 = vpow.pop %v2896
    %v2898 = vmul.f32 %v2895, 1.442695
    %v2899 = vpow.pop %v2898
    %v2900 = vsel %vm1074, %v2897, 0.0
    %2901 = vadd.xlane.f32.xlu0 %v2900
    %v2902 = vpop.xlane.xlu0 %2901
    %v2903 = vsel %vm1078, %v2899, 0.0
    %2904 = vadd.xlane.f32.xlu0 %v2903
    %v2905 = vpop.xlane.xlu0 %2904
    %v2906 = vrcp.pop %v2902
    %v2907 = vrcp.pop %v2905
    %v2908 = vmul.f32 %v2897, %v2906
    %v2909 = vmul.f32 %v2899, %v2907
    %v2910 = vpack.c.bf16 %v2909, %v2908
    %v2912 = vsel %vm1074, %v2910, 0
    %v2915 = vsel %vm1102, %v2840, 0
    %2917 = vmatprep.subr.bf16.mxu0 0
    %2918 = vmatpush1.bf16.msra.mxu0 0
    %2919 = vmatprep.subr.bf16.mxu0 0
    %2920 = vmatpush1.bf16.msra.mxu0 0
    %2921 = vmatprep.subr.bf16.mxu0 0
    %2922 = vmatpush1.bf16.msra.mxu0 0
    %2923 = vmatprep.subr.bf16.mxu0 0
    %2924 = vmatpush1.bf16.msra.mxu0 0
    %2925 = vmatprep.subr.bf16.mxu0 0
    %2926 = vmatpush1.bf16.msra.mxu0 0
    %2927 = vmatprep.subr.bf16.mxu0 0
    %2928 = vmatpush1.bf16.msra.mxu0 0
    %2929 = vmatprep.subr.bf16.mxu0 0
    %2930 = vmatpush1.bf16.msra.mxu0 0
    %2931 = vmatprep.subr.bf16.mxu0 0
    %2932 = vmatpush1.bf16.msra.mxu0 %v2915
    %2933 = vmatprep.subr.bf16.mxu0 0
    %2934 = vmatpush2.bf16.msra.mxu0 0
    %2935 = vmatprep.subr.bf16.mxu0 0
    %2936 = vmatpush2.bf16.msra.mxu0 0
    %2937 = vmatprep.subr.bf16.mxu0 0
    %2938 = vmatpush2.bf16.msra.mxu0 0
    %2939 = vmatprep.subr.bf16.mxu0 0
    %2940 = vmatpush2.bf16.msra.mxu0 0
    %2941 = vmatprep.subr.bf16.mxu0 0
    %2942 = vmatpush2.bf16.msra.mxu0 0
    %2943 = vmatprep.subr.bf16.mxu0 0
    %2944 = vmatpush2.bf16.msra.mxu0 0
    %2945 = vmatprep.subr.bf16.mxu0 0
    %2946 = vmatpush2.bf16.msra.mxu0 0
    %2947 = vmatprep.subr.bf16.mxu0 0
    %2948 = vmatpush2.bf16.msra.mxu0 0
    %2949 = vmatprep.mubr.bf16.mxu0 0
    %2950 = vmatmul.mubr.bf16.gmra.mxu0 %v2912
    %v2951 = vpop.f32.mrf.mxu0
    %v2952 = vadd.f32 0.0, %v2951
    %v2953 = vpop.f32.mrf.mxu0
    %v2954 = vpop.f32.mrf.mxu0
    %v2955 = vadd.f32 0.0, %v2954
    %v2956 = vpop.f32.mrf.mxu0
    %2957 = vdwg.mxu0
    %v2958 = vpack.c.bf16 %v2955, %v2952
    %2960 = vrot.lane.b32.xlu0 %v2826, 96
    %v2961 = vpop.permute.xlu0 %2960
    %2963 = vrot.lane.b32.xlu0 %v2833, 96
    %v2964 = vpop.permute.xlu0 %2963
    %v2966 = vsel %vm1026, %v2961, 0
    %v2969 = vsel %vm1026, %v2964, 0
    %2971 = vmatprep.subr.bf16.mxu0 0
    %2972 = vmatpush1.bf16.xpose.msra.mxu0 0
    %2973 = vmatprep.subr.bf16.mxu0 0
    %2974 = vmatpush1.bf16.xpose.msra.mxu0 0
    %2975 = vmatprep.subr.bf16.mxu0 0
    %2976 = vmatpush1.bf16.xpose.msra.mxu0 0
    %2977 = vmatprep.subr.bf16.mxu0 0
    %2978 = vmatpush1.bf16.xpose.msra.mxu0 0
    %2979 = vmatprep.subr.bf16.mxu0 0
    %2980 = vmatpush1.bf16.xpose.msra.mxu0 0
    %2981 = vmatprep.subr.bf16.mxu0 0
    %2982 = vmatpush1.bf16.xpose.msra.mxu0 0
    %2983 = vmatprep.subr.bf16.mxu0 0
    %2984 = vmatpush1.bf16.xpose.msra.mxu0 0
    %2985 = vmatprep.subr.bf16.mxu0 0
    %2986 = vmatpush1.bf16.xpose.msra.mxu0 %v2969
    %2987 = vmatprep.subr.bf16.mxu0 0
    %2988 = vmatpush2.bf16.xpose.msra.mxu0 0
    %2989 = vmatprep.subr.bf16.mxu0 0
    %2990 = vmatpush2.bf16.xpose.msra.mxu0 0
    %2991 = vmatprep.subr.bf16.mxu0 0
    %2992 = vmatpush2.bf16.xpose.msra.mxu0 0
    %2993 = vmatprep.subr.bf16.mxu0 0
    %2994 = vmatpush2.bf16.xpose.msra.mxu0 0
    %2995 = vmatprep.subr.bf16.mxu0 0
    %2996 = vmatpush2.bf16.xpose.msra.mxu0 0
    %2997 = vmatprep.subr.bf16.mxu0 0
    %2998 = vmatpush2.bf16.xpose.msra.mxu0 0
    %2999 = vmatprep.subr.bf16.mxu0 0
    %3000 = vmatpush2.bf16.xpose.msra.mxu0 0
    %3001 = vmatprep.subr.bf16.mxu0 0
    %3002 = vmatpush2.bf16.xpose.msra.mxu0 0
    %3003 = vmatprep.mubr.bf16.mxu0 0
    %3004 = vmatmul.mubr.bf16.gmra.mxu0 %v2966
    %v3005 = vpop.f32.mrf.mxu0
    %v3006 = vadd.f32 %v1024, %v3005
    %v3007 = vpop.f32.mrf.mxu0
    %v3008 = vpop.f32.mrf.mxu0
    %v3009 = vadd.f32 %v1025, %v3008
    %v3010 = vpop.f32.mrf.mxu0
    %3011 = vdwg.mxu0
    %v3012 = vsel %vm1074, %v3006, -inf
    %3013 = vmax.xlane.f32.xlu0 %v3012
    %v3014 = vpop.xlane.xlu0 %3013
    %v3015 = vsel %vm1078, %v3009, -inf
    %3016 = vmax.xlane.f32.xlu0 %v3015
    %v3017 = vpop.xlane.xlu0 %3016
    %v3018 = vsub.f32 %v3006, %v3014
    %v3019 = vsub.f32 %v3009, %v3017
    %v3020 = vmul.f32 %v3018, 1.442695
    %v3021 = vpow.pop %v3020
    %v3022 = vmul.f32 %v3019, 1.442695
    %v3023 = vpow.pop %v3022
    %v3024 = vsel %vm1074, %v3021, 0.0
    %3025 = vadd.xlane.f32.xlu0 %v3024
    %v3026 = vpop.xlane.xlu0 %3025
    %v3027 = vsel %vm1078, %v3023, 0.0
    %3028 = vadd.xlane.f32.xlu0 %v3027
    %v3029 = vpop.xlane.xlu0 %3028
    %v3030 = vrcp.pop %v3026
    %v3031 = vrcp.pop %v3029
    %v3032 = vmul.f32 %v3021, %v3030
    %v3033 = vmul.f32 %v3023, %v3031
    %v3034 = vpack.c.bf16 %v3033, %v3032
    %3036 = vrot.lane.b32.xlu0 %v2840, 96
    %v3037 = vpop.permute.xlu0 %3036
    %v3039 = vsel %vm1074, %v3034, 0
    %v3042 = vsel %vm1102, %v3037, 0
    %3044 = vmatprep.subr.bf16.mxu0 0
    %3045 = vmatpush1.bf16.msra.mxu0 0
    %3046 = vmatprep.subr.bf16.mxu0 0
    %3047 = vmatpush1.bf16.msra.mxu0 0
    %3048 = vmatprep.subr.bf16.mxu0 0
    %3049 = vmatpush1.bf16.msra.mxu0 0
    %3050 = vmatprep.subr.bf16.mxu0 0
    %3051 = vmatpush1.bf16.msra.mxu0 0
    %3052 = vmatprep.subr.bf16.mxu0 0
    %3053 = vmatpush1.bf16.msra.mxu0 0
    %3054 = vmatprep.subr.bf16.mxu0 0
    %3055 = vmatpush1.bf16.msra.mxu0 0
    %3056 = vmatprep.subr.bf16.mxu0 0
    %3057 = vmatpush1.bf16.msra.mxu0 0
    %3058 = vmatprep.subr.bf16.mxu0 0
    %3059 = vmatpush1.bf16.msra.mxu0 %v3042
    %3060 = vmatprep.subr.bf16.mxu0 0
    %3061 = vmatpush2.bf16.msra.mxu0 0
    %3062 = vmatprep.subr.bf16.mxu0 0
    %3063 = vmatpush2.bf16.msra.mxu0 0
    %3064 = vmatprep.subr.bf16.mxu0 0
    %3065 = vmatpush2.bf16.msra.mxu0 0
    %3066 = vmatprep.subr.bf16.mxu0 0
    %3067 = vmatpush2.bf16.msra.mxu0 0
    %3068 = vmatprep.subr.bf16.mxu0 0
    %3069 = vmatpush2.bf16.msra.mxu0 0
    %3070 = vmatprep.subr.bf16.mxu0 0
    %3071 = vmatpush2.bf16.msra.mxu0 0
    %3072 = vmatprep.subr.bf16.mxu0 0
    %3073 = vmatpush2.bf16.msra.mxu0 0
    %3074 = vmatprep.subr.bf16.mxu0 0
    %3075 = vmatpush2.bf16.msra.mxu0 0
    %3076 = vmatprep.mubr.bf16.mxu0 0
    %3077 = vmatmul.mubr.bf16.gmra.mxu0 %v3039
    %v3078 = vpop.f32.mrf.mxu0
    %v3079 = vadd.f32 0.0, %v3078
    %v3080 = vpop.f32.mrf.mxu0
    %v3081 = vpop.f32.mrf.mxu0
    %v3082 = vadd.f32 0.0, %v3081
    %v3083 = vpop.f32.mrf.mxu0
    %3084 = vdwg.mxu0
    %v3085 = vpack.c.bf16 %v3082, %v3079
    %v3090 = vunpack.c.l.b16 %v2808
    %v3091 = vunpack.c.l.b16 %v2809
    %v3092 = vunpack.c.l.b16 %v2810
    %v3093 = vunpack.c.l.b16 %v2811
    %v3094 = vpack.c.b16 %v3091, %v3090
    %v3095 = vpack.c.b16 %v3093, %v3092
    %v3099 = vsel %vm1026, %v3085, 0
    %3101 = vmatprep.subr.bf16.mxu0 0
    %3102 = vmatpush1.bf16.msra.mxu0 0
    %3103 = vmatprep.subr.bf16.mxu0 0
    %3104 = vmatpush1.bf16.msra.mxu0 0
    %3105 = vmatprep.subr.bf16.mxu0 0
    %3106 = vmatpush1.bf16.msra.mxu0 0
    %3107 = vmatprep.subr.bf16.mxu0 0
    %3108 = vmatpush1.bf16.msra.mxu0 0
    %3109 = vmatprep.subr.bf16.mxu0 0
    %3110 = vmatpush1.bf16.msra.mxu0 0
    %3111 = vmatprep.subr.bf16.mxu0 0
    %3112 = vmatpush1.bf16.msra.mxu0 0
    %3113 = vmatprep.subr.bf16.mxu0 0
    %3114 = vmatpush1.bf16.msra.mxu0 %v3095
    %3115 = vmatprep.subr.bf16.mxu0 0
    %3116 = vmatpush1.bf16.msra.mxu0 %v3094
    %3117 = vmatprep.subr.bf16.mxu0 0
    %3118 = vmatpush2.bf16.msra.mxu0 0
    %3119 = vmatprep.subr.bf16.mxu0 0
    %3120 = vmatpush2.bf16.msra.mxu0 0
    %3121 = vmatprep.subr.bf16.mxu0 0
    %3122 = vmatpush2.bf16.msra.mxu0 0
    %3123 = vmatprep.subr.bf16.mxu0 0
    %3124 = vmatpush2.bf16.msra.mxu0 0
    %3125 = vmatprep.subr.bf16.mxu0 0
    %3126 = vmatpush2.bf16.msra.mxu0 0
    %3127 = vmatprep.subr.bf16.mxu0 0
    %3128 = vmatpush2.bf16.msra.mxu0 0
    %3129 = vmatprep.subr.bf16.mxu0 0
    %3130 = vmatpush2.bf16.msra.mxu0 0
    %3131 = vmatprep.subr.bf16.mxu0 0
    %3132 = vmatpush2.bf16.msra.mxu0 0
    %3133 = vmatprep.mubr.bf16.mxu0 0
    %3134 = vmatmul.mubr.bf16.gmra.mxu0 %v3099
    %v3135 = vpop.f32.mrf.mxu0
    %v3136 = vadd.f32 0.0, %v3135
    %v3137 = vpop.f32.mrf.mxu0
    %v3138 = vpop.f32.mrf.mxu0
    %v3139 = vadd.f32 0.0, %v3138
    %v3140 = vpop.f32.mrf.mxu0
    %3141 = vdwg.mxu0
    %v3146 = vunpack.c.l.b16 %v2804
    %v3147 = vunpack.c.l.b16 %v2805
    %v3148 = vunpack.c.l.b16 %v2806
    %v3149 = vunpack.c.l.b16 %v2807
    %v3150 = vpack.c.b16 %v3147, %v3146
    %v3151 = vpack.c.b16 %v3149, %v3148
    %v3155 = vsel %vm1026, %v2958, 0
    %3157 = vmatprep.subr.bf16.mxu0 0
    %3158 = vmatpush1.bf16.msra.mxu0 0
    %3159 = vmatprep.subr.bf16.mxu0 0
    %3160 = vmatpush1.bf16.msra.mxu0 0
    %3161 = vmatprep.subr.bf16.mxu0 0
    %3162 = vmatpush1.bf16.msra.mxu0 0
    %3163 = vmatprep.subr.bf16.mxu0 0
    %3164 = vmatpush1.bf16.msra.mxu0 0
    %3165 = vmatprep.subr.bf16.mxu0 0
    %3166 = vmatpush1.bf16.msra.mxu0 0
    %3167 = vmatprep.subr.bf16.mxu0 0
    %3168 = vmatpush1.bf16.msra.mxu0 0
    %3169 = vmatprep.subr.bf16.mxu0 0
    %3170 = vmatpush1.bf16.msra.mxu0 %v3151
    %3171 = vmatprep.subr.bf16.mxu0 0
    %3172 = vmatpush1.bf16.msra.mxu0 %v3150
    %3173 = vmatprep.subr.bf16.mxu0 0
    %3174 = vmatpush2.bf16.msra.mxu0 0
    %3175 = vmatprep.subr.bf16.mxu0 0
    %3176 = vmatpush2.bf16.msra.mxu0 0
    %3177 = vmatprep.subr.bf16.mxu0 0
    %3178 = vmatpush2.bf16.msra.mxu0 0
    %3179 = vmatprep.subr.bf16.mxu0 0
    %3180 = vmatpush2.bf16.msra.mxu0 0
    %3181 = vmatprep.subr.bf16.mxu0 0
    %3182 = vmatpush2.bf16.msra.mxu0 0
    %3183 = vmatprep.subr.bf16.mxu0 0
    %3184 = vmatpush2.bf16.msra.mxu0 0
    %3185 = vmatprep.subr.bf16.mxu0 0
    %3186 = vmatpush2.bf16.msra.mxu0 0
    %3187 = vmatprep.subr.bf16.mxu0 0
    %3188 = vmatpush2.bf16.msra.mxu0 0
    %3189 = vmatprep.mubr.bf16.mxu0 0
    %3190 = vmatmul.mubr.bf16.gmra.mxu0 %v3155
    %v3191 = vpop.f32.mrf.mxu0
    %v3192 = vadd.f32 %v3136, %v3191
    %v3193 = vpop.f32.mrf.mxu0
    %v3194 = vpop.f32.mrf.mxu0
    %v3195 = vadd.f32 %v3139, %v3194
    %v3196 = vpop.f32.mrf.mxu0
    %3197 = vdwg.mxu0
    %3198 = vrot.lane.b32.xlu0 %v2826, 64
    %v3199 = vpop.permute.xlu0 %3198
    %3200 = vrot.lane.b32.xlu0 %v2833, 64
    %v3201 = vpop.permute.xlu0 %3200
    %v3203 = vsel %vm1026, %v3199, 0
    %v3206 = vsel %vm1026, %v3201, 0
    %3208 = vmatprep.subr.bf16.mxu0 0
    %3209 = vmatpush1.bf16.xpose.msra.mxu0 0
    %3210 = vmatprep.subr.bf16.mxu0 0
    %3211 = vmatpush1.bf16.xpose.msra.mxu0 0
    %3212 = vmatprep.subr.bf16.mxu0 0
    %3213 = vmatpush1.bf16.xpose.msra.mxu0 0
    %3214 = vmatprep.subr.bf16.mxu0 0
    %3215 = vmatpush1.bf16.xpose.msra.mxu0 0
    %3216 = vmatprep.subr.bf16.mxu0 0
    %3217 = vmatpush1.bf16.xpose.msra.mxu0 0
    %3218 = vmatprep.subr.bf16.mxu0 0
    %3219 = vmatpush1.bf16.xpose.msra.mxu0 0
    %3220 = vmatprep.subr.bf16.mxu0 0
    %3221 = vmatpush1.bf16.xpose.msra.mxu0 0
    %3222 = vmatprep.subr.bf16.mxu0 0
    %3223 = vmatpush1.bf16.xpose.msra.mxu0 %v3206
    %3224 = vmatprep.subr.bf16.mxu0 0
    %3225 = vmatpush2.bf16.xpose.msra.mxu0 0
    %3226 = vmatprep.subr.bf16.mxu0 0
    %3227 = vmatpush2.bf16.xpose.msra.mxu0 0
    %3228 = vmatprep.subr.bf16.mxu0 0
    %3229 = vmatpush2.bf16.xpose.msra.mxu0 0
    %3230 = vmatprep.subr.bf16.mxu0 0
    %3231 = vmatpush2.bf16.xpose.msra.mxu0 0
    %3232 = vmatprep.subr.bf16.mxu0 0
    %3233 = vmatpush2.bf16.xpose.msra.mxu0 0
    %3234 = vmatprep.subr.bf16.mxu0 0
    %3235 = vmatpush2.bf16.xpose.msra.mxu0 0
    %3236 = vmatprep.subr.bf16.mxu0 0
    %3237 = vmatpush2.bf16.xpose.msra.mxu0 0
    %3238 = vmatprep.subr.bf16.mxu0 0
    %3239 = vmatpush2.bf16.xpose.msra.mxu0 0
    %3240 = vmatprep.mubr.bf16.mxu0 0
    %3241 = vmatmul.mubr.bf16.gmra.mxu0 %v3203
    %v3242 = vpop.f32.mrf.mxu0
    %v3243 = vadd.f32 %v1024, %v3242
    %v3244 = vpop.f32.mrf.mxu0
    %v3245 = vpop.f32.mrf.mxu0
    %v3246 = vadd.f32 %v1025, %v3245
    %v3247 = vpop.f32.mrf.mxu0
    %3248 = vdwg.mxu0
    %v3249 = vsel %vm1074, %v3243, -inf
    %3250 = vmax.xlane.f32.xlu0 %v3249
    %v3251 = vpop.xlane.xlu0 %3250
    %v3252 = vsel %vm1078, %v3246, -inf
    %3253 = vmax.xlane.f32.xlu0 %v3252
    %v3254 = vpop.xlane.xlu0 %3253
    %v3255 = vsub.f32 %v3243, %v3251
    %v3256 = vsub.f32 %v3246, %v3254
    %v3257 = vmul.f32 %v3255, 1.442695
    %v3258 = vpow.pop %v3257
    %v3259 = vmul.f32 %v3256, 1.442695
    %v3260 = vpow.pop %v3259
    %v3261 = vsel %vm1074, %v3258, 0.0
    %3262 = vadd.xlane.f32.xlu0 %v3261
    %v3263 = vpop.xlane.xlu0 %3262
    %v3264 = vsel %vm1078, %v3260, 0.0
    %3265 = vadd.xlane.f32.xlu0 %v3264
    %v3266 = vpop.xlane.xlu0 %3265
    %v3267 = vrcp.pop %v3263
    %v3268 = vrcp.pop %v3266
    %v3269 = vmul.f32 %v3258, %v3267
    %v3270 = vmul.f32 %v3260, %v3268
    %v3271 = vpack.c.bf16 %v3270, %v3269
    %3272 = vrot.lane.b32.xlu0 %v2840, 64
    %v3273 = vpop.permute.xlu0 %3272
    %v3275 = vsel %vm1074, %v3271, 0
    %v3278 = vsel %vm1102, %v3273, 0
    %3280 = vmatprep.subr.bf16.mxu0 0
    %3281 = vmatpush1.bf16.msra.mxu0 0
    %3282 = vmatprep.subr.bf16.mxu0 0
    %3283 = vmatpush1.bf16.msra.mxu0 0
    %3284 = vmatprep.subr.bf16.mxu0 0
    %3285 = vmatpush1.bf16.msra.mxu0 0
    %3286 = vmatprep.subr.bf16.mxu0 0
    %3287 = vmatpush1.bf16.msra.mxu0 0
    %3288 = vmatprep.subr.bf16.mxu0 0
    %3289 = vmatpush1.bf16.msra.mxu0 0
    %3290 = vmatprep.subr.bf16.mxu0 0
    %3291 = vmatpush1.bf16.msra.mxu0 0
    %3292 = vmatprep.subr.bf16.mxu0 0
    %3293 = vmatpush1.bf16.msra.mxu0 0
    %3294 = vmatprep.subr.bf16.mxu0 0
    %3295 = vmatpush1.bf16.msra.mxu0 %v3278
    %3296 = vmatprep.subr.bf16.mxu0 0
    %3297 = vmatpush2.bf16.msra.mxu0 0
    %3298 = vmatprep.subr.bf16.mxu0 0
    %3299 = vmatpush2.bf16.msra.mxu0 0
    %3300 = vmatprep.subr.bf16.mxu0 0
    %3301 = vmatpush2.bf16.msra.mxu0 0
    %3302 = vmatprep.subr.bf16.mxu0 0
    %3303 = vmatpush2.bf16.msra.mxu0 0
    %3304 = vmatprep.subr.bf16.mxu0 0
    %3305 = vmatpush2.bf16.msra.mxu0 0
    %3306 = vmatprep.subr.bf16.mxu0 0
    %3307 = vmatpush2.bf16.msra.mxu0 0
    %3308 = vmatprep.subr.bf16.mxu0 0
    %3309 = vmatpush2.bf16.msra.mxu0 0
    %3310 = vmatprep.subr.bf16.mxu0 0
    %3311 = vmatpush2.bf16.msra.mxu0 0
    %3312 = vmatprep.mubr.bf16.mxu0 0
    %3313 = vmatmul.mubr.bf16.gmra.mxu0 %v3275
    %v3314 = vpop.f32.mrf.mxu0
    %v3315 = vadd.f32 0.0, %v3314
    %v3316 = vpop.f32.mrf.mxu0
    %v3317 = vpop.f32.mrf.mxu0
    %v3318 = vadd.f32 0.0, %v3317
    %v3319 = vpop.f32.mrf.mxu0
    %3320 = vdwg.mxu0
    %v3321 = vpack.c.bf16 %v3318, %v3315
    %v3326 = vunpack.c.l.b16 %v2812
    %v3327 = vunpack.c.l.b16 %v2813
    %v3328 = vunpack.c.l.b16 %v2814
    %v3329 = vunpack.c.l.b16 %v2815
    %v3330 = vpack.c.b16 %v3327, %v3326
    %v3331 = vpack.c.b16 %v3329, %v3328
    %v3335 = vsel %vm1026, %v3321, 0
    %3337 = vmatprep.subr.bf16.mxu0 0
    %3338 = vmatpush1.bf16.msra.mxu0 0
    %3339 = vmatprep.subr.bf16.mxu0 0
    %3340 = vmatpush1.bf16.msra.mxu0 0
    %3341 = vmatprep.subr.bf16.mxu0 0
    %3342 = vmatpush1.bf16.msra.mxu0 0
    %3343 = vmatprep.subr.bf16.mxu0 0
    %3344 = vmatpush1.bf16.msra.mxu0 0
    %3345 = vmatprep.subr.bf16.mxu0 0
    %3346 = vmatpush1.bf16.msra.mxu0 0
    %3347 = vmatprep.subr.bf16.mxu0 0
    %3348 = vmatpush1.bf16.msra.mxu0 0
    %3349 = vmatprep.subr.bf16.mxu0 0
    %3350 = vmatpush1.bf16.msra.mxu0 %v3331
    %3351 = vmatprep.subr.bf16.mxu0 0
    %3352 = vmatpush1.bf16.msra.mxu0 %v3330
    %3353 = vmatprep.subr.bf16.mxu0 0
    %3354 = vmatpush2.bf16.msra.mxu0 0
    %3355 = vmatprep.subr.bf16.mxu0 0
    %3356 = vmatpush2.bf16.msra.mxu0 0
    %3357 = vmatprep.subr.bf16.mxu0 0
    %3358 = vmatpush2.bf16.msra.mxu0 0
    %3359 = vmatprep.subr.bf16.mxu0 0
    %3360 = vmatpush2.bf16.msra.mxu0 0
    %3361 = vmatprep.subr.bf16.mxu0 0
    %3362 = vmatpush2.bf16.msra.mxu0 0
    %3363 = vmatprep.subr.bf16.mxu0 0
    %3364 = vmatpush2.bf16.msra.mxu0 0
    %3365 = vmatprep.subr.bf16.mxu0 0
    %3366 = vmatpush2.bf16.msra.mxu0 0
    %3367 = vmatprep.subr.bf16.mxu0 0
    %3368 = vmatpush2.bf16.msra.mxu0 0
    %3369 = vmatprep.mubr.bf16.mxu0 0
    %3370 = vmatmul.mubr.bf16.gmra.mxu0 %v3335
    %v3371 = vpop.f32.mrf.mxu0
    %v3372 = vadd.f32 0.0, %v3371
    %v3373 = vpop.f32.mrf.mxu0
    %v3374 = vpop.f32.mrf.mxu0
    %v3375 = vadd.f32 0.0, %v3374
    %v3376 = vpop.f32.mrf.mxu0
    %3377 = vdwg.mxu0
    %v3378 = vadd.f32 %v3192, %v3372
    %v3379 = vadd.f32 %v3195, %v3375
    %3380 = vrot.lane.b32.xlu0 %v2826, 32
    %v3381 = vpop.permute.xlu0 %3380
    %3382 = vrot.lane.b32.xlu0 %v2833, 32
    %v3383 = vpop.permute.xlu0 %3382
    %v3385 = vsel %vm1026, %v3381, 0
    %v3388 = vsel %vm1026, %v3383, 0
    %3390 = vmatprep.subr.bf16.mxu0 0
    %3391 = vmatpush1.bf16.xpose.msra.mxu0 0
    %3392 = vmatprep.subr.bf16.mxu0 0
    %3393 = vmatpush1.bf16.xpose.msra.mxu0 0
    %3394 = vmatprep.subr.bf16.mxu0 0
    %3395 = vmatpush1.bf16.xpose.msra.mxu0 0
    %3396 = vmatprep.subr.bf16.mxu0 0
    %3397 = vmatpush1.bf16.xpose.msra.mxu0 0
    %3398 = vmatprep.subr.bf16.mxu0 0
    %3399 = vmatpush1.bf16.xpose.msra.mxu0 0
    %3400 = vmatprep.subr.bf16.mxu0 0
    %3401 = vmatpush1.bf16.xpose.msra.mxu0 0
    %3402 = vmatprep.subr.bf16.mxu0 0
    %3403 = vmatpush1.bf16.xpose.msra.mxu0 0
    %3404 = vmatprep.subr.bf16.mxu0 0
    %3405 = vmatpush1.bf16.xpose.msra.mxu0 %v3388
    %3406 = vmatprep.subr.bf16.mxu0 0
    %3407 = vmatpush2.bf16.xpose.msra.mxu0 0
    %3408 = vmatprep.subr.bf16.mxu0 0
    %3409 = vmatpush2.bf16.xpose.msra.mxu0 0
    %3410 = vmatprep.subr.bf16.mxu0 0
    %3411 = vmatpush2.bf16.xpose.msra.mxu0 0
    %3412 = vmatprep.subr.bf16.mxu0 0
    %3413 = vmatpush2.bf16.xpose.msra.mxu0 0
    %3414 = vmatprep.subr.bf16.mxu0 0
    %3415 = vmatpush2.bf16.xpose.msra.mxu0 0
    %3416 = vmatprep.subr.bf16.mxu0 0
    %3417 = vmatpush2.bf16.xpose.msra.mxu0 0
    %3418 = vmatprep.subr.bf16.mxu0 0
    %3419 = vmatpush2.bf16.xpose.msra.mxu0 0
    %3420 = vmatprep.subr.bf16.mxu0 0
    %3421 = vmatpush2.bf16.xpose.msra.mxu0 0
    %3422 = vmatprep.mubr.bf16.mxu0 0
    %3423 = vmatmul.mubr.bf16.gmra.mxu0 %v3385
    %v3424 = vpop.f32.mrf.mxu0
    %v3425 = vadd.f32 %v1024, %v3424
    %v3426 = vpop.f32.mrf.mxu0
    %v3427 = vpop.f32.mrf.mxu0
    %v3428 = vadd.f32 %v1025, %v3427
    %v3429 = vpop.f32.mrf.mxu0
    %3430 = vdwg.mxu0
    %v3431 = vsel %vm1074, %v3425, -inf
    %3432 = vmax.xlane.f32.xlu0 %v3431
    %v3433 = vpop.xlane.xlu0 %3432
    %v3434 = vsel %vm1078, %v3428, -inf
    %3435 = vmax.xlane.f32.xlu0 %v3434
    %v3436 = vpop.xlane.xlu0 %3435
    %v3437 = vsub.f32 %v3425, %v3433
    %v3438 = vsub.f32 %v3428, %v3436
    %v3439 = vmul.f32 %v3437, 1.442695
    %v3440 = vpow.pop %v3439
    %v3441 = vmul.f32 %v3438, 1.442695
    %v3442 = vpow.pop %v3441
    %v3443 = vsel %vm1074, %v3440, 0.0
    %3444 = vadd.xlane.f32.xlu0 %v3443
    %v3445 = vpop.xlane.xlu0 %3444
    %v3446 = vsel %vm1078, %v3442, 0.0
    %3447 = vadd.xlane.f32.xlu0 %v3446
    %v3448 = vpop.xlane.xlu0 %3447
    %v3449 = vrcp.pop %v3445
    %v3450 = vrcp.pop %v3448
    %v3451 = vmul.f32 %v3440, %v3449
    %v3452 = vmul.f32 %v3442, %v3450
    %v3453 = vpack.c.bf16 %v3452, %v3451
    %3454 = vrot.lane.b32.xlu0 %v2840, 32
    %v3455 = vpop.permute.xlu0 %3454
    %v3457 = vsel %vm1074, %v3453, 0
    %v3460 = vsel %vm1102, %v3455, 0
    %3462 = vmatprep.subr.bf16.mxu0 0
    %3463 = vmatpush1.bf16.msra.mxu0 0
    %3464 = vmatprep.subr.bf16.mxu0 0
    %3465 = vmatpush1.bf16.msra.mxu0 0
    %3466 = vmatprep.subr.bf16.mxu0 0
    %3467 = vmatpush1.bf16.msra.mxu0 0
    %3468 = vmatprep.subr.bf16.mxu0 0
    %3469 = vmatpush1.bf16.msra.mxu0 0
    %3470 = vmatprep.subr.bf16.mxu0 0
    %3471 = vmatpush1.bf16.msra.mxu0 0
    %3472 = vmatprep.subr.bf16.mxu0 0
    %3473 = vmatpush1.bf16.msra.mxu0 0
    %3474 = vmatprep.subr.bf16.mxu0 0
    %3475 = vmatpush1.bf16.msra.mxu0 0
    %3476 = vmatprep.subr.bf16.mxu0 0
    %3477 = vmatpush1.bf16.msra.mxu0 %v3460
    %3478 = vmatprep.subr.bf16.mxu0 0
    %3479 = vmatpush2.bf16.msra.mxu0 0
    %3480 = vmatprep.subr.bf16.mxu0 0
    %3481 = vmatpush2.bf16.msra.mxu0 0
    %3482 = vmatprep.subr.bf16.mxu0 0
    %3483 = vmatpush2.bf16.msra.mxu0 0
    %3484 = vmatprep.subr.bf16.mxu0 0
    %3485 = vmatpush2.bf16.msra.mxu0 0
    %3486 = vmatprep.subr.bf16.mxu0 0
    %3487 = vmatpush2.bf16.msra.mxu0 0
    %3488 = vmatprep.subr.bf16.mxu0 0
    %3489 = vmatpush2.bf16.msra.mxu0 0
    %3490 = vmatprep.subr.bf16.mxu0 0
    %3491 = vmatpush2.bf16.msra.mxu0 0
    %3492 = vmatprep.subr.bf16.mxu0 0
    %3493 = vmatpush2.bf16.msra.mxu0 0
    %3494 = vmatprep.mubr.bf16.mxu0 0
    %3495 = vmatmul.mubr.bf16.gmra.mxu0 %v3457
    %v3496 = vpop.f32.mrf.mxu0
    %v3497 = vadd.f32 0.0, %v3496
    %v3498 = vpop.f32.mrf.mxu0
    %v3499 = vpop.f32.mrf.mxu0
    %v3500 = vadd.f32 0.0, %v3499
    %v3501 = vpop.f32.mrf.mxu0
    %3502 = vdwg.mxu0
    %v3503 = vpack.c.bf16 %v3500, %v3497
    %v3508 = vunpack.c.l.b16 %v2816
    %v3509 = vunpack.c.l.b16 %v2817
    %v3510 = vunpack.c.l.b16 %v2818
    %v3511 = vunpack.c.l.b16 %v2819
    %v3512 = vpack.c.b16 %v3509, %v3508
    %v3513 = vpack.c.b16 %v3511, %v3510
    %v3517 = vsel %vm1026, %v3503, 0
    %3519 = vmatprep.subr.bf16.mxu0 0
    %3520 = vmatpush1.bf16.msra.mxu0 0
    %3521 = vmatprep.subr.bf16.mxu0 0
    %3522 = vmatpush1.bf16.msra.mxu0 0
    %3523 = vmatprep.subr.bf16.mxu0 0
    %3524 = vmatpush1.bf16.msra.mxu0 0
    %3525 = vmatprep.subr.bf16.mxu0 0
    %3526 = vmatpush1.bf16.msra.mxu0 0
    %3527 = vmatprep.subr.bf16.mxu0 0
    %3528 = vmatpush1.bf16.msra.mxu0 0
    %3529 = vmatprep.subr.bf16.mxu0 0
    %3530 = vmatpush1.bf16.msra.mxu0 0
    %3531 = vmatprep.subr.bf16.mxu0 0
    %3532 = vmatpush1.bf16.msra.mxu0 %v3513
    %3533 = vmatprep.subr.bf16.mxu0 0
    %3534 = vmatpush1.bf16.msra.mxu0 %v3512
    %3535 = vmatprep.subr.bf16.mxu0 0
    %3536 = vmatpush2.bf16.msra.mxu0 0
    %3537 = vmatprep.subr.bf16.mxu0 0
    %3538 = vmatpush2.bf16.msra.mxu0 0
    %3539 = vmatprep.subr.bf16.mxu0 0
    %3540 = vmatpush2.bf16.msra.mxu0 0
    %3541 = vmatprep.subr.bf16.mxu0 0
    %3542 = vmatpush2.bf16.msra.mxu0 0
    %3543 = vmatprep.subr.bf16.mxu0 0
    %3544 = vmatpush2.bf16.msra.mxu0 0
    %3545 = vmatprep.subr.bf16.mxu0 0
    %3546 = vmatpush2.bf16.msra.mxu0 0
    %3547 = vmatprep.subr.bf16.mxu0 0
    %3548 = vmatpush2.bf16.msra.mxu0 0
    %3549 = vmatprep.subr.bf16.mxu0 0
    %3550 = vmatpush2.bf16.msra.mxu0 0
    %3551 = vmatprep.mubr.bf16.mxu0 0
    %3552 = vmatmul.mubr.bf16.gmra.mxu0 %v3517
    %v3553 = vpop.f32.mrf.mxu0
    %v3554 = vadd.f32 0.0, %v3553
    %v3555 = vpop.f32.mrf.mxu0
    %v3556 = vpop.f32.mrf.mxu0
    %v3557 = vadd.f32 0.0, %v3556
    %v3558 = vpop.f32.mrf.mxu0
    %3559 = vdwg.mxu0
    %v3560 = vadd.f32 %v3378, %v3554
    %v3561 = vadd.f32 %v3379, %v3557
    %v3562 = vadd.f32 %v2516, %v3560
    %v3563 = vadd.f32 %v2517, %v3561
    %v3564 = vlaneseq
    %v3565 = vshrl.u32 %v3564, 7
    %v3566 = vsub.s32 4, %v3565
    %v3567 = vrot.slane %v2519, %v3566
    %v3568 = vadd.f32 %v3562, %v3567
    %v3569 = vadd.f32 %v3563, %v3567
    %3570 = vadd.xlane.f32.xlu0 %v3568
    %v3571 = vpop.xlane.xlu0 %3570
    %v3572 = vsel %vm706, %v3569, 0.0
    %3573 = vadd.xlane.f32.xlu0 %v3572
    %v3574 = vpop.xlane.xlu0 %3573
    %v3575 = vmul.f32 %v3571, %v710
    %v3576 = vmul.f32 %v3574, %v710
    %v3577 = vsub.f32 %v3568, %v3575
    %v3578 = vsub.f32 %v3569, %v3576
    %v3579 = vmul.f32 %v3577, %v3577
    %v3580 = vmul.f32 %v3578, %v3578
    %3581 = vadd.xlane.f32.xlu0 %v3579
    %v3582 = vpop.xlane.xlu0 %3581
    %v3583 = vsel %vm706, %v3580, 0.0
    %3584 = vadd.xlane.f32.xlu0 %v3583
    %v3585 = vpop.xlane.xlu0 %3584
    %v3586 = vmul.f32 %v3582, %v710
    %v3587 = vmul.f32 %v3585, %v710
    %v3588 = vadd.f32 %v3586, 1e-12
    %v3589 = vadd.f32 %v3587, 1e-12
    %v3590 = vrsqrt.pop %v3588
    %v3591 = vrsqrt.pop %v3589
    %v3592 = vmul.f32 %v3577, %v3590
    %v3593 = vmul.f32 %v3578, %v3591
    %v3594 = vlaneseq
    %v3595 = vshrl.u32 %v3594, 7
    %v3596 = vsub.s32 2, %v3595
    %v3597 = vrot.slane %v2519, %v3596
    %v3598 = vmul.f32 %v3592, %v3597
    %v3599 = vmul.f32 %v3593, %v3597
    %v3600 = vlaneseq
    %v3601 = vshrl.u32 %v3600, 7
    %v3602 = vsub.s32 3, %v3601
    %v3603 = vrot.slane %v2519, %v3602
    %v3604 = vadd.f32 %v3598, %v3603
    %v3605 = vadd.f32 %v3599, %v3603
    %v3606 = vpack.c.bf16 %v3605, %v3604
    %s3607 = scalar_lea.vmem %s12, 256
    %v3608 = vld [vmem:[%s3607] sm:$0xff]
    %v3609 = vld [vmem:[%s3607 + $0x8] sm:$0xff]
    %v3610 = vld [vmem:[%s3607 + $0x10] sm:$0xff]
    %v3611 = vld [vmem:[%s3607 + $0x18] sm:$0xff]
    %v3612 = vld [vmem:[%s3607 + $0x20] sm:$0xff]
    %v3613 = vld [vmem:[%s3607 + $0x28] sm:$0xff]
    %v3614 = vld [vmem:[%s3607 + $0x30] sm:$0xff]
    %v3615 = vld [vmem:[%s3607 + $0x38] sm:$0xff]
    %v3616 = vld [vmem:[%s3607 + $0x40] sm:$0xff]
    %v3617 = vld [vmem:[%s3607 + $0x48] sm:$0xff]
    %v3618 = vld [vmem:[%s3607 + $0x50] sm:$0xff]
    %v3619 = vld [vmem:[%s3607 + $0x58] sm:$0xff]
    %v3620 = vld [vmem:[%s3607 + $0x60] sm:$0xff]
    %v3621 = vld [vmem:[%s3607 + $0x68] sm:$0xff]
    %v3622 = vld [vmem:[%s3607 + $0x70] sm:$0xff]
    %v3623 = vld [vmem:[%s3607 + $0x78] sm:$0xff]
    %v3624 = vld [vmem:[%s3607 + $0x80] sm:$0xff]
    %v3625 = vld [vmem:[%s3607 + $0x88] sm:$0xff]
    %v3626 = vld [vmem:[%s3607 + $0x90] sm:$0xff]
    %v3627 = vld [vmem:[%s3607 + $0x98] sm:$0xff]
    %v3628 = vld [vmem:[%s3607 + $0xa0] sm:$0xff]
    %v3629 = vld [vmem:[%s3607 + $0xa8] sm:$0xff]
    %v3630 = vld [vmem:[%s3607 + $0xb0] sm:$0xff]
    %v3631 = vld [vmem:[%s3607 + $0xb8] sm:$0xff]
    %v3632 = vld [vmem:[%s3607 + $0xc0] sm:$0xff]
    %v3633 = vld [vmem:[%s3607 + $0xc8] sm:$0xff]
    %v3634 = vld [vmem:[%s3607 + $0xd0] sm:$0xff]
    %v3635 = vld [vmem:[%s3607 + $0xd8] sm:$0xff]
    %v3636 = vld [vmem:[%s3607 + $0xe0] sm:$0xff]
    %v3637 = vld [vmem:[%s3607 + $0xe8] sm:$0xff]
    %v3638 = vld [vmem:[%s3607 + $0xf0] sm:$0xff]
    %v3639 = vld [vmem:[%s3607 + $0xf8] sm:$0xff]
    %s3640 = scalar_lea.vmem %s9, 4
    %v3641 = vld [vmem:[%s3640] sm:$0xf]
    %v3643 = vlaneseq
    %v3644 = vshrl.u32 %v3643, 7
    %v3645 = vsub.s32 0, %v3644
    %v3646 = vrot.slane %v3641, %v3645
    %v3647 = vlaneseq
    %v3648 = vshrl.u32 %v3647, 7
    %v3649 = vsub.s32 1, %v3648
    %v3650 = vrot.slane %v3641, %v3649
    %v3651 = vlaneseq
    %v3652 = vshrl.u32 %v3651, 7
    %v3653 = vsub.s32 2, %v3652
    %v3654 = vrot.slane %v3641, %v3653
    %v3655 = vlaneseq
    %v3656 = vshrl.u32 %v3655, 7
    %v3657 = vsub.s32 3, %v3656
    %v3658 = vrot.slane %v3641, %v3657
    %v3695 = vunpack.c.l.b16 %v3608
    %v3696 = vunpack.c.h.b16 %v3608
    %v3697 = vunpack.c.l.b16 %v3609
    %v3698 = vunpack.c.h.b16 %v3609
    %v3699 = vunpack.c.l.b16 %v3610
    %v3700 = vunpack.c.h.b16 %v3610
    %v3701 = vunpack.c.l.b16 %v3611
    %v3702 = vunpack.c.h.b16 %v3611
    %v3703 = vunpack.c.l.b16 %v3612
    %v3704 = vunpack.c.h.b16 %v3612
    %v3705 = vunpack.c.l.b16 %v3613
    %v3706 = vunpack.c.h.b16 %v3613
    %v3707 = vunpack.c.l.b16 %v3614
    %v3708 = vunpack.c.h.b16 %v3614
    %v3709 = vunpack.c.l.b16 %v3615
    %v3710 = vunpack.c.h.b16 %v3615
    %v3711 = vunpack.c.l.b16 %v3616
    %v3712 = vunpack.c.h.b16 %v3616
    %v3713 = vunpack.c.l.b16 %v3617
    %v3714 = vunpack.c.h.b16 %v3617
    %v3715 = vunpack.c.l.b16 %v3618
    %v3716 = vunpack.c.h.b16 %v3618
    %v3717 = vunpack.c.l.b16 %v3619
    %v3718 = vunpack.c.h.b16 %v3619
    %v3719 = vunpack.c.l.b16 %v3620
    %v3720 = vunpack.c.h.b16 %v3620
    %v3721 = vunpack.c.l.b16 %v3621
    %v3722 = vunpack.c.h.b16 %v3621
    %v3723 = vunpack.c.l.b16 %v3622
    %v3724 = vunpack.c.h.b16 %v3622
    %v3725 = vunpack.c.l.b16 %v3623
    %v3726 = vunpack.c.h.b16 %v3623
    %v3727 = vunpack.c.l.b16 %v3624
    %v3728 = vunpack.c.h.b16 %v3624
    %v3729 = vunpack.c.l.b16 %v3625
    %v3730 = vunpack.c.h.b16 %v3625
    %v3731 = vunpack.c.l.b16 %v3626
    %v3732 = vunpack.c.h.b16 %v3626
    %v3733 = vunpack.c.l.b16 %v3627
    %v3734 = vunpack.c.h.b16 %v3627
    %v3735 = vunpack.c.l.b16 %v3628
    %v3736 = vunpack.c.h.b16 %v3628
    %v3737 = vunpack.c.l.b16 %v3629
    %v3738 = vunpack.c.h.b16 %v3629
    %v3739 = vunpack.c.l.b16 %v3630
    %v3740 = vunpack.c.h.b16 %v3630
    %v3741 = vunpack.c.l.b16 %v3631
    %v3742 = vunpack.c.h.b16 %v3631
    %v3743 = vunpack.c.l.b16 %v3632
    %v3744 = vunpack.c.h.b16 %v3632
    %v3745 = vunpack.c.l.b16 %v3633
    %v3746 = vunpack.c.h.b16 %v3633
    %v3747 = vunpack.c.l.b16 %v3634
    %v3748 = vunpack.c.h.b16 %v3634
    %v3749 = vunpack.c.l.b16 %v3635
    %v3750 = vunpack.c.h.b16 %v3635
    %v3751 = vunpack.c.l.b16 %v3636
    %v3752 = vunpack.c.h.b16 %v3636
    %v3753 = vunpack.c.l.b16 %v3637
    %v3754 = vunpack.c.h.b16 %v3637
    %v3755 = vunpack.c.l.b16 %v3638
    %v3756 = vunpack.c.h.b16 %v3638
    %v3757 = vunpack.c.l.b16 %v3639
    %v3758 = vunpack.c.h.b16 %v3639
    %v3759 = vpack.c.b16 %v3699, %v3695
    %v3760 = vpack.c.b16 %v3700, %v3696
    %v3761 = vpack.c.b16 %v3701, %v3697
    %v3762 = vpack.c.b16 %v3702, %v3698
    %v3763 = vpack.c.b16 %v3707, %v3703
    %v3764 = vpack.c.b16 %v3708, %v3704
    %v3765 = vpack.c.b16 %v3709, %v3705
    %v3766 = vpack.c.b16 %v3710, %v3706
    %v3767 = vpack.c.b16 %v3715, %v3711
    %v3768 = vpack.c.b16 %v3716, %v3712
    %v3769 = vpack.c.b16 %v3717, %v3713
    %v3770 = vpack.c.b16 %v3718, %v3714
    %v3771 = vpack.c.b16 %v3723, %v3719
    %v3772 = vpack.c.b16 %v3724, %v3720
    %v3773 = vpack.c.b16 %v3725, %v3721
    %v3774 = vpack.c.b16 %v3726, %v3722
    %v3775 = vpack.c.b16 %v3731, %v3727
    %v3776 = vpack.c.b16 %v3732, %v3728
    %v3777 = vpack.c.b16 %v3733, %v3729
    %v3778 = vpack.c.b16 %v3734, %v3730
    %v3779 = vpack.c.b16 %v3739, %v3735
    %v3780 = vpack.c.b16 %v3740, %v3736
    %v3781 = vpack.c.b16 %v3741, %v3737
    %v3782 = vpack.c.b16 %v3742, %v3738
    %v3783 = vpack.c.b16 %v3747, %v3743
    %v3784 = vpack.c.b16 %v3748, %v3744
    %v3785 = vpack.c.b16 %v3749, %v3745
    %v3786 = vpack.c.b16 %v3750, %v3746
    %v3787 = vpack.c.b16 %v3755, %v3751
    %v3788 = vpack.c.b16 %v3756, %v3752
    %v3789 = vpack.c.b16 %v3757, %v3753
    %v3790 = vpack.c.b16 %v3758, %v3754
    %3823 = vmatprep.subr.bf16.mxu0 %v3788
    %3824 = vmatpush1.bf16.msra.mxu0 %v3787
    %3825 = vmatprep.subr.bf16.mxu0 %v3784
    %3826 = vmatpush1.bf16.msra.mxu0 %v3783
    %3827 = vmatprep.subr.bf16.mxu0 %v3780
    %3828 = vmatpush1.bf16.msra.mxu0 %v3779
    %3829 = vmatprep.subr.bf16.mxu0 %v3776
    %3830 = vmatpush1.bf16.msra.mxu0 %v3775
    %3831 = vmatprep.subr.bf16.mxu0 %v3772
    %3832 = vmatpush1.bf16.msra.mxu0 %v3771
    %3833 = vmatprep.subr.bf16.mxu0 %v3768
    %3834 = vmatpush1.bf16.msra.mxu0 %v3767
    %3835 = vmatprep.subr.bf16.mxu0 %v3764
    %3836 = vmatpush1.bf16.msra.mxu0 %v3763
    %3837 = vmatprep.subr.bf16.mxu0 %v3760
    %3838 = vmatpush1.bf16.msra.mxu0 %v3759
    %3839 = vmatprep.subr.bf16.mxu0 0
    %3840 = vmatpush2.bf16.msra.mxu0 0
    %3841 = vmatprep.subr.bf16.mxu0 0
    %3842 = vmatpush2.bf16.msra.mxu0 0
    %3843 = vmatprep.subr.bf16.mxu0 0
    %3844 = vmatpush2.bf16.msra.mxu0 0
    %3845 = vmatprep.subr.bf16.mxu0 0
    %3846 = vmatpush2.bf16.msra.mxu0 0
    %3847 = vmatprep.subr.bf16.mxu0 0
    %3848 = vmatpush2.bf16.msra.mxu0 0
    %3849 = vmatprep.subr.bf16.mxu0 0
    %3850 = vmatpush2.bf16.msra.mxu0 0
    %3851 = vmatprep.subr.bf16.mxu0 0
    %3852 = vmatpush2.bf16.msra.mxu0 0
    %3853 = vmatprep.subr.bf16.mxu0 0
    %3854 = vmatpush2.bf16.msra.mxu0 0
    %3855 = vmatprep.mubr.bf16.mxu0 0
    %3856 = vmatmul.mubr.bf16.gmra.mxu0 %v3606
    %v3857 = vpop.f32.mrf.mxu0
    %v3858 = vadd.f32 %v3646, %v3857
    %v3859 = vpop.f32.mrf.mxu0
    %v3860 = vadd.f32 %v3650, %v3859
    %v3861 = vpop.f32.mrf.mxu0
    %v3862 = vadd.f32 %v3646, %v3861
    %v3863 = vpop.f32.mrf.mxu0
    %v3864 = vadd.f32 %v3650, %v3863
    %3865 = vdwg.mxu0
    %3866 = vmatprep.subr.bf16.mxu0 %v3790
    %3867 = vmatpush1.bf16.msra.mxu0 %v3789
    %3868 = vmatprep.subr.bf16.mxu0 %v3786
    %3869 = vmatpush1.bf16.msra.mxu0 %v3785
    %3870 = vmatprep.subr.bf16.mxu0 %v3782
    %3871 = vmatpush1.bf16.msra.mxu0 %v3781
    %3872 = vmatprep.subr.bf16.mxu0 %v3778
    %3873 = vmatpush1.bf16.msra.mxu0 %v3777
    %3874 = vmatprep.subr.bf16.mxu0 %v3774
    %3875 = vmatpush1.bf16.msra.mxu0 %v3773
    %3876 = vmatprep.subr.bf16.mxu0 %v3770
    %3877 = vmatpush1.bf16.msra.mxu0 %v3769
    %3878 = vmatprep.subr.bf16.mxu0 %v3766
    %3879 = vmatpush1.bf16.msra.mxu0 %v3765
    %3880 = vmatprep.subr.bf16.mxu0 %v3762
    %3881 = vmatpush1.bf16.msra.mxu0 %v3761
    %3882 = vmatprep.subr.bf16.mxu0 0
    %3883 = vmatpush2.bf16.msra.mxu0 0
    %3884 = vmatprep.subr.bf16.mxu0 0
    %3885 = vmatpush2.bf16.msra.mxu0 0
    %3886 = vmatprep.subr.bf16.mxu0 0
    %3887 = vmatpush2.bf16.msra.mxu0 0
    %3888 = vmatprep.subr.bf16.mxu0 0
    %3889 = vmatpush2.bf16.msra.mxu0 0
    %3890 = vmatprep.subr.bf16.mxu0 0
    %3891 = vmatpush2.bf16.msra.mxu0 0
    %3892 = vmatprep.subr.bf16.mxu0 0
    %3893 = vmatpush2.bf16.msra.mxu0 0
    %3894 = vmatprep.subr.bf16.mxu0 0
    %3895 = vmatpush2.bf16.msra.mxu0 0
    %3896 = vmatprep.subr.bf16.mxu0 0
    %3897 = vmatpush2.bf16.msra.mxu0 0
    %3898 = vmatprep.mubr.bf16.mxu0 0
    %3899 = vmatmul.mubr.bf16.gmra.mxu0 %v3606
    %v3900 = vpop.f32.mrf.mxu0
    %v3901 = vadd.f32 %v3654, %v3900
    %v3902 = vpop.f32.mrf.mxu0
    %v3903 = vadd.f32 %v3658, %v3902
    %v3904 = vpop.f32.mrf.mxu0
    %v3905 = vadd.f32 %v3654, %v3904
    %v3906 = vpop.f32.mrf.mxu0
    %v3907 = vadd.f32 %v3658, %v3906
    %3908 = vdwg.mxu0
    %v3909 = vmul.f32 %v3858, 0.5
    %v3910 = vmul.f32 %v3860, 0.5
    %v3911 = vmul.f32 %v3901, 0.5
    %v3912 = vmul.f32 %v3903, 0.5
    %v3913 = vmul.f32 %v3862, 0.5
    %v3914 = vmul.f32 %v3864, 0.5
    %v3915 = vmul.f32 %v3905, 0.5
    %v3916 = vmul.f32 %v3907, 0.5
    %v3917 = vmul.f32 %v3858, 0.044715
    %v3918 = vmul.f32 %v3860, 0.044715
    %v3919 = vmul.f32 %v3901, 0.044715
    %v3920 = vmul.f32 %v3903, 0.044715
    %v3921 = vmul.f32 %v3862, 0.044715
    %v3922 = vmul.f32 %v3864, 0.044715
    %v3923 = vmul.f32 %v3905, 0.044715
    %v3924 = vmul.f32 %v3907, 0.044715
    %v3925 = vmul.f32 %v3917, %v3858
    %v3926 = vmul.f32 %v3918, %v3860
    %v3927 = vmul.f32 %v3919, %v3901
    %v3928 = vmul.f32 %v3920, %v3903
    %v3929 = vmul.f32 %v3921, %v3862
    %v3930 = vmul.f32 %v3922, %v3864
    %v3931 = vmul.f32 %v3923, %v3905
    %v3932 = vmul.f32 %v3924, %v3907
    %v3933 = vmul.f32 %v3925, %v3858
    %v3934 = vmul.f32 %v3926, %v3860
    %v3935 = vmul.f32 %v3927, %v3901
    %v3936 = vmul.f32 %v3928, %v3903
    %v3937 = vmul.f32 %v3929, %v3862
    %v3938 = vmul.f32 %v3930, %v3864
    %v3939 = vmul.f32 %v3931, %v3905
    %v3940 = vmul.f32 %v3932, %v3907
    %v3941 = vadd.f32 %v3858, %v3933
    %v3942 = vadd.f32 %v3860, %v3934
    %v3943 = vadd.f32 %v3901, %v3935
    %v3944 = vadd.f32 %v3903, %v3936
    %v3945 = vadd.f32 %v3862, %v3937
    %v3946 = vadd.f32 %v3864, %v3938
    %v3947 = vadd.f32 %v3905, %v3939
    %v3948 = vadd.f32 %v3907, %v3940
    %v3949 = vmul.f32 %v3941, 0.7978846
    %v3950 = vmul.f32 %v3942, 0.7978846
    %v3951 = vmul.f32 %v3943, 0.7978846
    %v3952 = vmul.f32 %v3944, 0.7978846
    %v3953 = vmul.f32 %v3945, 0.7978846
    %v3954 = vmul.f32 %v3946, 0.7978846
    %v3955 = vmul.f32 %v3947, 0.7978846
    %v3956 = vmul.f32 %v3948, 0.7978846
    %v3957 = vtanh.pop %v3949
    %v3958 = vtanh.pop %v3950
    %v3959 = vtanh.pop %v3951
    %v3960 = vtanh.pop %v3952
    %v3961 = vtanh.pop %v3953
    %v3962 = vtanh.pop %v3954
    %v3963 = vtanh.pop %v3955
    %v3964 = vtanh.pop %v3956
    %v3965 = vadd.f32 %v3957, 1.0
    %v3966 = vadd.f32 %v3958, 1.0
    %v3967 = vadd.f32 %v3959, 1.0
    %v3968 = vadd.f32 %v3960, 1.0
    %v3969 = vadd.f32 %v3961, 1.0
    %v3970 = vadd.f32 %v3962, 1.0
    %v3971 = vadd.f32 %v3963, 1.0
    %v3972 = vadd.f32 %v3964, 1.0
    %v3973 = vmul.f32 %v3909, %v3965
    %v3974 = vmul.f32 %v3910, %v3966
    %v3975 = vmul.f32 %v3911, %v3967
    %v3976 = vmul.f32 %v3912, %v3968
    %v3977 = vmul.f32 %v3913, %v3969
    %v3978 = vmul.f32 %v3914, %v3970
    %v3979 = vmul.f32 %v3915, %v3971
    %v3980 = vmul.f32 %v3916, %v3972
    %v3981 = vpack.c.bf16 %v3977, %v3973
    %v3982 = vpack.c.bf16 %v3978, %v3974
    %v3983 = vpack.c.bf16 %v3979, %v3975
    %v3984 = vpack.c.bf16 %v3980, %v3976
    %s3985 = scalar_lea.vmem %s13, 256
    %v3986 = vld [vmem:[%s3985] sm:$0xf]
    %v3987 = vld [vmem:[%s3985 + $0x4] sm:$0xf]
    %v3988 = vld [vmem:[%s3985 + $0x8] sm:$0xf]
    %v3989 = vld [vmem:[%s3985 + $0xc] sm:$0xf]
    %v3990 = vld [vmem:[%s3985 + $0x10] sm:$0xf]
    %v3991 = vld [vmem:[%s3985 + $0x14] sm:$0xf]
    %v3992 = vld [vmem:[%s3985 + $0x18] sm:$0xf]
    %v3993 = vld [vmem:[%s3985 + $0x1c] sm:$0xf]
    %v3994 = vld [vmem:[%s3985 + $0x20] sm:$0xf]
    %v3995 = vld [vmem:[%s3985 + $0x24] sm:$0xf]
    %v3996 = vld [vmem:[%s3985 + $0x28] sm:$0xf]
    %v3997 = vld [vmem:[%s3985 + $0x2c] sm:$0xf]
    %v3998 = vld [vmem:[%s3985 + $0x30] sm:$0xf]
    %v3999 = vld [vmem:[%s3985 + $0x34] sm:$0xf]
    %v4000 = vld [vmem:[%s3985 + $0x38] sm:$0xf]
    %v4001 = vld [vmem:[%s3985 + $0x3c] sm:$0xf]
    %v4002 = vld [vmem:[%s3985 + $0x40] sm:$0xf]
    %v4003 = vld [vmem:[%s3985 + $0x44] sm:$0xf]
    %v4004 = vld [vmem:[%s3985 + $0x48] sm:$0xf]
    %v4005 = vld [vmem:[%s3985 + $0x4c] sm:$0xf]
    %v4006 = vld [vmem:[%s3985 + $0x50] sm:$0xf]
    %v4007 = vld [vmem:[%s3985 + $0x54] sm:$0xf]
    %v4008 = vld [vmem:[%s3985 + $0x58] sm:$0xf]
    %v4009 = vld [vmem:[%s3985 + $0x5c] sm:$0xf]
    %v4010 = vld [vmem:[%s3985 + $0x60] sm:$0xf]
    %v4011 = vld [vmem:[%s3985 + $0x64] sm:$0xf]
    %v4012 = vld [vmem:[%s3985 + $0x68] sm:$0xf]
    %v4013 = vld [vmem:[%s3985 + $0x6c] sm:$0xf]
    %v4014 = vld [vmem:[%s3985 + $0x70] sm:$0xf]
    %v4015 = vld [vmem:[%s3985 + $0x74] sm:$0xf]
    %v4016 = vld [vmem:[%s3985 + $0x78] sm:$0xf]
    %v4017 = vld [vmem:[%s3985 + $0x7c] sm:$0xf]
    %v4018 = vld [vmem:[%s3985 + $0x80] sm:$0xf]
    %v4019 = vld [vmem:[%s3985 + $0x84] sm:$0xf]
    %v4020 = vld [vmem:[%s3985 + $0x88] sm:$0xf]
    %v4021 = vld [vmem:[%s3985 + $0x8c] sm:$0xf]
    %v4022 = vld [vmem:[%s3985 + $0x90] sm:$0xf]
    %v4023 = vld [vmem:[%s3985 + $0x94] sm:$0xf]
    %v4024 = vld [vmem:[%s3985 + $0x98] sm:$0xf]
    %v4025 = vld [vmem:[%s3985 + $0x9c] sm:$0xf]
    %v4026 = vld [vmem:[%s3985 + $0xa0] sm:$0xf]
    %v4027 = vld [vmem:[%s3985 + $0xa4] sm:$0xf]
    %v4028 = vld [vmem:[%s3985 + $0xa8] sm:$0xf]
    %v4029 = vld [vmem:[%s3985 + $0xac] sm:$0xf]
    %v4030 = vld [vmem:[%s3985 + $0xb0] sm:$0xf]
    %v4031 = vld [vmem:[%s3985 + $0xb4] sm:$0xf]
    %v4032 = vld [vmem:[%s3985 + $0xb8] sm:$0xf]
    %v4033 = vld [vmem:[%s3985 + $0xbc] sm:$0xf]
    %v4034 = vld [vmem:[%s3985 + $0xc0] sm:$0xf]
    %v4035 = vld [vmem:[%s3985 + $0xc4] sm:$0xf]
    %v4036 = vld [vmem:[%s3985 + $0xc8] sm:$0xf]
    %v4037 = vld [vmem:[%s3985 + $0xcc] sm:$0xf]
    %v4038 = vld [vmem:[%s3985 + $0xd0] sm:$0xf]
    %v4039 = vld [vmem:[%s3985 + $0xd4] sm:$0xf]
    %v4040 = vld [vmem:[%s3985 + $0xd8] sm:$0xf]
    %v4041 = vld [vmem:[%s3985 + $0xdc] sm:$0xf]
    %v4042 = vld [vmem:[%s3985 + $0xe0] sm:$0xf]
    %v4043 = vld [vmem:[%s3985 + $0xe4] sm:$0xf]
    %v4044 = vld [vmem:[%s3985 + $0xe8] sm:$0xf]
    %v4045 = vld [vmem:[%s3985 + $0xec] sm:$0xf]
    %v4046 = vld [vmem:[%s3985 + $0xf0] sm:$0xf]
    %v4047 = vld [vmem:[%s3985 + $0xf4] sm:$0xf]
    %v4048 = vld [vmem:[%s3985 + $0xf8] sm:$0xf]
    %v4049 = vld [vmem:[%s3985 + $0xfc] sm:$0xf]
    %v4114 = vunpack.c.l.b16 %v3986
    %v4115 = vunpack.c.l.b16 %v3987
    %v4116 = vunpack.c.l.b16 %v3988
    %v4117 = vunpack.c.l.b16 %v3989
    %v4118 = vunpack.c.l.b16 %v3990
    %v4119 = vunpack.c.l.b16 %v3991
    %v4120 = vunpack.c.l.b16 %v3992
    %v4121 = vunpack.c.l.b16 %v3993
    %v4122 = vunpack.c.l.b16 %v3994
    %v4123 = vunpack.c.l.b16 %v3995
    %v4124 = vunpack.c.l.b16 %v3996
    %v4125 = vunpack.c.l.b16 %v3997
    %v4126 = vunpack.c.l.b16 %v3998
    %v4127 = vunpack.c.l.b16 %v3999
    %v4128 = vunpack.c.l.b16 %v4000
    %v4129 = vunpack.c.l.b16 %v4001
    %v4130 = vunpack.c.l.b16 %v4002
    %v4131 = vunpack.c.l.b16 %v4003
    %v4132 = vunpack.c.l.b16 %v4004
    %v4133 = vunpack.c.l.b16 %v4005
    %v4134 = vunpack.c.l.b16 %v4006
    %v4135 = vunpack.c.l.b16 %v4007
    %v4136 = vunpack.c.l.b16 %v4008
    %v4137 = vunpack.c.l.b16 %v4009
    %v4138 = vunpack.c.l.b16 %v4010
    %v4139 = vunpack.c.l.b16 %v4011
    %v4140 = vunpack.c.l.b16 %v4012
    %v4141 = vunpack.c.l.b16 %v4013
    %v4142 = vunpack.c.l.b16 %v4014
    %v4143 = vunpack.c.l.b16 %v4015
    %v4144 = vunpack.c.l.b16 %v4016
    %v4145 = vunpack.c.l.b16 %v4017
    %v4146 = vunpack.c.l.b16 %v4018
    %v4147 = vunpack.c.l.b16 %v4019
    %v4148 = vunpack.c.l.b16 %v4020
    %v4149 = vunpack.c.l.b16 %v4021
    %v4150 = vunpack.c.l.b16 %v4022
    %v4151 = vunpack.c.l.b16 %v4023
    %v4152 = vunpack.c.l.b16 %v4024
    %v4153 = vunpack.c.l.b16 %v4025
    %v4154 = vunpack.c.l.b16 %v4026
    %v4155 = vunpack.c.l.b16 %v4027
    %v4156 = vunpack.c.l.b16 %v4028
    %v4157 = vunpack.c.l.b16 %v4029
    %v4158 = vunpack.c.l.b16 %v4030
    %v4159 = vunpack.c.l.b16 %v4031
    %v4160 = vunpack.c.l.b16 %v4032
    %v4161 = vunpack.c.l.b16 %v4033
    %v4162 = vunpack.c.l.b16 %v4034
    %v4163 = vunpack.c.l.b16 %v4035
    %v4164 = vunpack.c.l.b16 %v4036
    %v4165 = vunpack.c.l.b16 %v4037
    %v4166 = vunpack.c.l.b16 %v4038
    %v4167 = vunpack.c.l.b16 %v4039
    %v4168 = vunpack.c.l.b16 %v4040
    %v4169 = vunpack.c.l.b16 %v4041
    %v4170 = vunpack.c.l.b16 %v4042
    %v4171 = vunpack.c.l.b16 %v4043
    %v4172 = vunpack.c.l.b16 %v4044
    %v4173 = vunpack.c.l.b16 %v4045
    %v4174 = vunpack.c.l.b16 %v4046
    %v4175 = vunpack.c.l.b16 %v4047
    %v4176 = vunpack.c.l.b16 %v4048
    %v4177 = vunpack.c.l.b16 %v4049
    %v4178 = vpack.c.b16 %v4115, %v4114
    %v4179 = vpack.c.b16 %v4117, %v4116
    %v4180 = vpack.c.b16 %v4119, %v4118
    %v4181 = vpack.c.b16 %v4121, %v4120
    %v4182 = vpack.c.b16 %v4123, %v4122
    %v4183 = vpack.c.b16 %v4125, %v4124
    %v4184 = vpack.c.b16 %v4127, %v4126
    %v4185 = vpack.c.b16 %v4129, %v4128
    %v4186 = vpack.c.b16 %v4131, %v4130
    %v4187 = vpack.c.b16 %v4133, %v4132
    %v4188 = vpack.c.b16 %v4135, %v4134
    %v4189 = vpack.c.b16 %v4137, %v4136
    %v4190 = vpack.c.b16 %v4139, %v4138
    %v4191 = vpack.c.b16 %v4141, %v4140
    %v4192 = vpack.c.b16 %v4143, %v4142
    %v4193 = vpack.c.b16 %v4145, %v4144
    %v4194 = vpack.c.b16 %v4147, %v4146
    %v4195 = vpack.c.b16 %v4149, %v4148
    %v4196 = vpack.c.b16 %v4151, %v4150
    %v4197 = vpack.c.b16 %v4153, %v4152
    %v4198 = vpack.c.b16 %v4155, %v4154
    %v4199 = vpack.c.b16 %v4157, %v4156
    %v4200 = vpack.c.b16 %v4159, %v4158
    %v4201 = vpack.c.b16 %v4161, %v4160
    %v4202 = vpack.c.b16 %v4163, %v4162
    %v4203 = vpack.c.b16 %v4165, %v4164
    %v4204 = vpack.c.b16 %v4167, %v4166
    %v4205 = vpack.c.b16 %v4169, %v4168
    %v4206 = vpack.c.b16 %v4171, %v4170
    %v4207 = vpack.c.b16 %v4173, %v4172
    %v4208 = vpack.c.b16 %v4175, %v4174
    %v4209 = vpack.c.b16 %v4177, %v4176
    %4242 = vmatprep.subr.bf16.mxu0 0
    %4243 = vmatpush1.bf16.msra.mxu0 %v4185
    %4244 = vmatprep.subr.bf16.mxu0 0
    %4245 = vmatpush1.bf16.msra.mxu0 %v4184
    %4246 = vmatprep.subr.bf16.mxu0 0
    %4247 = vmatpush1.bf16.msra.mxu0 %v4183
    %4248 = vmatprep.subr.bf16.mxu0 0
    %4249 = vmatpush1.bf16.msra.mxu0 %v4182
    %4250 = vmatprep.subr.bf16.mxu0 0
    %4251 = vmatpush1.bf16.msra.mxu0 %v4181
    %4252 = vmatprep.subr.bf16.mxu0 0
    %4253 = vmatpush1.bf16.msra.mxu0 %v4180
    %4254 = vmatprep.subr.bf16.mxu0 0
    %4255 = vmatpush1.bf16.msra.mxu0 %v4179
    %4256 = vmatprep.subr.bf16.mxu0 0
    %4257 = vmatpush1.bf16.msra.mxu0 %v4178
    %4258 = vmatprep.subr.bf16.mxu0 0
    %4259 = vmatpush2.bf16.msra.mxu0 %v4193
    %4260 = vmatprep.subr.bf16.mxu0 0
    %4261 = vmatpush2.bf16.msra.mxu0 %v4192
    %4262 = vmatprep.subr.bf16.mxu0 0
    %4263 = vmatpush2.bf16.msra.mxu0 %v4191
    %4264 = vmatprep.subr.bf16.mxu0 0
    %4265 = vmatpush2.bf16.msra.mxu0 %v4190
    %4266 = vmatprep.subr.bf16.mxu0 0
    %4267 = vmatpush2.bf16.msra.mxu0 %v4189
    %4268 = vmatprep.subr.bf16.mxu0 0
    %4269 = vmatpush2.bf16.msra.mxu0 %v4188
    %4270 = vmatprep.subr.bf16.mxu0 0
    %4271 = vmatpush2.bf16.msra.mxu0 %v4187
    %4272 = vmatprep.subr.bf16.mxu0 0
    %4273 = vmatpush2.bf16.msra.mxu0 %v4186
    %4274 = vmatprep.mubr.bf16.mxu0 %v3982
    %4275 = vmatmul.mubr.bf16.gmra.mxu0 %v3981
    %v4276 = vpop.f32.mrf.mxu0
    %v4277 = vadd.f32 0.0, %v4276
    %v4278 = vpop.f32.mrf.mxu0
    %v4279 = vpop.f32.mrf.mxu0
    %v4280 = vadd.f32 0.0, %v4279
    %v4281 = vpop.f32.mrf.mxu0
    %4282 = vdwg.mxu0
    %4283 = vmatprep.subr.bf16.mxu0 0
    %4284 = vmatpush1.bf16.msra.mxu0 %v4201
    %4285 = vmatprep.subr.bf16.mxu0 0
    %4286 = vmatpush1.bf16.msra.mxu0 %v4200
    %4287 = vmatprep.subr.bf16.mxu0 0
    %4288 = vmatpush1.bf16.msra.mxu0 %v4199
    %4289 = vmatprep.subr.bf16.mxu0 0
    %4290 = vmatpush1.bf16.msra.mxu0 %v4198
    %4291 = vmatprep.subr.bf16.mxu0 0
    %4292 = vmatpush1.bf16.msra.mxu0 %v4197
    %4293 = vmatprep.subr.bf16.mxu0 0
    %4294 = vmatpush1.bf16.msra.mxu0 %v4196
    %4295 = vmatprep.subr.bf16.mxu0 0
    %4296 = vmatpush1.bf16.msra.mxu0 %v4195
    %4297 = vmatprep.subr.bf16.mxu0 0
    %4298 = vmatpush1.bf16.msra.mxu0 %v4194
    %4299 = vmatprep.subr.bf16.mxu0 0
    %4300 = vmatpush2.bf16.msra.mxu0 %v4209
    %4301 = vmatprep.subr.bf16.mxu0 0
    %4302 = vmatpush2.bf16.msra.mxu0 %v4208
    %4303 = vmatprep.subr.bf16.mxu0 0
    %4304 = vmatpush2.bf16.msra.mxu0 %v4207
    %4305 = vmatprep.subr.bf16.mxu0 0
    %4306 = vmatpush2.bf16.msra.mxu0 %v4206
    %4307 = vmatprep.subr.bf16.mxu0 0
    %4308 = vmatpush2.bf16.msra.mxu0 %v4205
    %4309 = vmatprep.subr.bf16.mxu0 0
    %4310 = vmatpush2.bf16.msra.mxu0 %v4204
    %4311 = vmatprep.subr.bf16.mxu0 0
    %4312 = vmatpush2.bf16.msra.mxu0 %v4203
    %4313 = vmatprep.subr.bf16.mxu0 0
    %4314 = vmatpush2.bf16.msra.mxu0 %v4202
    %4315 = vmatprep.mubr.bf16.mxu0 %v3984
    %4316 = vmatmul.mubr.bf16.gmra.mxu0 %v3983
    %v4317 = vpop.f32.mrf.mxu0
    %v4318 = vadd.f32 %v4277, %v4317
    %v4319 = vpop.f32.mrf.mxu0
    %v4320 = vpop.f32.mrf.mxu0
    %v4321 = vadd.f32 %v4280, %v4320
    %v4322 = vpop.f32.mrf.mxu0
    %4323 = vdwg.mxu0
    %v4324 = vadd.f32 %v3568, %v4318
    %v4325 = vadd.f32 %v3569, %v4321
    %v4326 = vlaneseq
    %v4327 = vshrl.u32 %v4326, 7
    %v4328 = vsub.s32 5, %v4327
    %v4329 = vrot.slane %v2519, %v4328
    %v4330 = vadd.f32 %v4324, %v4329
    %v4331 = vadd.f32 %v4325, %v4329
    %v4332 = vld [vmem:[%s7] sm:$0xf]
    %v4333 = vld [vmem:[%s5] sm:$0x3]
    %v4335 = vsel %vm1074, %v4333, 0
    %v4338 = vsel %vm706, %v4331, 0
    %4340 = vmatprep.subr.mxu0 0.0
    %4341 = vmatpush1.msra.mxu0 0.0
    %4342 = vmatprep.subr.mxu0 0.0
    %4343 = vmatpush1.msra.mxu0 0.0
    %4344 = vmatprep.subr.mxu0 0.0
    %4345 = vmatpush1.msra.mxu0 0.0
    %4346 = vmatprep.subr.mxu0 0.0
    %4347 = vmatpush1.msra.mxu0 0.0
    %4348 = vmatprep.subr.mxu0 0.0
    %4349 = vmatpush1.msra.mxu0 0.0
    %4350 = vmatprep.subr.mxu0 0.0
    %4351 = vmatpush1.msra.mxu0 0.0
    %4352 = vmatprep.subr.mxu0 0.0
    %4353 = vmatpush1.msra.mxu0 0.0
    %4354 = vmatprep.subr.mxu0 0.0
    %4355 = vmatpush1.msra.mxu0 0.0
    %4356 = vmatprep.subr.mxu0 0.0
    %4357 = vmatpush1.msra.mxu0 0.0
    %4358 = vmatprep.subr.mxu0 0.0
    %4359 = vmatpush1.msra.mxu0 0.0
    %4360 = vmatprep.subr.mxu0 0.0
    %4361 = vmatpush1.msra.mxu0 0.0
    %4362 = vmatprep.subr.mxu0 0.0
    %4363 = vmatpush1.msra.mxu0 0.0
    %4364 = vmatprep.subr.mxu0 0.0
    %4365 = vmatpush1.msra.mxu0 0.0
    %4366 = vmatprep.subr.mxu0 0.0
    %4367 = vmatpush1.msra.mxu0 0.0
    %4368 = vmatprep.subr.mxu0 0.0
    %4369 = vmatpush1.msra.mxu0 %v4338
    %4370 = vmatprep.subr.mxu0 0.0
    %4371 = vmatpush1.msra.mxu0 %v4330
    %4372 = vmatprep.subr.mxu0 0.0
    %4373 = vmatpush2.msra.mxu0 0.0
    %4374 = vmatprep.subr.mxu0 0.0
    %4375 = vmatpush2.msra.mxu0 0.0
    %4376 = vmatprep.subr.mxu0 0.0
    %4377 = vmatpush2.msra.mxu0 0.0
    %4378 = vmatprep.subr.mxu0 0.0
    %4379 = vmatpush2.msra.mxu0 0.0
    %4380 = vmatprep.subr.mxu0 0.0
    %4381 = vmatpush2.msra.mxu0 0.0
    %4382 = vmatprep.subr.mxu0 0.0
    %4383 = vmatpush2.msra.mxu0 0.0
    %4384 = vmatprep.subr.mxu0 0.0
    %4385 = vmatpush2.msra.mxu0 0.0
    %4386 = vmatprep.subr.mxu0 0.0
    %4387 = vmatpush2.msra.mxu0 0.0
    %4388 = vmatprep.subr.mxu0 0.0
    %4389 = vmatpush2.msra.mxu0 0.0
    %4390 = vmatprep.subr.mxu0 0.0
    %4391 = vmatpush2.msra.mxu0 0.0
    %4392 = vmatprep.subr.mxu0 0.0
    %4393 = vmatpush2.msra.mxu0 0.0
    %4394 = vmatprep.subr.mxu0 0.0
    %4395 = vmatpush2.msra.mxu0 0.0
    %4396 = vmatprep.subr.mxu0 0.0
    %4397 = vmatpush2.msra.mxu0 0.0
    %4398 = vmatprep.subr.mxu0 0.0
    %4399 = vmatpush2.msra.mxu0 0.0
    %4400 = vmatprep.subr.mxu0 0.0
    %4401 = vmatpush2.msra.mxu0 0.0
    %4402 = vmatprep.subr.mxu0 0.0
    %4403 = vmatpush2.msra.mxu0 0.0
    %4404 = vmatprep.mubr.f32.mxu0 0.0
    %4405 = vmatmul.mubr.f32.gmra.mxu0 %v4335
    %v4406 = vpop.f32.mrf.mxu0
    %v4407 = vadd.f32 0.0, %v4406
    %v4408 = vpop.f32.mrf.mxu0
    %4409 = vdwg.mxu0
    %v4410 = vsel %vm706, %v4407, 0.0
    %4411 = vadd.xlane.f32.xlu0 %v4410
    %v4412 = vpop.xlane.xlu0 %4411
    %v4413 = vmul.f32 %v4412, %v710
    %v4414 = vsub.f32 %v4407, %v4413
    %v4415 = vmul.f32 %v4414, %v4414
    %v4416 = vsel %vm706, %v4415, 0.0
    %4417 = vadd.xlane.f32.xlu0 %v4416
    %v4418 = vpop.xlane.xlu0 %4417
    %v4419 = vmul.f32 %v4418, %v710
    %v4420 = vadd.f32 %v4419, 1e-12
    %v4421 = vrsqrt.pop %v4420
    %v4422 = vmul.f32 %v4414, %v4421
    %v4423 = vlaneseq
    %v4424 = vshrl.u32 %v4423, 7
    %v4425 = vsub.s32 0, %v4424
    %v4426 = vrot.slane %v4332, %v4425
    %v4427 = vmul.f32 %v4422, %v4426
    %v4428 = vlaneseq
    %v4429 = vshrl.u32 %v4428, 7
    %v4430 = vsub.s32 1, %v4429
    %v4431 = vrot.slane %v4332, %v4430
    %v4432 = vadd.f32 %v4427, %v4431
    %v4433 = vld [vmem:[%s1] sm:$0x3]
    %v4434 = vpack.c.bf16 %v4433, %v4433
    %v4435 = vld [vmem:[%s14] sm:$0xf]
    %v4436 = vlaneseq
    %v4437 = vshrl.u32 %v4436, 7
    %v4438 = vsub.s32 2, %v4437
    %v4439 = vrot.slane %v4332, %v4438
    %v4441 = vsel %vm618, %v4434, 0
    %vm4443 = vcmask 1043456
    %v4445 = vsel %vm4443, %v4435, 0
    %4447 = vmatprep.subr.bf16.mxu0 0
    %4448 = vmatpush1.bf16.msra.mxu0 0
    %4449 = vmatprep.subr.bf16.mxu0 0
    %4450 = vmatpush1.bf16.msra.mxu0 0
    %4451 = vmatprep.subr.bf16.mxu0 0
    %4452 = vmatpush1.bf16.msra.mxu0 0
    %4453 = vmatprep.subr.bf16.mxu0 0
    %4454 = vmatpush1.bf16.msra.mxu0 0
    %4455 = vmatprep.subr.bf16.mxu0 0
    %4456 = vmatpush1.bf16.msra.mxu0 0
    %4457 = vmatprep.subr.bf16.mxu0 0
    %4458 = vmatpush1.bf16.msra.mxu0 0
    %4459 = vmatprep.subr.bf16.mxu0 0
    %4460 = vmatpush1.bf16.msra.mxu0 0
    %4461 = vmatprep.subr.bf16.mxu0 0
    %4462 = vmatpush1.bf16.msra.mxu0 %v4445
    %4463 = vmatprep.subr.bf16.mxu0 0
    %4464 = vmatpush2.bf16.msra.mxu0 0
    %4465 = vmatprep.subr.bf16.mxu0 0
    %4466 = vmatpush2.bf16.msra.mxu0 0
    %4467 = vmatprep.subr.bf16.mxu0 0
    %4468 = vmatpush2.bf16.msra.mxu0 0
    %4469 = vmatprep.subr.bf16.mxu0 0
    %4470 = vmatpush2.bf16.msra.mxu0 0
    %4471 = vmatprep.subr.bf16.mxu0 0
    %4472 = vmatpush2.bf16.msra.mxu0 0
    %4473 = vmatprep.subr.bf16.mxu0 0
    %4474 = vmatpush2.bf16.msra.mxu0 0
    %4475 = vmatprep.subr.bf16.mxu0 0
    %4476 = vmatpush2.bf16.msra.mxu0 0
    %4477 = vmatprep.subr.bf16.mxu0 0
    %4478 = vmatpush2.bf16.msra.mxu0 0
    %4479 = vmatprep.mubr.bf16.mxu0 0
    %4480 = vmatmul.mubr.bf16.gmra.mxu0 %v4441
    %v4481 = vpop.f32.mrf.mxu0
    %v4482 = vadd.f32 %v4439, %v4481
    %v4483 = vpop.f32.mrf.mxu0
    %v4484 = vpop.f32.mrf.mxu0
    %v4485 = vpop.f32.mrf.mxu0
    %4486 = vdwg.mxu0
    %v4487 = vmax.f32 %v4482, 0.0
    %v4488 = vpack.c.bf16 %v4432, %v4432
    %v4489 = vld [vmem:[%s15] sm:$0xf]
    %v4490 = vld [vmem:[%s15 + $0x4] sm:$0xf]
    %v4491 = vld [vmem:[%s15 + $0x8] sm:$0xf]
    %v4492 = vld [vmem:[%s15 + $0xc] sm:$0xf]
    %v4493 = vld [vmem:[%s15 + $0x10] sm:$0xf]
    %v4494 = vld [vmem:[%s15 + $0x14] sm:$0xf]
    %v4495 = vld [vmem:[%s15 + $0x18] sm:$0xf]
    %v4496 = vld [vmem:[%s15 + $0x1c] sm:$0xf]
    %v4497 = vld [vmem:[%s15 + $0x20] sm:$0xf]
    %v4498 = vld [vmem:[%s15 + $0x24] sm:$0xf]
    %v4499 = vld [vmem:[%s15 + $0x28] sm:$0xf]
    %v4500 = vld [vmem:[%s15 + $0x2c] sm:$0xf]
    %v4501 = vld [vmem:[%s15 + $0x30] sm:$0xf]
    %v4502 = vld [vmem:[%s15 + $0x34] sm:$0xf]
    %v4503 = vld [vmem:[%s15 + $0x38] sm:$0xf]
    %v4504 = vld [vmem:[%s15 + $0x3c] sm:$0xf]
    %v4505 = vpack.c.bf16 %v4487, %v4487
    %v4506 = vld [vmem:[%s16] sm:$0xf]
    %v4507 = vld [vmem:[%s16 + $0x4] sm:$0xf]
    %v4508 = vld [vmem:[%s16 + $0x8] sm:$0xf]
    %v4509 = vld [vmem:[%s16 + $0xc] sm:$0xf]
    %v4510 = vld [vmem:[%s16 + $0x10] sm:$0xf]
    %v4511 = vld [vmem:[%s16 + $0x14] sm:$0xf]
    %v4512 = vld [vmem:[%s16 + $0x18] sm:$0xf]
    %v4513 = vld [vmem:[%s16 + $0x1c] sm:$0xf]
    %v4514 = vld [vmem:[%s16 + $0x20] sm:$0xf]
    %v4515 = vld [vmem:[%s16 + $0x24] sm:$0xf]
    %v4516 = vld [vmem:[%s16 + $0x28] sm:$0xf]
    %v4517 = vld [vmem:[%s16 + $0x2c] sm:$0xf]
    %v4518 = vld [vmem:[%s16 + $0x30] sm:$0xf]
    %v4519 = vld [vmem:[%s16 + $0x34] sm:$0xf]
    %v4520 = vld [vmem:[%s16 + $0x38] sm:$0xf]
    %v4521 = vld [vmem:[%s16 + $0x3c] sm:$0xf]
    %v4538 = vunpack.c.l.b16 %v4506
    %v4539 = vunpack.c.l.b16 %v4507
    %v4540 = vunpack.c.l.b16 %v4508
    %v4541 = vunpack.c.l.b16 %v4509
    %v4542 = vunpack.c.l.b16 %v4510
    %v4543 = vunpack.c.l.b16 %v4511
    %v4544 = vunpack.c.l.b16 %v4512
    %v4545 = vunpack.c.l.b16 %v4513
    %v4546 = vunpack.c.l.b16 %v4514
    %v4547 = vunpack.c.l.b16 %v4515
    %v4548 = vunpack.c.l.b16 %v4516
    %v4549 = vunpack.c.l.b16 %v4517
    %v4550 = vunpack.c.l.b16 %v4518
    %v4551 = vunpack.c.l.b16 %v4519
    %v4552 = vunpack.c.l.b16 %v4520
    %v4553 = vunpack.c.l.b16 %v4521
    %v4554 = vpack.c.b16 %v4539, %v4538
    %v4555 = vpack.c.b16 %v4541, %v4540
    %v4556 = vpack.c.b16 %v4543, %v4542
    %v4557 = vpack.c.b16 %v4545, %v4544
    %v4558 = vpack.c.b16 %v4547, %v4546
    %v4559 = vpack.c.b16 %v4549, %v4548
    %v4560 = vpack.c.b16 %v4551, %v4550
    %v4561 = vpack.c.b16 %v4553, %v4552
    %4570 = vmatprep.subr.bf16.mxu0 0
    %4571 = vmatpush1.bf16.msra.mxu0 %v4561
    %4572 = vmatprep.subr.bf16.mxu0 0
    %4573 = vmatpush1.bf16.msra.mxu0 %v4560
    %4574 = vmatprep.subr.bf16.mxu0 0
    %4575 = vmatpush1.bf16.msra.mxu0 %v4559
    %4576 = vmatprep.subr.bf16.mxu0 0
    %4577 = vmatpush1.bf16.msra.mxu0 %v4558
    %4578 = vmatprep.subr.bf16.mxu0 0
    %4579 = vmatpush1.bf16.msra.mxu0 %v4557
    %4580 = vmatprep.subr.bf16.mxu0 0
    %4581 = vmatpush1.bf16.msra.mxu0 %v4556
    %4582 = vmatprep.subr.bf16.mxu0 0
    %4583 = vmatpush1.bf16.msra.mxu0 %v4555
    %4584 = vmatprep.subr.bf16.mxu0 0
    %4585 = vmatpush1.bf16.msra.mxu0 %v4554
    %4586 = vmatprep.subr.bf16.mxu0 0
    %4587 = vmatpush2.bf16.msra.mxu0 0
    %4588 = vmatprep.subr.bf16.mxu0 0
    %4589 = vmatpush2.bf16.msra.mxu0 0
    %4590 = vmatprep.subr.bf16.mxu0 0
    %4591 = vmatpush2.bf16.msra.mxu0 0
    %4592 = vmatprep.subr.bf16.mxu0 0
    %4593 = vmatpush2.bf16.msra.mxu0 0
    %4594 = vmatprep.subr.bf16.mxu0 0
    %4595 = vmatpush2.bf16.msra.mxu0 0
    %4596 = vmatprep.subr.bf16.mxu0 0
    %4597 = vmatpush2.bf16.msra.mxu0 0
    %4598 = vmatprep.subr.bf16.mxu0 0
    %4599 = vmatpush2.bf16.msra.mxu0 0
    %4600 = vmatprep.subr.bf16.mxu0 0
    %4601 = vmatpush2.bf16.msra.mxu0 0
    %4602 = vmatprep.mubr.bf16.mxu0 0
    %4603 = vmatmul.mubr.bf16.gmra.mxu0 %v4505
    %v4604 = vpop.f32.mrf.mxu0
    %v4605 = vadd.f32 0.0, %v4604
    %v4606 = vpop.f32.mrf.mxu0
    %v4607 = vpop.f32.mrf.mxu0
    %v4608 = vpop.f32.mrf.mxu0
    %4609 = vdwg.mxu0
    %v4626 = vunpack.c.l.b16 %v4489
    %v4627 = vunpack.c.l.b16 %v4490
    %v4628 = vunpack.c.l.b16 %v4491
    %v4629 = vunpack.c.l.b16 %v4492
    %v4630 = vunpack.c.l.b16 %v4493
    %v4631 = vunpack.c.l.b16 %v4494
    %v4632 = vunpack.c.l.b16 %v4495
    %v4633 = vunpack.c.l.b16 %v4496
    %v4634 = vunpack.c.l.b16 %v4497
    %v4635 = vunpack.c.l.b16 %v4498
    %v4636 = vunpack.c.l.b16 %v4499
    %v4637 = vunpack.c.l.b16 %v4500
    %v4638 = vunpack.c.l.b16 %v4501
    %v4639 = vunpack.c.l.b16 %v4502
    %v4640 = vunpack.c.l.b16 %v4503
    %v4641 = vunpack.c.l.b16 %v4504
    %v4642 = vpack.c.b16 %v4627, %v4626
    %v4643 = vpack.c.b16 %v4629, %v4628
    %v4644 = vpack.c.b16 %v4631, %v4630
    %v4645 = vpack.c.b16 %v4633, %v4632
    %v4646 = vpack.c.b16 %v4635, %v4634
    %v4647 = vpack.c.b16 %v4637, %v4636
    %v4648 = vpack.c.b16 %v4639, %v4638
    %v4649 = vpack.c.b16 %v4641, %v4640
    %4658 = vmatprep.subr.bf16.mxu0 0
    %4659 = vmatpush1.bf16.msra.mxu0 %v4649
    %4660 = vmatprep.subr.bf16.mxu0 0
    %4661 = vmatpush1.bf16.msra.mxu0 %v4648
    %4662 = vmatprep.subr.bf16.mxu0 0
    %4663 = vmatpush1.bf16.msra.mxu0 %v4647
    %4664 = vmatprep.subr.bf16.mxu0 0
    %4665 = vmatpush1.bf16.msra.mxu0 %v4646
    %4666 = vmatprep.subr.bf16.mxu0 0
    %4667 = vmatpush1.bf16.msra.mxu0 %v4645
    %4668 = vmatprep.subr.bf16.mxu0 0
    %4669 = vmatpush1.bf16.msra.mxu0 %v4644
    %4670 = vmatprep.subr.bf16.mxu0 0
    %4671 = vmatpush1.bf16.msra.mxu0 %v4643
    %4672 = vmatprep.subr.bf16.mxu0 0
    %4673 = vmatpush1.bf16.msra.mxu0 %v4642
    %4674 = vmatprep.subr.bf16.mxu0 0
    %4675 = vmatpush2.bf16.msra.mxu0 0
    %4676 = vmatprep.subr.bf16.mxu0 0
    %4677 = vmatpush2.bf16.msra.mxu0 0
    %4678 = vmatprep.subr.bf16.mxu0 0
    %4679 = vmatpush2.bf16.msra.mxu0 0
    %4680 = vmatprep.subr.bf16.mxu0 0
    %4681 = vmatpush2.bf16.msra.mxu0 0
    %4682 = vmatprep.subr.bf16.mxu0 0
    %4683 = vmatpush2.bf16.msra.mxu0 0
    %4684 = vmatprep.subr.bf16.mxu0 0
    %4685 = vmatpush2.bf16.msra.mxu0 0
    %4686 = vmatprep.subr.bf16.mxu0 0
    %4687 = vmatpush2.bf16.msra.mxu0 0
    %4688 = vmatprep.subr.bf16.mxu0 0
    %4689 = vmatpush2.bf16.msra.mxu0 0
    %4690 = vmatprep.mubr.bf16.mxu0 0
    %4691 = vmatmul.mubr.bf16.gmra.mxu0 %v4488
    %v4692 = vpop.f32.mrf.mxu0
    %v4693 = vadd.f32 %v4605, %v4692
    %v4694 = vpop.f32.mrf.mxu0
    %v4695 = vpop.f32.mrf.mxu0
    %v4696 = vpop.f32.mrf.mxu0
    %4697 = vdwg.mxu0
    %v4698 = vlaneseq
    %v4699 = vshrl.u32 %v4698, 7
    %v4700 = vsub.s32 3, %v4699
    %v4701 = vrot.slane %v4332, %v4700
    %v4702 = vadd.f32 %v4693, %v4701
    %4703 = vst [vmem:[#allocation7] sm:$0x3] %v4702
    // Predicated region
    $region78: #{multimodal_classifier.1} parent=1 // pred_check
      _
    $region79: #{multimodal_classifier.1} parent=1 // pred_check_branch
      %4705 = sbr.rel (0) target = $region81
    $region80: #{multimodal_classifier.1} parent=1 // pred_region
      %s4707 = ssub.s32 32, 32
      %4708 = vsyncadd [#allocation4], %s4707
      %s4710 = sshll.u32 [#allocation7], 4
      %s4711 = int_to_ptr.vmem [resolvable:$true] %s4710
      %4713 = dma.vmem_to_hbm [thread:$0]  %s4711, 32, %s17, [#allocation4]
    $region81: #{multimodal_classifier.1} parent=1 // pred_fallthru
      _
    // Predicated region
    $region82: #{multimodal_classifier.1} parent=1 // pred_check
      _
    $region83: #{multimodal_classifier.1} parent=1 // pred_check_branch
      %4715 = sbr.rel (0) target = $region85
    $region84: #{multimodal_classifier.1} parent=1 // pred_region
      %4716 = dma.done [#allocation4], 32
    $region85: #{multimodal_classifier.1} parent=1 // pred_fallthru
      _
    %4717 = vsyncpa [#allocation3], 1
    %4718 = vsyncpa [#allocation6], 1
    %4719 = vsyncpa [#allocation4], 1

</llo_original>
